<compile_context>
chip_gen: v7x
topology: tpu7x:2x2x1
jax: 0.10.0
libtpu: 0.0.40
codegen_flags: <defaults>
</compile_context>

<pallas_src>
import functools

import numpy as np
import jax
import jax.numpy as jnp
from jax import lax
from jax.experimental import pallas as pl
from jax.experimental.pallas import tpu as pltpu


def _vmem_capacity_bytes():
    """Best-effort VMEM size query (distinguishes 128-MiB v5e/v6e from 64-MiB v7x)."""
    try:
        info = pltpu.get_tpu_info()
        for attr in ("vmem_capacity_bytes", "vmem_bytes", "vmem_size_bytes"):
            v = getattr(info, attr, None)
            if v:
                return int(v)
    except Exception:
        pass
    return 128 * 2**20


def _deform_roi_pool_kernel(bidx_ref, coord_ref, x_ref, out_ref, *acc,
                            R, S, H, W, TH, GH, GW, inv_count, multi_tile):
    del bidx_ref                              # only used by the index_maps
    f32 = jnp.float32
    M = R * S                                 # batched ROI-bins per step (MXU rows)
    C = out_ref.shape[-1]
    k = pl.program_id(1)                      # H-tile index

    # Precomputed per-(roi, bin) sampling parameters (columns, (M, 1)).
    ystart = coord_ref[0, :, 0:1]
    ystep = coord_ref[0, :, 1:2]
    xstart = coord_ref[0, :, 2:3]
    xstep = coord_ref[0, :, 3:4]

    # Absolute row indices of this H-tile and the (full) column indices.
    row_idx = (lax.broadcasted_iota(jnp.int32, (1, TH), 1) + k * TH).astype(f32)
    col_idx = lax.broadcasted_iota(jnp.int32, (1, W), 1).astype(f32)

    def axis_weights(start, step, G, idx_row, limit, scale):
        # Sum over the G sampling points along one axis of
        #   valid * (1-D bilinear weight at integer coordinate idx_row).
        # All per-sample work stays on (M, 1) / (M, L) arrays (L = TH or W).
        L = idx_row.shape[1]
        wsum = jnp.zeros((M, L), f32)
        for g in range(G):                    # static, small unrolled loop
            c = start + (g + 0.5) * step                                # (M, 1)
            valid = ((c >= -1.0) & (c <= float(limit))).astype(f32) * scale
            cc = jnp.maximum(c, 0.0)
            cf = jnp.floor(cc)
            frac = jnp.where(cf >= float(limit - 1), 0.0, cc - cf)
            lo = jnp.minimum(cf, float(limit - 1))
            hi = jnp.minimum(cf + 1.0, float(limit - 1))
            w_lo = (1.0 - frac) * valid                                 # (M, 1)
            w_hi = frac * valid
            wsum = (wsum + jnp.where(idx_row == lo, w_lo, 0.0)
                         + jnp.where(idx_row == hi, w_hi, 0.0))
        return wsum                                                     # (M, L)

    wy = axis_weights(ystart, ystep, GH, row_idx, H, 1.0)               # (M, TH)
    wx = axis_weights(xstart, xstep, GW, col_idx, W, inv_count)         # (M, W)

    # Single O(M*TH*W) expansion pass: plane[m, h*W + w] = wy[m, h] * wx[m, w].
    plane = (wy[:, :, None] * wx[:, None, :]).reshape(M, TH * W)

    feat = x_ref[0]                                                     # (TH*W, C)
    part = jnp.dot(plane.astype(feat.dtype), feat,
                   preferred_element_type=jnp.float32)                  # (M, C) on MXU

    if not multi_tile:
        # Fast path (KH == 1): no accumulator scratch, no zero-fill.
        out_ref[...] = part.reshape(R, S, C).astype(out_ref.dtype)
    else:
        acc_ref = acc[0]

        @pl.when(k == 0)
        def _():
            acc_ref[...] = part

        @pl.when(k != 0)
        def _():
            acc_ref[...] += part

        @pl.when(k == pl.num_programs(1) - 1)
        def _():
            out_ref[...] = acc_ref[...].reshape(R, S, C).astype(out_ref.dtype)


def deform_roi_pool(x, rois, offset=None, output_size=(7, 7), spatial_scale=1.0,
                    sampling_ratio=0, gamma=0.1, input_layout="NCHW",
                    _force_tile_rows=None):
    if isinstance(output_size, int):
        output_size = (output_size, output_size)
    PH, PW = output_size
    if sampling_ratio <= 0:
        # TODO(synk): sampling_ratio == 0 (per-ROI adaptive sampling grid) needs
        # data-dependent trip counts; not implemented in the Pallas kernel.
        raise NotImplementedError("Pallas kernel requires sampling_ratio > 0")
    GH = GW = int(sampling_ratio)
    S = PH * PW

    if input_layout == "NCHW":
        B, C, H, W = x.shape
        x_nhwc = jnp.transpose(x, (0, 2, 3, 1))
    elif input_layout == "NHWC":
        # Skip the transpose (a full HBM read+write) when the producer is NHWC.
        B, H, W, C = x.shape
        x_nhwc = x
    else:
        raise ValueError(f"unknown input_layout {input_layout!r}")
    HW = H * W
    N = rois.shape[0]

    out_dtype = x.dtype
    feat_dtype = (x.dtype if np.dtype(x.dtype) in
                  (np.dtype(jnp.bfloat16), np.dtype(np.float32)) else jnp.float32)
    fbytes = np.dtype(feat_dtype).itemsize
    obytes = np.dtype(out_dtype).itemsize
    x_flat = x_nhwc.reshape(B, HW, C).astype(feat_dtype)

    if offset is None or offset.size == 0:
        offset = jnp.zeros((N, 2, PH, PW), jnp.float32)

    # ---- per-ROI / per-bin sampling parameters (tiny O(N*S) wrapper math, f32) -----
    rois_f = rois.astype(jnp.float32)
    batch_idx = jnp.clip(rois_f[:, 0].astype(jnp.int32), 0, B - 1)
    x1 = rois_f[:, 1] * spatial_scale - 0.5
    y1 = rois_f[:, 2] * spatial_scale - 0.5
    roi_w = rois_f[:, 3] * spatial_scale - 0.5 - x1
    roi_h = rois_f[:, 4] * spatial_scale - 0.5 - y1
    bin_w = roi_w / PW
    bin_h = roi_h / PH

    off = offset.astype(jnp.float32).reshape(N, 2, S)
    ph = jnp.asarray(np.arange(S) // PW, jnp.float32)                    # (S,)
    pw = jnp.asarray(np.arange(S) % PW, jnp.float32)

    ystart = y1[:, None] + gamma * roi_h[:, None] * off[:, 1] + ph[None, :] * bin_h[:, None]
    xstart = x1[:, None] + gamma * roi_w[:, None] * off[:, 0] + pw[None, :] * bin_w[:, None]
    ystep = jnp.broadcast_to((bin_h / GH)[:, None], (N, S))
    xstep = jnp.broadcast_to((bin_w / GW)[:, None], (N, S))
    coords = jnp.stack([ystart, ystep, xstart, xstep], axis=-1)          # (N, S, 4)

    # ---- group R same-image ROIs per grid step (fill MXU rows, amortize overhead) --
    R = int(max(1, min(256 // max(S, 1), N)))
    order = jnp.argsort(batch_idx)                                       # sort by image
    inv_order = jnp.argsort(order)
    b_sorted = batch_idx[order]
    coords_sorted = coords[order]

    counts = jnp.bincount(batch_idx, length=B).astype(jnp.int32)         # ROIs per image
    padded_counts = ((counts + R - 1) // R) * R
    img_start = jnp.concatenate([jnp.zeros((1,), jnp.int32), jnp.cumsum(counts)])[:-1]
    img_pad_start = jnp.concatenate([jnp.zeros((1,), jnp.int32),
                                     jnp.cumsum(padded_counts)])[:-1]
    rank = jnp.arange(N, dtype=jnp.int32) - img_start[b_sorted]
    pos = (img_pad_start[b_sorted] + rank).astype(jnp.int32)             # padded slot / ROI

    N_pad = int(-(-(N + B * (R - 1)) // R) * R)                          # static upper bound
    NG = N_pad // R

    pad_row = jnp.array([-1e4, 0.0, -1e4, 0.0], jnp.float32)             # -> zero weights
    coords_pad = jnp.broadcast_to(pad_row, (N_pad, S, 4))
    coords_pad = coords_pad.at[pos].set(coords_sorted)
    coords_pad = coords_pad.reshape(NG, R * S, 4)

    groups_per_image = padded_counts // R
    cum_groups = jnp.cumsum(groups_per_image)
    group_batch = jnp.clip(
        jnp.searchsorted(cum_groups, jnp.arange(NG, dtype=jnp.int32), side="right"),
        0, B - 1).astype(jnp.int32)

    # ---- H-tile selection: keep feature tile + weight plane under the VMEM budget --
    sub = 8 * (4 // fbytes)                  # 8 sublanes (f32), 16 (bf16 packing)
    cands = [d for d in range(1, H + 1)
             if H % d == 0 and ((d * W) % sub == 0 or d == H)]           # always has H

    vmem_cap = _vmem_capacity_bytes()
    if vmem_cap >= 100 * 2**20:              # 128-MiB parts (v5e / v6e)
        budget, ceiling = 48 * 2**20, 96 * 2**20
    else:                                    # 64-MiB parts (v7x, per TensorCore)
        budget, ceiling = 20 * 2**20, 48 * 2**20

    M = R * S
    cpad = ((C + 127) // 128) * 128

    def per_step_bytes(th):
        thw = th * W
        return (2 * thw * cpad * fbytes      # feature tile (double buffered)
                + 3 * M * thw * 4            # (M, THW) plane + expansion temporary
                + M * (th + W) * 4           # per-axis weight factors
                + 2 * M * cpad * 4           # matmul result + accumulator
                + 2 * M * 128 * 4            # coordinate block (double buffered)
                + 2 * R * S * cpad * obytes)  # output block (double buffered)

    fitting = [d for d in cands if per_step_bytes(d) <= budget]
    TH = max(fitting) if fitting else min(cands)
    if _force_tile_rows is not None and int(_force_tile_rows) in cands:
        TH = int(_force_tile_rows)           # test hook: force the KH > 1 path
    KH = H // TH
    multi_tile = KH > 1
    vmem_limit = int(min(max(per_step_bytes(TH) + (8 << 20), 32 * 2**20), ceiling))

    kernel = functools.partial(
        _deform_roi_pool_kernel, R=R, S=S, H=H, W=W, TH=TH, GH=GH, GW=GW,
        inv_count=1.0 / float(max(GH * GW, 1)), multi_tile=multi_tile)

    scratch = [pltpu.VMEM((M, C), jnp.float32)] if multi_tile else []

    out_pad = pl.pallas_call(
        kernel,
        out_shape=jax.ShapeDtypeStruct((N_pad, S, C), out_dtype),
        grid_spec=pltpu.PrefetchScalarGridSpec(
            num_scalar_prefetch=1,           # per-group image index -> SMEM
            grid=(NG, KH),
            in_specs=[
                pl.BlockSpec((1, R * S, 4), lambda g, k, bidx: (g, 0, 0)),       # coords
                pl.BlockSpec((1, TH * W, C), lambda g, k, bidx: (bidx[g], k, 0)),  # features
            ],
            out_specs=pl.BlockSpec((R, S, C), lambda g, k, bidx: (g, 0, 0)),
            scratch_shapes=scratch,
        ),
        compiler_params=pltpu.CompilerParams(
            dimension_semantics=("parallel", "arbitrary"),
            vmem_limit_bytes=vmem_limit),
    )(group_batch, coords_pad, x_flat)

    out = out_pad[pos][inv_order]            # drop padding, restore original ROI order
    return jnp.transpose(out, (0, 2, 1)).reshape(N, C, PH, PW)


class DeformRoIPool:
    """JAX/Pallas equivalent of mmcv's DeformRoIPool (forward only)."""

    def __init__(self, output_size, spatial_scale=1.0, sampling_ratio=0, gamma=0.1):
        self.output_size = ((output_size, output_size)
                            if isinstance(output_size, int) else tuple(output_size))
        self.spatial_scale = float(spatial_scale)
        self.sampling_ratio = int(sampling_ratio)
        self.gamma = float(gamma)

    def __call__(self, x, rois, offset=None):
        return deform_roi_pool(x, rois, offset, self.output_size,
                               self.spatial_scale, self.sampling_ratio, self.gamma)


# ---------------- pure numpy reference (mirrors the CUDA kernel) ----------------
def _bilinear(fm, H, W, y, x):
    if y < -1.0 or y > H or x < -1.0 or x > W:
        return np.zeros(fm.shape[0], fm.dtype)
    y = max(y, 0.0)
    x = max(x, 0.0)
    y_low = int(y)
    x_low = int(x)
    if y_low >= H - 1:
        y_high = y_low = H - 1
        y = float(y_low)
    else:
        y_high = y_low + 1
    if x_low >= W - 1:
        x_high = x_low = W - 1
        x = float(x_low)
    else:
        x_high = x_low + 1
    ly = y - y_low
    lx = x - x_low
    hy = 1.0 - ly
    hx = 1.0 - lx
    return (hy * hx * fm[:, y_low, x_low] + hy * lx * fm[:, y_low, x_high]
            + ly * hx * fm[:, y_high, x_low] + ly * lx * fm[:, y_high, x_high])


def deform_roi_pool_ref(x, rois, offset, output_size, spatial_scale, sampling_ratio, gamma):
    x = np.asarray(x, np.float64)
    rois = np.asarray(rois, np.float64)
    offset = np.asarray(offset, np.float64) if offset is not None else None
    PH, PW = output_size
    N = rois.shape[0]
    _, C, H, W = x.shape
    out = np.zeros((N, C, PH, PW), np.float64)
    for n in range(N):
        b = int(rois[n, 0])
        rsw = rois[n, 1] * spatial_scale - 0.5
        rsh = rois[n, 2] * spatial_scale - 0.5
        rew = rois[n, 3] * spatial_scale - 0.5
        reh = rois[n, 4] * spatial_scale - 0.5
        rw = rew - rsw
        rh = reh - rsh
        bw = rw / PW
        bh = rh / PH
        gh = sampling_ratio if sampling_ratio > 0 else int(np.ceil(rh / PH))
        gw = sampling_ratio if sampling_ratio > 0 else int(np.ceil(rw / PW))
        count = max(gh * gw, 1)
        for ph in range(PH):
            for pw in range(PW):
                sw, sh = rsw, rsh
                if offset is not None and offset.size:
                    sw = rsw + gamma * rw * offset[n, 0, ph, pw]
                    sh = rsh + gamma * rh * offset[n, 1, ph, pw]
                val = np.zeros(C, np.float64)
                for iy in range(gh):
                    yy = sh + ph * bh + (iy + 0.5) * bh / gh
                    for ix in range(gw):
                        xx = sw + pw * bw + (ix + 0.5) * bw / gw
                        val += _bilinear(x[b], H, W, yy, xx)
                out[n, :, ph, pw] = val / count
    return out


if __name__ == "__main__":
    key = jax.random.PRNGKey(0)
    k1, k2, k3, k4, k5, k6, k7 = jax.random.split(key, 7)

    # ---- test 1: base config, f32 --------------------------------------------------
    B, C, H, W = 2, 4, 16, 16
    N = 3
    output_size = (4, 4)
    spatial_scale = 0.5
    sampling_ratio = 2
    gamma = 0.1

    x = jax.random.normal(k1, (B, C, H, W), dtype=jnp.float32)
    batch_inds = jnp.array([0.0, 1.0, 0.0], dtype=jnp.float32)
    xy1 = jax.random.uniform(k2, (N, 2), minval=0.0, maxval=18.0)
    wh = jax.random.uniform(k3, (N, 2), minval=6.0, maxval=14.0)
    rois = jnp.concatenate([batch_inds[:, None], xy1, xy1 + wh], axis=1)      # (N, 5)
    offset = 0.3 * jax.random.normal(k4, (N, 2) + output_size, dtype=jnp.float32)

    pool = DeformRoIPool(output_size, spatial_scale, sampling_ratio, gamma)
    out = jax.block_until_ready(pool(x, rois, offset))
    assert out.shape == (N, C) + output_size
    ref = deform_roi_pool_ref(np.asarray(x), np.asarray(rois), np.asarray(offset),
                              output_size, spatial_scale, sampling_ratio, gamma)
    np.testing.assert_allclose(np.asarray(out), ref, rtol=2e-3, atol=2e-3)

    # ---- test 2: forced H-tiling (KH > 1) exercises the accumulator path -----------
    out_tiled = jax.block_until_ready(
        deform_roi_pool(x, rois, offset, output_size, spatial_scale,
                        sampling_ratio, gamma, _force_tile_rows=4))
    np.testing.assert_allclose(np.asarray(out_tiled), ref, rtol=2e-3, atol=2e-3)

    # ---- test 3: bf16 feature path (bf16 MXU operands, f32 accumulate) -------------
    x_bf16 = x.astype(jnp.bfloat16)
    out_bf16 = jax.block_until_ready(pool(x_bf16, rois, offset))
    assert out_bf16.dtype == jnp.bfloat16
    ref_bf16 = deform_roi_pool_ref(np.asarray(x_bf16.astype(jnp.float32)), np.asarray(rois),
                                   np.asarray(offset), output_size, spatial_scale,
                                   sampling_ratio, gamma)
    np.testing.assert_allclose(np.asarray(out_bf16.astype(jnp.float32)), ref_bf16,
                               rtol=3e-2, atol=3e-2)

    # ---- test 4: 7x7 pooling (S=49), unsorted images, no offsets -> ROI grouping ---
    B2, C2, H2, W2, N2 = 2, 8, 14, 14, 5
    osize2 = (7, 7)
    x2 = jax.random.normal(k5, (B2, C2, H2, W2), dtype=jnp.float32)
    binds2 = jnp.array([1.0, 0.0, 1.0, 0.0, 0.0], dtype=jnp.float32)
    xy1_2 = jax.random.uniform(k6, (N2, 2), minval=0.0, maxval=9.0)
    wh2 = jax.random.uniform(k7, (N2, 2), minval=3.0, maxval=8.0)
    rois2 = jnp.concatenate([binds2[:, None], xy1_2, xy1_2 + wh2], axis=1)
    pool2 = DeformRoIPool(osize2, 1.0, 2, gamma)
    out2 = jax.block_until_ready(pool2(x2, rois2, None))
    ref2 = deform_roi_pool_ref(np.asarray(x2), np.asarray(rois2), None,
                               osize2, 1.0, 2, gamma)
    np.testing.assert_allclose(np.asarray(out2), ref2, rtol=2e-3, atol=2e-3)

    print("KERNEL_OK")
</pallas_src>

<mosaic_0001>
module attributes {stable_mosaic.version = 11 : i64} {
  func.func @_deform_roi_pool_kernel(%arg0: i32, %arg1: i32, %arg2: memref<3xi32, #tpu.memory_space<smem>>, %arg3: memref<1x48x4xf32, #tpu.memory_space<vmem>>, %arg4: memref<1x256x4xf32, #tpu.memory_space<vmem>>, %arg5: memref<3x16x4xf32, #tpu.memory_space<vmem>>) attributes {dimension_semantics = [#tpu.dimension_semantics<parallel>, #tpu.dimension_semantics<arbitrary>], iteration_bounds = array<i64: 3, 1>, scalar_prefetch = 1 : i64, scratch_operands = 0 : i64, tpu.core_type = #tpu.core_type<tc>, window_params = [{transform_indices = @transform_0, window_bounds = array<i64: 1, 48, 4>}, {transform_indices = @transform_1, window_bounds = array<i64: 1, 256, 4>}, {transform_indices = @transform_2, window_bounds = array<i64: 3, 16, 4>}]} {
    %c0 = arith.constant 0 : index
    %c0_0 = arith.constant 0 : index
    %c0_1 = arith.constant 0 : index
    %0 = vector.load %arg3[%c0, %c0_0, %c0_1] : memref<1x48x4xf32, #tpu.memory_space<vmem>>, vector<1x48x1xf32>
    %1 = vector.shape_cast %0 : vector<1x48x1xf32> to vector<48x1xf32>
    %c0_2 = arith.constant 0 : index
    %c0_3 = arith.constant 0 : index
    %c1 = arith.constant 1 : index
    %2 = vector.load %arg3[%c0_2, %c0_3, %c1] : memref<1x48x4xf32, #tpu.memory_space<vmem>>, vector<1x48x1xf32>
    %3 = vector.shape_cast %2 : vector<1x48x1xf32> to vector<48x1xf32>
    %c0_4 = arith.constant 0 : index
    %c0_5 = arith.constant 0 : index
    %c2 = arith.constant 2 : index
    %4 = vector.load %arg3[%c0_4, %c0_5, %c2] : memref<1x48x4xf32, #tpu.memory_space<vmem>>, vector<1x48x1xf32>
    %5 = vector.shape_cast %4 : vector<1x48x1xf32> to vector<48x1xf32>
    %c0_6 = arith.constant 0 : index
    %c0_7 = arith.constant 0 : index
    %c3 = arith.constant 3 : index
    %6 = vector.load %arg3[%c0_6, %c0_7, %c3] : memref<1x48x4xf32, #tpu.memory_space<vmem>>, vector<1x48x1xf32>
    %7 = vector.shape_cast %6 : vector<1x48x1xf32> to vector<48x1xf32>
    %8 = tpu.iota {dimensions = array<i32: 1>} : vector<1x16xi32>
    %c16_i32 = arith.constant 16 : i32
    %9 = arith.muli %arg1, %c16_i32 : i32
    %10 = vector.broadcast %9 : i32 to vector<1x16xi32>
    %11 = arith.addi %8, %10 : vector<1x16xi32>
    %12 = arith.sitofp %11 : vector<1x16xi32> to vector<1x16xf32>
    %13 = tpu.iota {dimensions = array<i32: 1>} : vector<1x16xi32>
    %14 = arith.sitofp %13 : vector<1x16xi32> to vector<1x16xf32>
    %cst = arith.constant 0.000000e+00 : f32
    %15 = vector.broadcast %cst : f32 to vector<48x16xf32>
    %cst_8 = arith.constant 5.000000e-01 : f32
    %16 = vector.broadcast %cst_8 : f32 to vector<48x1xf32>
    %17 = arith.mulf %16, %3 : vector<48x1xf32>
    %18 = arith.addf %1, %17 : vector<48x1xf32>
    %cst_9 = arith.constant -1.000000e+00 : f32
    %19 = vector.broadcast %cst_9 : f32 to vector<48x1xf32>
    %20 = arith.cmpf oge, %18, %19 : vector<48x1xf32>
    %cst_10 = arith.constant 1.600000e+01 : f32
    %21 = vector.broadcast %cst_10 : f32 to vector<48x1xf32>
    %22 = arith.cmpf ole, %18, %21 : vector<48x1xf32>
    %23 = arith.andi %20, %22 : vector<48x1xi1>
    %24 = arith.extui %23 : vector<48x1xi1> to vector<48x1xi32>
    %25 = arith.sitofp %24 : vector<48x1xi32> to vector<48x1xf32>
    %cst_11 = arith.constant 1.000000e+00 : f32
    %26 = vector.broadcast %cst_11 : f32 to vector<48x1xf32>
    %27 = arith.mulf %25, %26 : vector<48x1xf32>
    %cst_12 = arith.constant 0.000000e+00 : f32
    %28 = vector.broadcast %cst_12 : f32 to vector<48x1xf32>
    %29 = arith.maximumf %18, %28 : vector<48x1xf32>
    %30 = math.floor %29 : vector<48x1xf32>
    %cst_13 = arith.constant 1.500000e+01 : f32
    %31 = vector.broadcast %cst_13 : f32 to vector<48x1xf32>
    %32 = arith.cmpf oge, %30, %31 : vector<48x1xf32>
    %33 = arith.subf %29, %30 : vector<48x1xf32>
    %cst_14 = arith.constant 0.000000e+00 : f32
    %34 = vector.broadcast %cst_14 : f32 to vector<48x1xf32>
    %35 = arith.select %32, %34, %33 : vector<48x1xi1>, vector<48x1xf32>
    %cst_15 = arith.constant 1.500000e+01 : f32
    %36 = vector.broadcast %cst_15 : f32 to vector<48x1xf32>
    %37 = arith.minimumf %30, %36 : vector<48x1xf32>
    %cst_16 = arith.constant 1.000000e+00 : f32
    %38 = vector.broadcast %cst_16 : f32 to vector<48x1xf32>
    %39 = arith.addf %30, %38 : vector<48x1xf32>
    %cst_17 = arith.constant 1.500000e+01 : f32
    %40 = vector.broadcast %cst_17 : f32 to vector<48x1xf32>
    %41 = arith.minimumf %39, %40 : vector<48x1xf32>
    %cst_18 = arith.constant 1.000000e+00 : f32
    %42 = vector.broadcast %cst_18 : f32 to vector<48x1xf32>
    %43 = arith.subf %42, %35 : vector<48x1xf32>
    %44 = arith.mulf %43, %27 : vector<48x1xf32>
    %45 = arith.mulf %35, %27 : vector<48x1xf32>
    %46 = vector.broadcast %12 : vector<1x16xf32> to vector<48x16xf32>
    %47 = vector.broadcast %37 : vector<48x1xf32> to vector<48x16xf32>
    %48 = arith.cmpf oeq, %46, %47 : vector<48x16xf32>
    %cst_19 = arith.constant 0.000000e+00 : f32
    %49 = vector.shape_cast %44 : vector<48x1xf32> to vector<48x1xf32>
    %50 = vector.broadcast %49 : vector<48x1xf32> to vector<48x16xf32>
    %51 = vector.broadcast %cst_19 : f32 to vector<48x16xf32>
    %52 = arith.select %48, %50, %51 : vector<48x16xi1>, vector<48x16xf32>
    %53 = arith.addf %15, %52 : vector<48x16xf32>
    %54 = vector.broadcast %12 : vector<1x16xf32> to vector<48x16xf32>
    %55 = vector.broadcast %41 : vector<48x1xf32> to vector<48x16xf32>
    %56 = arith.cmpf oeq, %54, %55 : vector<48x16xf32>
    %cst_20 = arith.constant 0.000000e+00 : f32
    %57 = vector.shape_cast %45 : vector<48x1xf32> to vector<48x1xf32>
    %58 = vector.broadcast %57 : vector<48x1xf32> to vector<48x16xf32>
    %59 = vector.broadcast %cst_20 : f32 to vector<48x16xf32>
    %60 = arith.select %56, %58, %59 : vector<48x16xi1>, vector<48x16xf32>
    %61 = arith.addf %53, %60 : vector<48x16xf32>
    %cst_21 = arith.constant 1.500000e+00 : f32
    %62 = vector.broadcast %cst_21 : f32 to vector<48x1xf32>
    %63 = arith.mulf %62, %3 : vector<48x1xf32>
    %64 = arith.addf %1, %63 : vector<48x1xf32>
    %cst_22 = arith.constant -1.000000e+00 : f32
    %65 = vector.broadcast %cst_22 : f32 to vector<48x1xf32>
    %66 = arith.cmpf oge, %64, %65 : vector<48x1xf32>
    %cst_23 = arith.constant 1.600000e+01 : f32
    %67 = vector.broadcast %cst_23 : f32 to vector<48x1xf32>
    %68 = arith.cmpf ole, %64, %67 : vector<48x1xf32>
    %69 = arith.andi %66, %68 : vector<48x1xi1>
    %70 = arith.extui %69 : vector<48x1xi1> to vector<48x1xi32>
    %71 = arith.sitofp %70 : vector<48x1xi32> to vector<48x1xf32>
    %cst_24 = arith.constant 1.000000e+00 : f32
    %72 = vector.broadcast %cst_24 : f32 to vector<48x1xf32>
    %73 = arith.mulf %71, %72 : vector<48x1xf32>
    %cst_25 = arith.constant 0.000000e+00 : f32
    %74 = vector.broadcast %cst_25 : f32 to vector<48x1xf32>
    %75 = arith.maximumf %64, %74 : vector<48x1xf32>
    %76 = math.floor %75 : vector<48x1xf32>
    %cst_26 = arith.constant 1.500000e+01 : f32
    %77 = vector.broadcast %cst_26 : f32 to vector<48x1xf32>
    %78 = arith.cmpf oge, %76, %77 : vector<48x1xf32>
    %79 = arith.subf %75, %76 : vector<48x1xf32>
    %cst_27 = arith.constant 0.000000e+00 : f32
    %80 = vector.broadcast %cst_27 : f32 to vector<48x1xf32>
    %81 = arith.select %78, %80, %79 : vector<48x1xi1>, vector<48x1xf32>
    %cst_28 = arith.constant 1.500000e+01 : f32
    %82 = vector.broadcast %cst_28 : f32 to vector<48x1xf32>
    %83 = arith.minimumf %76, %82 : vector<48x1xf32>
    %cst_29 = arith.constant 1.000000e+00 : f32
    %84 = vector.broadcast %cst_29 : f32 to vector<48x1xf32>
    %85 = arith.addf %76, %84 : vector<48x1xf32>
    %cst_30 = arith.constant 1.500000e+01 : f32
    %86 = vector.broadcast %cst_30 : f32 to vector<48x1xf32>
    %87 = arith.minimumf %85, %86 : vector<48x1xf32>
    %cst_31 = arith.constant 1.000000e+00 : f32
    %88 = vector.broadcast %cst_31 : f32 to vector<48x1xf32>
    %89 = arith.subf %88, %81 : vector<48x1xf32>
    %90 = arith.mulf %89, %73 : vector<48x1xf32>
    %91 = arith.mulf %81, %73 : vector<48x1xf32>
    %92 = vector.broadcast %12 : vector<1x16xf32> to vector<48x16xf32>
    %93 = vector.broadcast %83 : vector<48x1xf32> to vector<48x16xf32>
    %94 = arith.cmpf oeq, %92, %93 : vector<48x16xf32>
    %cst_32 = arith.constant 0.000000e+00 : f32
    %95 = vector.shape_cast %90 : vector<48x1xf32> to vector<48x1xf32>
    %96 = vector.broadcast %95 : vector<48x1xf32> to vector<48x16xf32>
    %97 = vector.broadcast %cst_32 : f32 to vector<48x16xf32>
    %98 = arith.select %94, %96, %97 : vector<48x16xi1>, vector<48x16xf32>
    %99 = arith.addf %61, %98 : vector<48x16xf32>
    %100 = vector.broadcast %12 : vector<1x16xf32> to vector<48x16xf32>
    %101 = vector.broadcast %87 : vector<48x1xf32> to vector<48x16xf32>
    %102 = arith.cmpf oeq, %100, %101 : vector<48x16xf32>
    %cst_33 = arith.constant 0.000000e+00 : f32
    %103 = vector.shape_cast %91 : vector<48x1xf32> to vector<48x1xf32>
    %104 = vector.broadcast %103 : vector<48x1xf32> to vector<48x16xf32>
    %105 = vector.broadcast %cst_33 : f32 to vector<48x16xf32>
    %106 = arith.select %102, %104, %105 : vector<48x16xi1>, vector<48x16xf32>
    %107 = arith.addf %99, %106 : vector<48x16xf32>
    %cst_34 = arith.constant 0.000000e+00 : f32
    %108 = vector.broadcast %cst_34 : f32 to vector<48x16xf32>
    %cst_35 = arith.constant 5.000000e-01 : f32
    %109 = vector.broadcast %cst_35 : f32 to vector<48x1xf32>
    %110 = arith.mulf %109, %7 : vector<48x1xf32>
    %111 = arith.addf %5, %110 : vector<48x1xf32>
    %cst_36 = arith.constant -1.000000e+00 : f32
    %112 = vector.broadcast %cst_36 : f32 to vector<48x1xf32>
    %113 = arith.cmpf oge, %111, %112 : vector<48x1xf32>
    %cst_37 = arith.constant 1.600000e+01 : f32
    %114 = vector.broadcast %cst_37 : f32 to vector<48x1xf32>
    %115 = arith.cmpf ole, %111, %114 : vector<48x1xf32>
    %116 = arith.andi %113, %115 : vector<48x1xi1>
    %117 = arith.extui %116 : vector<48x1xi1> to vector<48x1xi32>
    %118 = arith.sitofp %117 : vector<48x1xi32> to vector<48x1xf32>
    %cst_38 = arith.constant 2.500000e-01 : f32
    %119 = vector.broadcast %cst_38 : f32 to vector<48x1xf32>
    %120 = arith.mulf %118, %119 : vector<48x1xf32>
    %cst_39 = arith.constant 0.000000e+00 : f32
    %121 = vector.broadcast %cst_39 : f32 to vector<48x1xf32>
    %122 = arith.maximumf %111, %121 : vector<48x1xf32>
    %123 = math.floor %122 : vector<48x1xf32>
    %cst_40 = arith.constant 1.500000e+01 : f32
    %124 = vector.broadcast %cst_40 : f32 to vector<48x1xf32>
    %125 = arith.cmpf oge, %123, %124 : vector<48x1xf32>
    %126 = arith.subf %122, %123 : vector<48x1xf32>
    %cst_41 = arith.constant 0.000000e+00 : f32
    %127 = vector.broadcast %cst_41 : f32 to vector<48x1xf32>
    %128 = arith.select %125, %127, %126 : vector<48x1xi1>, vector<48x1xf32>
    %cst_42 = arith.constant 1.500000e+01 : f32
    %129 = vector.broadcast %cst_42 : f32 to vector<48x1xf32>
    %130 = arith.minimumf %123, %129 : vector<48x1xf32>
    %cst_43 = arith.constant 1.000000e+00 : f32
    %131 = vector.broadcast %cst_43 : f32 to vector<48x1xf32>
    %132 = arith.addf %123, %131 : vector<48x1xf32>
    %cst_44 = arith.constant 1.500000e+01 : f32
    %133 = vector.broadcast %cst_44 : f32 to vector<48x1xf32>
    %134 = arith.minimumf %132, %133 : vector<48x1xf32>
    %cst_45 = arith.constant 1.000000e+00 : f32
    %135 = vector.broadcast %cst_45 : f32 to vector<48x1xf32>
    %136 = arith.subf %135, %128 : vector<48x1xf32>
    %137 = arith.mulf %136, %120 : vector<48x1xf32>
    %138 = arith.mulf %128, %120 : vector<48x1xf32>
    %139 = vector.broadcast %14 : vector<1x16xf32> to vector<48x16xf32>
    %140 = vector.broadcast %130 : vector<48x1xf32> to vector<48x16xf32>
    %141 = arith.cmpf oeq, %139, %140 : vector<48x16xf32>
    %cst_46 = arith.constant 0.000000e+00 : f32
    %142 = vector.shape_cast %137 : vector<48x1xf32> to vector<48x1xf32>
    %143 = vector.broadcast %142 : vector<48x1xf32> to vector<48x16xf32>
    %144 = vector.broadcast %cst_46 : f32 to vector<48x16xf32>
    %145 = arith.select %141, %143, %144 : vector<48x16xi1>, vector<48x16xf32>
    %146 = arith.addf %108, %145 : vector<48x16xf32>
    %147 = vector.broadcast %14 : vector<1x16xf32> to vector<48x16xf32>
    %148 = vector.broadcast %134 : vector<48x1xf32> to vector<48x16xf32>
    %149 = arith.cmpf oeq, %147, %148 : vector<48x16xf32>
    %cst_47 = arith.constant 0.000000e+00 : f32
    %150 = vector.shape_cast %138 : vector<48x1xf32> to vector<48x1xf32>
    %151 = vector.broadcast %150 : vector<48x1xf32> to vector<48x16xf32>
    %152 = vector.broadcast %cst_47 : f32 to vector<48x16xf32>
    %153 = arith.select %149, %151, %152 : vector<48x16xi1>, vector<48x16xf32>
    %154 = arith.addf %146, %153 : vector<48x16xf32>
    %cst_48 = arith.constant 1.500000e+00 : f32
    %155 = vector.broadcast %cst_48 : f32 to vector<48x1xf32>
    %156 = arith.mulf %155, %7 : vector<48x1xf32>
    %157 = arith.addf %5, %156 : vector<48x1xf32>
    %cst_49 = arith.constant -1.000000e+00 : f32
    %158 = vector.broadcast %cst_49 : f32 to vector<48x1xf32>
    %159 = arith.cmpf oge, %157, %158 : vector<48x1xf32>
    %cst_50 = arith.constant 1.600000e+01 : f32
    %160 = vector.broadcast %cst_50 : f32 to vector<48x1xf32>
    %161 = arith.cmpf ole, %157, %160 : vector<48x1xf32>
    %162 = arith.andi %159, %161 : vector<48x1xi1>
    %163 = arith.extui %162 : vector<48x1xi1> to vector<48x1xi32>
    %164 = arith.sitofp %163 : vector<48x1xi32> to vector<48x1xf32>
    %cst_51 = arith.constant 2.500000e-01 : f32
    %165 = vector.broadcast %cst_51 : f32 to vector<48x1xf32>
    %166 = arith.mulf %164, %165 : vector<48x1xf32>
    %cst_52 = arith.constant 0.000000e+00 : f32
    %167 = vector.broadcast %cst_52 : f32 to vector<48x1xf32>
    %168 = arith.maximumf %157, %167 : vector<48x1xf32>
    %169 = math.floor %168 : vector<48x1xf32>
    %cst_53 = arith.constant 1.500000e+01 : f32
    %170 = vector.broadcast %cst_53 : f32 to vector<48x1xf32>
    %171 = arith.cmpf oge, %169, %170 : vector<48x1xf32>
    %172 = arith.subf %168, %169 : vector<48x1xf32>
    %cst_54 = arith.constant 0.000000e+00 : f32
    %173 = vector.broadcast %cst_54 : f32 to vector<48x1xf32>
    %174 = arith.select %171, %173, %172 : vector<48x1xi1>, vector<48x1xf32>
    %cst_55 = arith.constant 1.500000e+01 : f32
    %175 = vector.broadcast %cst_55 : f32 to vector<48x1xf32>
    %176 = arith.minimumf %169, %175 : vector<48x1xf32>
    %cst_56 = arith.constant 1.000000e+00 : f32
    %177 = vector.broadcast %cst_56 : f32 to vector<48x1xf32>
    %178 = arith.addf %169, %177 : vector<48x1xf32>
    %cst_57 = arith.constant 1.500000e+01 : f32
    %179 = vector.broadcast %cst_57 : f32 to vector<48x1xf32>
    %180 = arith.minimumf %178, %179 : vector<48x1xf32>
    %cst_58 = arith.constant 1.000000e+00 : f32
    %181 = vector.broadcast %cst_58 : f32 to vector<48x1xf32>
    %182 = arith.subf %181, %174 : vector<48x1xf32>
    %183 = arith.mulf %182, %166 : vector<48x1xf32>
    %184 = arith.mulf %174, %166 : vector<48x1xf32>
    %185 = vector.broadcast %14 : vector<1x16xf32> to vector<48x16xf32>
    %186 = vector.broadcast %176 : vector<48x1xf32> to vector<48x16xf32>
    %187 = arith.cmpf oeq, %185, %186 : vector<48x16xf32>
    %cst_59 = arith.constant 0.000000e+00 : f32
    %188 = vector.shape_cast %183 : vector<48x1xf32> to vector<48x1xf32>
    %189 = vector.broadcast %188 : vector<48x1xf32> to vector<48x16xf32>
    %190 = vector.broadcast %cst_59 : f32 to vector<48x16xf32>
    %191 = arith.select %187, %189, %190 : vector<48x16xi1>, vector<48x16xf32>
    %192 = arith.addf %154, %191 : vector<48x16xf32>
    %193 = vector.broadcast %14 : vector<1x16xf32> to vector<48x16xf32>
    %194 = vector.broadcast %180 : vector<48x1xf32> to vector<48x16xf32>
    %195 = arith.cmpf oeq, %193, %194 : vector<48x16xf32>
    %cst_60 = arith.constant 0.000000e+00 : f32
    %196 = vector.shape_cast %184 : vector<48x1xf32> to vector<48x1xf32>
    %197 = vector.broadcast %196 : vector<48x1xf32> to vector<48x16xf32>
    %198 = vector.broadcast %cst_60 : f32 to vector<48x16xf32>
    %199 = arith.select %195, %197, %198 : vector<48x16xi1>, vector<48x16xf32>
    %200 = arith.addf %192, %199 : vector<48x16xf32>
    %201 = vector.shape_cast %107 : vector<48x16xf32> to vector<48x16x1xf32>
    %202 = vector.shape_cast %200 : vector<48x16xf32> to vector<48x1x16xf32>
    %203 = vector.broadcast %201 : vector<48x16x1xf32> to vector<48x16x16xf32>
    %204 = vector.broadcast %202 : vector<48x1x16xf32> to vector<48x16x16xf32>
    %205 = arith.mulf %203, %204 : vector<48x16x16xf32>
    %206 = vector.shape_cast %205 : vector<48x16x16xf32> to vector<48x256xf32>
    %c0_61 = arith.constant 0 : index
    %c0_62 = arith.constant 0 : index
    %c0_63 = arith.constant 0 : index
    %207 = vector.load %arg4[%c0_61, %c0_62, %c0_63] : memref<1x256x4xf32, #tpu.memory_space<vmem>>, vector<1x256x4xf32>
    %208 = vector.shape_cast %207 : vector<1x256x4xf32> to vector<256x4xf32>
    %cst_64 = arith.constant dense<0.000000e+00> : vector<48x4xf32>
    %209 = tpu.matmul %206, %208, %cst_64 {dimension_numbers = #tpu.dot_dimension_numbers<[1], [0], [0], [1], [0, 0, 1, 1], [], []>} : vector<48x256xf32>, vector<256x4xf32>, vector<48x4xf32> -> vector<48x4xf32>
    %210 = vector.shape_cast %209 : vector<48x4xf32> to vector<3x16x4xf32>
    %c0_65 = arith.constant 0 : index
    %c0_66 = arith.constant 0 : index
    %c0_67 = arith.constant 0 : index
    %211 = vector.load %arg5[%c0_65, %c0_66, %c0_67] : memref<3x16x4xf32, #tpu.memory_space<vmem>>, vector<3x16x4xf32>
    tpu.vector_store %arg5[%c0_65, %c0_66, %c0_67], %210 {strides = array<i32>} : memref<3x16x4xf32, #tpu.memory_space<vmem>>, vector<3x16x4xf32>,
    return
  }
  func.func @transform_0(%arg0: i32, %arg1: i32, %arg2: memref<3xi32, #tpu.memory_space<smem>>) -> (i32, i32, i32) {
    %c0_i32 = arith.constant 0 : i32
    %c0_i32_0 = arith.constant 0 : i32
    %c0_i32_1 = arith.constant 0 : i32
    return %arg0, %c0_i32, %c0_i32_0 : i32, i32, i32
  }
  func.func @transform_1(%arg0: i32, %arg1: i32, %arg2: memref<3xi32, #tpu.memory_space<smem>>) -> (i32, i32, i32) {
    %0 = arith.index_cast %arg0 : i32 to index
    %1 = memref.load %arg2[%0] : memref<3xi32, #tpu.memory_space<smem>>
    %c0_i32 = arith.constant 0 : i32
    %c0_i32_0 = arith.constant 0 : i32
    return %1, %arg1, %c0_i32 : i32, i32, i32
  }
  func.func @transform_2(%arg0: i32, %arg1: i32, %arg2: memref<3xi32, #tpu.memory_space<smem>>) -> (i32, i32, i32) {
    %c0_i32 = arith.constant 0 : i32
    %c0_i32_0 = arith.constant 0 : i32
    %c0_i32_1 = arith.constant 0 : i32
    return %arg0, %c0_i32, %c0_i32_0 : i32, i32, i32
  }
}

</mosaic_0001>

<llo_original>
// kernel: tpu_custom_call.1
$region0: #{tpu_custom_call.1}
  #allocation0 [shape = 'u32[]', space=smem, size = 0x4, offset = 0x4, fixed_abs, tag = 'smem constant byte address 0x4 - core index']
  #allocation1 [shape = 'u32[144,128]{1,0:T(1,128)}', space=vmem, size = 0x12000, scoped, tag = 'internal scratch']
  #allocation2 [shape = 's32[1]{0}', space=sflag, size = 0x4, scoped, tag = 'scoped memory for tpu_custom_call.1']
  #allocation3 [shape = 'u8[512]{0}', space=smem, size = 0x200, scoped, tag = 'prefetched SMEM operand 0']
  %s0 = inlined_call_operand.vmem [shape: s32[3], index: 0, kind: input, shape index: {}]
  %s1 = inlined_call_operand.vmem [shape: f32[3,48,4], index: 1, kind: input, shape index: {}]
  %s2 = inlined_call_operand.vmem [shape: f32[2,256,4], index: 2, kind: input, shape index: {}]
  %s3 = inlined_call_operand.vmem [shape: f32[9,16,4], index: 3, kind: output, shape index: {}]
  %s4 = sld [smem:[#allocation0]]
  $region41: #{tpu_custom_call.1} parent=0
    _
  %s6 = ssub.s32 1, %s4
  %s7 = scalar_select 0, %s6, %s4
  %s8 = sshll.u32 %s0, 4
  %s9 = int_to_ptr.vmem [resolvable:$true] %s8
  %11 = dma.vmem_to_smem %s9, 16, [#allocation3], [#allocation2]
  %12 = dma.done [#allocation2], 16
  %13 = sfence
  loop: start=0, step=1, limit=5
  $region2: #{tpu_custom_call.1} parent=0 // loop_pre_header
    _
  $region3: #{tpu_custom_call.1} parent=0 // loop_header
    %s15 = sphi 0, %s19
    %p16 = scmp.ge.s32.totalorder %s15, 5
    %s22 = sphi 0, %s34
    %s23 = sphi 0, %s30
    %s24 = sphi 0, %s22
    %s25 = sphi 0, %s23
    %s26 = sphi 0, %s24
    %s27 = sphi 0, %s25
    %s37 = sphi 0, %s39
    %s40 = sphi 0, %s37
    %s41 = sphi 0, %s40
    %s57 = sphi 0, %s41
    %s67 = sphi 0, %s69
    %s70 = sphi 0, %s67
    %s71 = sphi 0, %s70
    %s87 = sphi 0, %s71
    %s93 = sphi 0, %s95
    %s96 = sphi 0, %s93
    %s97 = sphi 0, %s96
    %s113 = sphi 0, %s97
  $region4: #{tpu_custom_call.1} parent=0 // loop_header_branch
    %18 = sbr.rel (%p16) target = $region8
  $region5: #{tpu_custom_call.1} parent=0 // loop_body
    %s20 = ssub.s32 %s15, 1
    %s21 = ssub.s32 %s15, 2
    %s28 = sadd.s32 1, %s23
    %p29 = scmp.ge.s32.totalorder %s28, 1
    %s30 = scalar_select %p29, 0, %s28
    %s31 = sadd.s32 1, %s22
    %s32 = scalar_select %p29, %s31, %s22
    %p33 = scmp.ge.s32.totalorder %s32, 3
    %s34 = scalar_select %p33, 0, %s32
    %s35 = ssub.s32 %s22, %s34
    %p36 = scmp.eq.s32.totalorder %s35, 0
    %s38 = sadd.s32 %s37, 1
    %s39 = scalar_select %p36, %s37, %s38
    %p42 = pneg %p36
    %p43 = scmp.eq.s32.totalorder %s15, 2
    %p44 = por %p42, %p43
    %p45 = scmp.ne.s32.totalorder %s37, %s40
    %p46 = scmp.eq.s32.totalorder %s15, 0
    %p47 = por %p45, %p46
    %p48 = scmp.ne.s32.totalorder %s37, %s40
    %p49 = scmp.eq.s32.totalorder %s20, 2
    %p50 = por %p48, %p49
    %p51 = scmp.ne.s32.totalorder %s40, %s41
    %p52 = scmp.eq.s32.totalorder %s20, 0
    %p53 = por %p51, %p52
    %p54 = scmp.ne.s32.totalorder %s40, %s41
    %p55 = scmp.eq.s32.totalorder %s21, 2
    %p56 = por %p54, %p55
    %p58 = scmp.ne.s32.totalorder %s41, %s57
    %p59 = scmp.eq.s32.totalorder %s21, 0
    %p60 = por %p58, %p59
    %s61 = sld [smem:[#allocation3 + %s22]]
    %s62 = sld [smem:[#allocation3 + %s34]]
    %s63 = ssub.s32 %s61, %s62
    %s64 = ssub.s32 %s23, %s30
    %s65 = sor.u32 %s63, %s64
    %p66 = scmp.eq.s32.totalorder %s65, 0
    %s68 = sadd.s32 %s67, 1
    %s69 = scalar_select %p66, %s67, %s68
    %p72 = pneg %p66
    %p73 = scmp.eq.s32.totalorder %s15, 2
    %p74 = por %p72, %p73
    %p75 = scmp.ne.s32.totalorder %s67, %s70
    %p76 = scmp.eq.s32.totalorder %s15, 0
    %p77 = por %p75, %p76
    %p78 = scmp.ne.s32.totalorder %s67, %s70
    %p79 = scmp.eq.s32.totalorder %s20, 2
    %p80 = por %p78, %p79
    %p81 = scmp.ne.s32.totalorder %s70, %s71
    %p82 = scmp.eq.s32.totalorder %s20, 0
    %p83 = por %p81, %p82
    %p84 = scmp.ne.s32.totalorder %s70, %s71
    %p85 = scmp.eq.s32.totalorder %s21, 2
    %p86 = por %p84, %p85
    %p88 = scmp.ne.s32.totalorder %s71, %s87
    %p89 = scmp.eq.s32.totalorder %s21, 0
    %p90 = por %p88, %p89
    %s91 = ssub.s32 %s22, %s34
    %p92 = scmp.eq.s32.totalorder %s91, 0
    %s94 = sadd.s32 %s93, 1
    %s95 = scalar_select %p92, %s93, %s94
    %p98 = pneg %p92
    %p99 = scmp.eq.s32.totalorder %s15, 2
    %p100 = por %p98, %p99
    %p101 = scmp.ne.s32.totalorder %s93, %s96
    %p102 = scmp.eq.s32.totalorder %s15, 0
    %p103 = por %p101, %p102
    %p104 = scmp.ne.s32.totalorder %s93, %s96
    %p105 = scmp.eq.s32.totalorder %s20, 2
    %p106 = por %p104, %p105
    %p107 = scmp.ne.s32.totalorder %s96, %s97
    %p108 = scmp.eq.s32.totalorder %s20, 0
    %p109 = por %p107, %p108
    %p110 = scmp.ne.s32.totalorder %s96, %s97
    %p111 = scmp.eq.s32.totalorder %s21, 2
    %p112 = por %p110, %p111
    %p114 = scmp.ne.s32.totalorder %s97, %s113
    %p115 = scmp.eq.s32.totalorder %s21, 0
    %p116 = por %p114, %p115
    %p117 = scmp.le.s32.totalorder 1, %s15
    %p118 = scmp.lt.s32.totalorder %s15, 4
    %p119 = pnand %p117, %p118
    %p120 = pneg %p119
    // Predicated region
    $region9: #{tpu_custom_call.1} parent=5 // pred_check
      _
    $region10: #{tpu_custom_call.1} parent=5 // pred_check_branch
      %122 = sbr.rel (%p119) target = $region12
    $region11: #{tpu_custom_call.1} parent=5 // pred_region
      %s123 = ssub.s32 %s15, 1
    $region12: #{tpu_custom_call.1} parent=5 // pred_fallthru
      _
    %p124 = scmp.lt.s32.totalorder %s15, 3
    // Predicated region
    $region13: #{tpu_custom_call.1} parent=5 // pred_check
      %p125 = pneg %p124
    $region14: #{tpu_custom_call.1} parent=5 // pred_check_branch
      %127 = sbr.rel (%p125) target = $region16
    $region15: #{tpu_custom_call.1} parent=5 // pred_region
      // Predicated region
      $region17: #{tpu_custom_call.1} parent=15 // pred_check
        %p128 = pneg %p47
      $region18: #{tpu_custom_call.1} parent=15 // pred_check_branch
        %130 = sbr.rel (%p128) target = $region20
      $region19: #{tpu_custom_call.1} parent=15 // pred_region
        %p131 = scmp.lt.s32.totalorder %s22, 2
        %s132 = scalar_select %p131, %s22, 2
        %s133 = smul.addr %s132, 6
        %s134 = smul.addr %s133, 8
        %s135 = scalar_lea.vmem %s1, %s134
      $region20: #{tpu_custom_call.1} parent=15 // pred_fallthru
        _
      // Predicated region
      $region21: #{tpu_custom_call.1} parent=15 // pred_check
        %p136 = pneg %p77
      $region22: #{tpu_custom_call.1} parent=15 // pred_check_branch
        %138 = sbr.rel (%p136) target = $region24
      $region23: #{tpu_custom_call.1} parent=15 // pred_region
        %s139 = sld [smem:[#allocation3 + %s22]]
        %s140 = smul.u32 32, %s23
        %p141 = scmp.lt.s32.totalorder %s139, 1
        %s142 = scalar_select %p141, %s139, 1
        %p143 = scmp.lt.s32.totalorder %s140, 31
        %s144 = scalar_select %p143, %s140, 31
        %s145 = smul.addr %s142, 32
        %s146 = sadd.s32 %s144, %s145
        %s147 = smul.addr %s146, 8
        %s148 = scalar_lea.vmem %s2, %s147
        %s149 = sld [smem:[#allocation3 + %s22]]
        %s150 = smul.u32 32, %s23
      $region24: #{tpu_custom_call.1} parent=15 // pred_fallthru
        _
    $region16: #{tpu_custom_call.1} parent=5 // pred_fallthru
      _
    %p151 = scmp.le.s32.totalorder 1, %s15
    %p152 = scmp.lt.s32.totalorder %s15, 4
    %p153 = pnand %p151, %p152
    %p154 = pneg %p153
    // Predicated region
    $region25: #{tpu_custom_call.1} parent=5 // pred_check
      _
    $region26: #{tpu_custom_call.1} parent=5 // pred_check_branch
      %156 = sbr.rel (%p153) target = $region28
    $region27: #{tpu_custom_call.1} parent=5 // pred_region
      %s157 = ssub.s32 %s15, 1
      %p158 = scmp.lt.s32.totalorder %s24, 2
      %s159 = scalar_select %p158, %s24, 2
      %s160 = smul.addr %s159, 6
      %s161 = smul.addr %s160, 8
      %s162 = scalar_lea.vmem %s1, %s161
      %p163 = pneg %p53
      %p164 = pneg %p50
      %s165 = sld [smem:[#allocation3 + %s24]]
      %s166 = smul.u32 32, %s25
      %p167 = scmp.lt.s32.totalorder %s165, 1
      %s168 = scalar_select %p167, %s165, 1
      %p169 = scmp.lt.s32.totalorder %s166, 31
      %s170 = scalar_select %p169, %s166, 31
      %s171 = smul.addr %s168, 32
      %s172 = sadd.s32 %s170, %s171
      %s173 = smul.addr %s172, 8
      %s174 = scalar_lea.vmem %s2, %s173
      %p175 = pneg %p83
      %p176 = pneg %p80
      %p177 = pneg %p109
      %p178 = pneg %p106
      %s179 = smul.u32 3, %s24
      %p180 = scmp.lt.s32.totalorder %s179, 8
      %s181 = scalar_select %p180, %s179, 8
      %s182 = smul.addr %s181, 2
      %s183 = smul.addr %s182, 8
      %s184 = scalar_lea.vmem %s3, %s183
      %p185 = scmp.lt.s32.totalorder %s24, 2
      %s186 = scalar_select %p185, %s24, 2
      %s187 = smul.addr %s186, 6
      %s188 = smul.addr %s187, 8
      %s189 = scalar_lea.vmem %s1, %s188
      %s190 = sld [smem:[#allocation3 + %s24]]
      %s191 = smul.u32 32, %s25
      %p192 = scmp.lt.s32.totalorder %s190, 1
      %s193 = scalar_select %p192, %s190, 1
      %p194 = scmp.lt.s32.totalorder %s191, 31
      %s195 = scalar_select %p194, %s191, 31
      %s196 = smul.addr %s193, 32
      %s197 = sadd.s32 %s195, %s196
      %s198 = smul.addr %s197, 8
      %s199 = scalar_lea.vmem %s2, %s198
      %s200 = sld [smem:[#allocation3 + %s24]]
      %s201 = smul.u32 32, %s25
      %s202 = smul.u32 3, %s24
      %p203 = scmp.lt.s32.totalorder %s202, 8
      %s204 = scalar_select %p203, %s202, 8
      %s205 = smul.addr %s204, 2
      %s206 = smul.addr %s205, 8
      %s207 = scalar_lea.vmem %s3, %s206
      %s208 = smul.u32 3, %s24
      %v209 = vld [vmem:[%s189] sm:$0xff]
      %v210 = vld [vmem:[%s189 + $0x8] sm:$0xff]
      %v211 = vld [vmem:[%s189 + $0x10] sm:$0xff]
      %v212 = vld [vmem:[%s189 + $0x18] sm:$0xff]
      %v213 = vld [vmem:[%s189 + $0x20] sm:$0xff]
      %v214 = vld [vmem:[%s189 + $0x28] sm:$0xff]
      %v215 = vlaneseq
      %v216 = vand.u32 %v215, 127
      %s217 = smul.u32 %s25, 16
      %v218 = vstv %s217
      %v219 = vadd.s32 %v216, %v218
      %v220 = vcvt.s32.f32 %v219
      %v221 = vcvt.s32.f32 %v216
      %v222 = vmul.f32 %v209, 0.5
      %v223 = vmul.f32 %v210, 0.5
      %v224 = vmul.f32 %v211, 0.5
      %v225 = vmul.f32 %v212, 0.5
      %v226 = vmul.f32 %v213, 0.5
      %v227 = vmul.f32 %v214, 0.5
      %234 = vrot.lane.b32.xlu0 %v222, 127
      %v235 = vpop.permute.xlu0 %234
      %236 = vrot.lane.b32.xlu0 %v223, 127
      %v237 = vpop.permute.xlu0 %236
      %238 = vrot.lane.b32.xlu0 %v224, 127
      %v239 = vpop.permute.xlu0 %238
      %240 = vrot.lane.b32.xlu0 %v225, 127
      %v241 = vpop.permute.xlu0 %240
      %242 = vrot.lane.b32.xlu0 %v226, 127
      %v243 = vpop.permute.xlu0 %242
      %244 = vrot.lane.b32.xlu0 %v227, 127
      %v245 = vpop.permute.xlu0 %244
      %v252 = vadd.f32 %v209, %v235
      %v253 = vadd.f32 %v210, %v237
      %v254 = vadd.f32 %v211, %v239
      %v255 = vadd.f32 %v212, %v241
      %v256 = vadd.f32 %v213, %v243
      %v257 = vadd.f32 %v214, %v245
      %vm258 = vcmp.ge.f32.partialorder %v252, -1.0
      %vm259 = vcmp.ge.f32.partialorder %v253, -1.0
      %vm260 = vcmp.ge.f32.partialorder %v254, -1.0
      %vm261 = vcmp.ge.f32.partialorder %v255, -1.0
      %vm262 = vcmp.ge.f32.partialorder %v256, -1.0
      %vm263 = vcmp.ge.f32.partialorder %v257, -1.0
      %vm264 = vcmp.le.f32.partialorder %v252, 16.0
      %vm265 = vcmp.le.f32.partialorder %v253, 16.0
      %vm266 = vcmp.le.f32.partialorder %v254, 16.0
      %vm267 = vcmp.le.f32.partialorder %v255, 16.0
      %vm268 = vcmp.le.f32.partialorder %v256, 16.0
      %vm269 = vcmp.le.f32.partialorder %v257, 16.0
      %vm270 = vmand %vm258, %vm264
      %vm271 = vmand %vm259, %vm265
      %vm272 = vmand %vm260, %vm266
      %vm273 = vmand %vm261, %vm267
      %vm274 = vmand %vm262, %vm268
      %vm275 = vmand %vm263, %vm269
      %v276 = vsel %vm270, 1, 0
      %v277 = vsel %vm271, 1, 0
      %v278 = vsel %vm272, 1, 0
      %v279 = vsel %vm273, 1, 0
      %v280 = vsel %vm274, 1, 0
      %v281 = vsel %vm275, 1, 0
      %v282 = vcvt.s32.f32 %v276
      %v283 = vcvt.s32.f32 %v277
      %v284 = vcvt.s32.f32 %v278
      %v285 = vcvt.s32.f32 %v279
      %v286 = vcvt.s32.f32 %v280
      %v287 = vcvt.s32.f32 %v281
      %v288 = vmax.f32 %v252, 0.0
      %v289 = vmax.f32 %v253, 0.0
      %v290 = vmax.f32 %v254, 0.0
      %v291 = vmax.f32 %v255, 0.0
      %v292 = vmax.f32 %v256, 0.0
      %v293 = vmax.f32 %v257, 0.0
      %v294 = vfloor.f32 %v288
      %v295 = vfloor.f32 %v289
      %v296 = vfloor.f32 %v290
      %v297 = vfloor.f32 %v291
      %v298 = vfloor.f32 %v292
      %v299 = vfloor.f32 %v293
      %vm300 = vcmp.ge.f32.partialorder %v294, 15.0
      %vm301 = vcmp.ge.f32.partialorder %v295, 15.0
      %vm302 = vcmp.ge.f32.partialorder %v296, 15.0
      %vm303 = vcmp.ge.f32.partialorder %v297, 15.0
      %vm304 = vcmp.ge.f32.partialorder %v298, 15.0
      %vm305 = vcmp.ge.f32.partialorder %v299, 15.0
      %v306 = vsub.f32 %v288, %v294
      %v307 = vsub.f32 %v289, %v295
      %v308 = vsub.f32 %v290, %v296
      %v309 = vsub.f32 %v291, %v297
      %v310 = vsub.f32 %v292, %v298
      %v311 = vsub.f32 %v293, %v299
      %v312 = vsel %vm300, 0.0, %v306
      %v313 = vsel %vm301, 0.0, %v307
      %v314 = vsel %vm302, 0.0, %v308
      %v315 = vsel %vm303, 0.0, %v309
      %v316 = vsel %vm304, 0.0, %v310
      %v317 = vsel %vm305, 0.0, %v311
      %v318 = vmin.f32 %v294, 15.0
      %v319 = vmin.f32 %v295, 15.0
      %v320 = vmin.f32 %v296, 15.0
      %v321 = vmin.f32 %v297, 15.0
      %v322 = vmin.f32 %v298, 15.0
      %v323 = vmin.f32 %v299, 15.0
      %v324 = vadd.f32 %v294, 1.0
      %v325 = vadd.f32 %v295, 1.0
      %v326 = vadd.f32 %v296, 1.0
      %v327 = vadd.f32 %v297, 1.0
      %v328 = vadd.f32 %v298, 1.0
      %v329 = vadd.f32 %v299, 1.0
      %v330 = vmin.f32 %v324, 15.0
      %v331 = vmin.f32 %v325, 15.0
      %v332 = vmin.f32 %v326, 15.0
      %v333 = vmin.f32 %v327, 15.0
      %v334 = vmin.f32 %v328, 15.0
      %v335 = vmin.f32 %v329, 15.0
      %v336 = vsub.f32 1.0, %v312
      %v337 = vsub.f32 1.0, %v313
      %v338 = vsub.f32 1.0, %v314
      %v339 = vsub.f32 1.0, %v315
      %v340 = vsub.f32 1.0, %v316
      %v341 = vsub.f32 1.0, %v317
      %v342 = vmul.f32 %v336, %v282
      %v343 = vmul.f32 %v337, %v283
      %v344 = vmul.f32 %v338, %v284
      %v345 = vmul.f32 %v339, %v285
      %v346 = vmul.f32 %v340, %v286
      %v347 = vmul.f32 %v341, %v287
      %v348 = vmul.f32 %v312, %v282
      %v349 = vmul.f32 %v313, %v283
      %v350 = vmul.f32 %v314, %v284
      %v351 = vmul.f32 %v315, %v285
      %v352 = vmul.f32 %v316, %v286
      %v353 = vmul.f32 %v317, %v287
      %355 = vset.pattern.permute.xlu0 0
      %356 = vperm.xlu0 %355, %v318
      %v357 = vpop.permute.xlu0 %356
      %360 = vset.pattern.permute.xlu0 0
      %361 = vperm.xlu0 %360, %v319
      %v362 = vpop.permute.xlu0 %361
      %365 = vset.pattern.permute.xlu0 0
      %366 = vperm.xlu0 %365, %v320
      %v367 = vpop.permute.xlu0 %366
      %370 = vset.pattern.permute.xlu0 0
      %371 = vperm.xlu0 %370, %v321
      %v372 = vpop.permute.xlu0 %371
      %375 = vset.pattern.permute.xlu0 0
      %376 = vperm.xlu0 %375, %v322
      %v377 = vpop.permute.xlu0 %376
      %380 = vset.pattern.permute.xlu0 0
      %381 = vperm.xlu0 %380, %v323
      %v382 = vpop.permute.xlu0 %381
      %vm384 = vcmp.eq.f32.partialorder %v220, %v357
      %vm385 = vcmp.eq.f32.partialorder %v220, %v362
      %vm386 = vcmp.eq.f32.partialorder %v220, %v367
      %vm387 = vcmp.eq.f32.partialorder %v220, %v372
      %vm388 = vcmp.eq.f32.partialorder %v220, %v377
      %vm389 = vcmp.eq.f32.partialorder %v220, %v382
      %391 = vset.pattern.permute.xlu0 0
      %392 = vperm.xlu0 %391, %v342
      %v393 = vpop.permute.xlu0 %392
      %396 = vset.pattern.permute.xlu0 0
      %397 = vperm.xlu0 %396, %v343
      %v398 = vpop.permute.xlu0 %397
      %401 = vset.pattern.permute.xlu0 0
      %402 = vperm.xlu0 %401, %v344
      %v403 = vpop.permute.xlu0 %402
      %406 = vset.pattern.permute.xlu0 0
      %407 = vperm.xlu0 %406, %v345
      %v408 = vpop.permute.xlu0 %407
      %411 = vset.pattern.permute.xlu0 0
      %412 = vperm.xlu0 %411, %v346
      %v413 = vpop.permute.xlu0 %412
      %416 = vset.pattern.permute.xlu0 0
      %417 = vperm.xlu0 %416, %v347
      %v418 = vpop.permute.xlu0 %417
      %v420 = vsel %vm384, %v393, 0.0
      %v421 = vsel %vm385, %v398, 0.0
      %v422 = vsel %vm386, %v403, 0.0
      %v423 = vsel %vm387, %v408, 0.0
      %v424 = vsel %vm388, %v413, 0.0
      %v425 = vsel %vm389, %v418, 0.0
      %v426 = vadd.f32 %v420, 0.0
      %v427 = vadd.f32 %v421, 0.0
      %v428 = vadd.f32 %v422, 0.0
      %v429 = vadd.f32 %v423, 0.0
      %v430 = vadd.f32 %v424, 0.0
      %v431 = vadd.f32 %v425, 0.0
      %433 = vset.pattern.permute.xlu0 0
      %434 = vperm.xlu0 %433, %v330
      %v435 = vpop.permute.xlu0 %434
      %438 = vset.pattern.permute.xlu0 0
      %439 = vperm.xlu0 %438, %v331
      %v440 = vpop.permute.xlu0 %439
      %443 = vset.pattern.permute.xlu0 0
      %444 = vperm.xlu0 %443, %v332
      %v445 = vpop.permute.xlu0 %444
      %448 = vset.pattern.permute.xlu0 0
      %449 = vperm.xlu0 %448, %v333
      %v450 = vpop.permute.xlu0 %449
      %453 = vset.pattern.permute.xlu0 0
      %454 = vperm.xlu0 %453, %v334
      %v455 = vpop.permute.xlu0 %454
      %458 = vset.pattern.permute.xlu0 0
      %459 = vperm.xlu0 %458, %v335
      %v460 = vpop.permute.xlu0 %459
      %vm462 = vcmp.eq.f32.partialorder %v220, %v435
      %vm463 = vcmp.eq.f32.partialorder %v220, %v440
      %vm464 = vcmp.eq.f32.partialorder %v220, %v445
      %vm465 = vcmp.eq.f32.partialorder %v220, %v450
      %vm466 = vcmp.eq.f32.partialorder %v220, %v455
      %vm467 = vcmp.eq.f32.partialorder %v220, %v460
      %469 = vset.pattern.permute.xlu0 0
      %470 = vperm.xlu0 %469, %v348
      %v471 = vpop.permute.xlu0 %470
      %474 = vset.pattern.permute.xlu0 0
      %475 = vperm.xlu0 %474, %v349
      %v476 = vpop.permute.xlu0 %475
      %479 = vset.pattern.permute.xlu0 0
      %480 = vperm.xlu0 %479, %v350
      %v481 = vpop.permute.xlu0 %480
      %484 = vset.pattern.permute.xlu0 0
      %485 = vperm.xlu0 %484, %v351
      %v486 = vpop.permute.xlu0 %485
      %489 = vset.pattern.permute.xlu0 0
      %490 = vperm.xlu0 %489, %v352
      %v491 = vpop.permute.xlu0 %490
      %494 = vset.pattern.permute.xlu0 0
      %495 = vperm.xlu0 %494, %v353
      %v496 = vpop.permute.xlu0 %495
      %v498 = vsel %vm462, %v471, 0.0
      %v499 = vsel %vm463, %v476, 0.0
      %v500 = vsel %vm464, %v481, 0.0
      %v501 = vsel %vm465, %v486, 0.0
      %v502 = vsel %vm466, %v491, 0.0
      %v503 = vsel %vm467, %v496, 0.0
      %v504 = vadd.f32 %v426, %v498
      %v505 = vadd.f32 %v427, %v499
      %v506 = vadd.f32 %v428, %v500
      %v507 = vadd.f32 %v429, %v501
      %v508 = vadd.f32 %v430, %v502
      %v509 = vadd.f32 %v431, %v503
      %v510 = vmul.f32 %v209, 1.5
      %v511 = vmul.f32 %v210, 1.5
      %v512 = vmul.f32 %v211, 1.5
      %v513 = vmul.f32 %v212, 1.5
      %v514 = vmul.f32 %v213, 1.5
      %v515 = vmul.f32 %v214, 1.5
      %522 = vrot.lane.b32.xlu0 %v510, 127
      %v523 = vpop.permute.xlu0 %522
      %524 = vrot.lane.b32.xlu0 %v511, 127
      %v525 = vpop.permute.xlu0 %524
      %526 = vrot.lane.b32.xlu0 %v512, 127
      %v527 = vpop.permute.xlu0 %526
      %528 = vrot.lane.b32.xlu0 %v513, 127
      %v529 = vpop.permute.xlu0 %528
      %530 = vrot.lane.b32.xlu0 %v514, 127
      %v531 = vpop.permute.xlu0 %530
      %532 = vrot.lane.b32.xlu0 %v515, 127
      %v533 = vpop.permute.xlu0 %532
      %v540 = vadd.f32 %v209, %v523
      %v541 = vadd.f32 %v210, %v525
      %v542 = vadd.f32 %v211, %v527
      %v543 = vadd.f32 %v212, %v529
      %v544 = vadd.f32 %v213, %v531
      %v545 = vadd.f32 %v214, %v533
      %vm546 = vcmp.ge.f32.partialorder %v540, -1.0
      %vm547 = vcmp.ge.f32.partialorder %v541, -1.0
      %vm548 = vcmp.ge.f32.partialorder %v542, -1.0
      %vm549 = vcmp.ge.f32.partialorder %v543, -1.0
      %vm550 = vcmp.ge.f32.partialorder %v544, -1.0
      %vm551 = vcmp.ge.f32.partialorder %v545, -1.0
      %vm552 = vcmp.le.f32.partialorder %v540, 16.0
      %vm553 = vcmp.le.f32.partialorder %v541, 16.0
      %vm554 = vcmp.le.f32.partialorder %v542, 16.0
      %vm555 = vcmp.le.f32.partialorder %v543, 16.0
      %vm556 = vcmp.le.f32.partialorder %v544, 16.0
      %vm557 = vcmp.le.f32.partialorder %v545, 16.0
      %vm558 = vmand %vm546, %vm552
      %vm559 = vmand %vm547, %vm553
      %vm560 = vmand %vm548, %vm554
      %vm561 = vmand %vm549, %vm555
      %vm562 = vmand %vm550, %vm556
      %vm563 = vmand %vm551, %vm557
      %v564 = vsel %vm558, 1, 0
      %v565 = vsel %vm559, 1, 0
      %v566 = vsel %vm560, 1, 0
      %v567 = vsel %vm561, 1, 0
      %v568 = vsel %vm562, 1, 0
      %v569 = vsel %vm563, 1, 0
      %v570 = vcvt.s32.f32 %v564
      %v571 = vcvt.s32.f32 %v565
      %v572 = vcvt.s32.f32 %v566
      %v573 = vcvt.s32.f32 %v567
      %v574 = vcvt.s32.f32 %v568
      %v575 = vcvt.s32.f32 %v569
      %v576 = vmax.f32 %v540, 0.0
      %v577 = vmax.f32 %v541, 0.0
      %v578 = vmax.f32 %v542, 0.0
      %v579 = vmax.f32 %v543, 0.0
      %v580 = vmax.f32 %v544, 0.0
      %v581 = vmax.f32 %v545, 0.0
      %v582 = vfloor.f32 %v576
      %v583 = vfloor.f32 %v577
      %v584 = vfloor.f32 %v578
      %v585 = vfloor.f32 %v579
      %v586 = vfloor.f32 %v580
      %v587 = vfloor.f32 %v581
      %vm588 = vcmp.ge.f32.partialorder %v582, 15.0
      %vm589 = vcmp.ge.f32.partialorder %v583, 15.0
      %vm590 = vcmp.ge.f32.partialorder %v584, 15.0
      %vm591 = vcmp.ge.f32.partialorder %v585, 15.0
      %vm592 = vcmp.ge.f32.partialorder %v586, 15.0
      %vm593 = vcmp.ge.f32.partialorder %v587, 15.0
      %v594 = vsub.f32 %v576, %v582
      %v595 = vsub.f32 %v577, %v583
      %v596 = vsub.f32 %v578, %v584
      %v597 = vsub.f32 %v579, %v585
      %v598 = vsub.f32 %v580, %v586
      %v599 = vsub.f32 %v581, %v587
      %v600 = vsel %vm588, 0.0, %v594
      %v601 = vsel %vm589, 0.0, %v595
      %v602 = vsel %vm590, 0.0, %v596
      %v603 = vsel %vm591, 0.0, %v597
      %v604 = vsel %vm592, 0.0, %v598
      %v605 = vsel %vm593, 0.0, %v599
      %v606 = vmin.f32 %v582, 15.0
      %v607 = vmin.f32 %v583, 15.0
      %v608 = vmin.f32 %v584, 15.0
      %v609 = vmin.f32 %v585, 15.0
      %v610 = vmin.f32 %v586, 15.0
      %v611 = vmin.f32 %v587, 15.0
      %v612 = vadd.f32 %v582, 1.0
      %v613 = vadd.f32 %v583, 1.0
      %v614 = vadd.f32 %v584, 1.0
      %v615 = vadd.f32 %v585, 1.0
      %v616 = vadd.f32 %v586, 1.0
      %v617 = vadd.f32 %v587, 1.0
      %v618 = vmin.f32 %v612, 15.0
      %v619 = vmin.f32 %v613, 15.0
      %v620 = vmin.f32 %v614, 15.0
      %v621 = vmin.f32 %v615, 15.0
      %v622 = vmin.f32 %v616, 15.0
      %v623 = vmin.f32 %v617, 15.0
      %v624 = vsub.f32 1.0, %v600
      %v625 = vsub.f32 1.0, %v601
      %v626 = vsub.f32 1.0, %v602
      %v627 = vsub.f32 1.0, %v603
      %v628 = vsub.f32 1.0, %v604
      %v629 = vsub.f32 1.0, %v605
      %v630 = vmul.f32 %v624, %v570
      %v631 = vmul.f32 %v625, %v571
      %v632 = vmul.f32 %v626, %v572
      %v633 = vmul.f32 %v627, %v573
      %v634 = vmul.f32 %v628, %v574
      %v635 = vmul.f32 %v629, %v575
      %v636 = vmul.f32 %v600, %v570
      %v637 = vmul.f32 %v601, %v571
      %v638 = vmul.f32 %v602, %v572
      %v639 = vmul.f32 %v603, %v573
      %v640 = vmul.f32 %v604, %v574
      %v641 = vmul.f32 %v605, %v575
      %643 = vset.pattern.permute.xlu0 0
      %644 = vperm.xlu0 %643, %v606
      %v645 = vpop.permute.xlu0 %644
      %648 = vset.pattern.permute.xlu0 0
      %649 = vperm.xlu0 %648, %v607
      %v650 = vpop.permute.xlu0 %649
      %653 = vset.pattern.permute.xlu0 0
      %654 = vperm.xlu0 %653, %v608
      %v655 = vpop.permute.xlu0 %654
      %658 = vset.pattern.permute.xlu0 0
      %659 = vperm.xlu0 %658, %v609
      %v660 = vpop.permute.xlu0 %659
      %663 = vset.pattern.permute.xlu0 0
      %664 = vperm.xlu0 %663, %v610
      %v665 = vpop.permute.xlu0 %664
      %668 = vset.pattern.permute.xlu0 0
      %669 = vperm.xlu0 %668, %v611
      %v670 = vpop.permute.xlu0 %669
      %vm672 = vcmp.eq.f32.partialorder %v220, %v645
      %vm673 = vcmp.eq.f32.partialorder %v220, %v650
      %vm674 = vcmp.eq.f32.partialorder %v220, %v655
      %vm675 = vcmp.eq.f32.partialorder %v220, %v660
      %vm676 = vcmp.eq.f32.partialorder %v220, %v665
      %vm677 = vcmp.eq.f32.partialorder %v220, %v670
      %679 = vset.pattern.permute.xlu0 0
      %680 = vperm.xlu0 %679, %v630
      %v681 = vpop.permute.xlu0 %680
      %684 = vset.pattern.permute.xlu0 0
      %685 = vperm.xlu0 %684, %v631
      %v686 = vpop.permute.xlu0 %685
      %689 = vset.pattern.permute.xlu0 0
      %690 = vperm.xlu0 %689, %v632
      %v691 = vpop.permute.xlu0 %690
      %694 = vset.pattern.permute.xlu0 0
      %695 = vperm.xlu0 %694, %v633
      %v696 = vpop.permute.xlu0 %695
      %699 = vset.pattern.permute.xlu0 0
      %700 = vperm.xlu0 %699, %v634
      %v701 = vpop.permute.xlu0 %700
      %704 = vset.pattern.permute.xlu0 0
      %705 = vperm.xlu0 %704, %v635
      %v706 = vpop.permute.xlu0 %705
      %v708 = vsel %vm672, %v681, 0.0
      %v709 = vsel %vm673, %v686, 0.0
      %v710 = vsel %vm674, %v691, 0.0
      %v711 = vsel %vm675, %v696, 0.0
      %v712 = vsel %vm676, %v701, 0.0
      %v713 = vsel %vm677, %v706, 0.0
      %v714 = vadd.f32 %v504, %v708
      %v715 = vadd.f32 %v505, %v709
      %v716 = vadd.f32 %v506, %v710
      %v717 = vadd.f32 %v507, %v711
      %v718 = vadd.f32 %v508, %v712
      %v719 = vadd.f32 %v509, %v713
      %721 = vset.pattern.permute.xlu0 0
      %722 = vperm.xlu0 %721, %v618
      %v723 = vpop.permute.xlu0 %722
      %726 = vset.pattern.permute.xlu0 0
      %727 = vperm.xlu0 %726, %v619
      %v728 = vpop.permute.xlu0 %727
      %731 = vset.pattern.permute.xlu0 0
      %732 = vperm.xlu0 %731, %v620
      %v733 = vpop.permute.xlu0 %732
      %736 = vset.pattern.permute.xlu0 0
      %737 = vperm.xlu0 %736, %v621
      %v738 = vpop.permute.xlu0 %737
      %741 = vset.pattern.permute.xlu0 0
      %742 = vperm.xlu0 %741, %v622
      %v743 = vpop.permute.xlu0 %742
      %746 = vset.pattern.permute.xlu0 0
      %747 = vperm.xlu0 %746, %v623
      %v748 = vpop.permute.xlu0 %747
      %vm750 = vcmp.eq.f32.partialorder %v220, %v723
      %vm751 = vcmp.eq.f32.partialorder %v220, %v728
      %vm752 = vcmp.eq.f32.partialorder %v220, %v733
      %vm753 = vcmp.eq.f32.partialorder %v220, %v738
      %vm754 = vcmp.eq.f32.partialorder %v220, %v743
      %vm755 = vcmp.eq.f32.partialorder %v220, %v748
      %757 = vset.pattern.permute.xlu0 0
      %758 = vperm.xlu0 %757, %v636
      %v759 = vpop.permute.xlu0 %758
      %762 = vset.pattern.permute.xlu0 0
      %763 = vperm.xlu0 %762, %v637
      %v764 = vpop.permute.xlu0 %763
      %767 = vset.pattern.permute.xlu0 0
      %768 = vperm.xlu0 %767, %v638
      %v769 = vpop.permute.xlu0 %768
      %772 = vset.pattern.permute.xlu0 0
      %773 = vperm.xlu0 %772, %v639
      %v774 = vpop.permute.xlu0 %773
      %777 = vset.pattern.permute.xlu0 0
      %778 = vperm.xlu0 %777, %v640
      %v779 = vpop.permute.xlu0 %778
      %782 = vset.pattern.permute.xlu0 0
      %783 = vperm.xlu0 %782, %v641
      %v784 = vpop.permute.xlu0 %783
      %v786 = vsel %vm750, %v759, 0.0
      %v787 = vsel %vm751, %v764, 0.0
      %v788 = vsel %vm752, %v769, 0.0
      %v789 = vsel %vm753, %v774, 0.0
      %v790 = vsel %vm754, %v779, 0.0
      %v791 = vsel %vm755, %v784, 0.0
      %v792 = vadd.f32 %v714, %v786
      %v793 = vadd.f32 %v715, %v787
      %v794 = vadd.f32 %v716, %v788
      %v795 = vadd.f32 %v717, %v789
      %v796 = vadd.f32 %v718, %v790
      %v797 = vadd.f32 %v719, %v791
      %v798 = vmul.f32 %v282, 0.25
      %v799 = vmul.f32 %v283, 0.25
      %v800 = vmul.f32 %v284, 0.25
      %v801 = vmul.f32 %v285, 0.25
      %v802 = vmul.f32 %v286, 0.25
      %v803 = vmul.f32 %v287, 0.25
      %v804 = vmul.f32 %v336, %v798
      %v805 = vmul.f32 %v337, %v799
      %v806 = vmul.f32 %v338, %v800
      %v807 = vmul.f32 %v339, %v801
      %v808 = vmul.f32 %v340, %v802
      %v809 = vmul.f32 %v341, %v803
      %v810 = vmul.f32 %v312, %v798
      %v811 = vmul.f32 %v313, %v799
      %v812 = vmul.f32 %v314, %v800
      %v813 = vmul.f32 %v315, %v801
      %v814 = vmul.f32 %v316, %v802
      %v815 = vmul.f32 %v317, %v803
      %816 = vset.pattern.permute.xlu0 2
      %817 = vperm.xlu0 %816, %v318
      %v818 = vpop.permute.xlu0 %817
      %820 = vset.pattern.permute.xlu0 2
      %821 = vperm.xlu0 %820, %v319
      %v822 = vpop.permute.xlu0 %821
      %824 = vset.pattern.permute.xlu0 2
      %825 = vperm.xlu0 %824, %v320
      %v826 = vpop.permute.xlu0 %825
      %828 = vset.pattern.permute.xlu0 2
      %829 = vperm.xlu0 %828, %v321
      %v830 = vpop.permute.xlu0 %829
      %832 = vset.pattern.permute.xlu0 2
      %833 = vperm.xlu0 %832, %v322
      %v834 = vpop.permute.xlu0 %833
      %836 = vset.pattern.permute.xlu0 2
      %837 = vperm.xlu0 %836, %v323
      %v838 = vpop.permute.xlu0 %837
      %vm840 = vcmp.eq.f32.partialorder %v221, %v818
      %vm841 = vcmp.eq.f32.partialorder %v221, %v822
      %vm842 = vcmp.eq.f32.partialorder %v221, %v826
      %vm843 = vcmp.eq.f32.partialorder %v221, %v830
      %vm844 = vcmp.eq.f32.partialorder %v221, %v834
      %vm845 = vcmp.eq.f32.partialorder %v221, %v838
      %847 = vset.pattern.permute.xlu0 2
      %848 = vperm.xlu0 %847, %v804
      %v849 = vpop.permute.xlu0 %848
      %852 = vset.pattern.permute.xlu0 2
      %853 = vperm.xlu0 %852, %v805
      %v854 = vpop.permute.xlu0 %853
      %857 = vset.pattern.permute.xlu0 2
      %858 = vperm.xlu0 %857, %v806
      %v859 = vpop.permute.xlu0 %858
      %862 = vset.pattern.permute.xlu0 2
      %863 = vperm.xlu0 %862, %v807
      %v864 = vpop.permute.xlu0 %863
      %867 = vset.pattern.permute.xlu0 2
      %868 = vperm.xlu0 %867, %v808
      %v869 = vpop.permute.xlu0 %868
      %872 = vset.pattern.permute.xlu0 2
      %873 = vperm.xlu0 %872, %v809
      %v874 = vpop.permute.xlu0 %873
      %v876 = vsel %vm840, %v849, 0.0
      %v877 = vsel %vm841, %v854, 0.0
      %v878 = vsel %vm842, %v859, 0.0
      %v879 = vsel %vm843, %v864, 0.0
      %v880 = vsel %vm844, %v869, 0.0
      %v881 = vsel %vm845, %v874, 0.0
      %v882 = vadd.f32 %v876, 0.0
      %v883 = vadd.f32 %v877, 0.0
      %v884 = vadd.f32 %v878, 0.0
      %v885 = vadd.f32 %v879, 0.0
      %v886 = vadd.f32 %v880, 0.0
      %v887 = vadd.f32 %v881, 0.0
      %888 = vset.pattern.permute.xlu0 2
      %889 = vperm.xlu0 %888, %v330
      %v890 = vpop.permute.xlu0 %889
      %892 = vset.pattern.permute.xlu0 2
      %893 = vperm.xlu0 %892, %v331
      %v894 = vpop.permute.xlu0 %893
      %896 = vset.pattern.permute.xlu0 2
      %897 = vperm.xlu0 %896, %v332
      %v898 = vpop.permute.xlu0 %897
      %900 = vset.pattern.permute.xlu0 2
      %901 = vperm.xlu0 %900, %v333
      %v902 = vpop.permute.xlu0 %901
      %904 = vset.pattern.permute.xlu0 2
      %905 = vperm.xlu0 %904, %v334
      %v906 = vpop.permute.xlu0 %905
      %908 = vset.pattern.permute.xlu0 2
      %909 = vperm.xlu0 %908, %v335
      %v910 = vpop.permute.xlu0 %909
      %vm912 = vcmp.eq.f32.partialorder %v221, %v890
      %vm913 = vcmp.eq.f32.partialorder %v221, %v894
      %vm914 = vcmp.eq.f32.partialorder %v221, %v898
      %vm915 = vcmp.eq.f32.partialorder %v221, %v902
      %vm916 = vcmp.eq.f32.partialorder %v221, %v906
      %vm917 = vcmp.eq.f32.partialorder %v221, %v910
      %919 = vset.pattern.permute.xlu0 2
      %920 = vperm.xlu0 %919, %v810
      %v921 = vpop.permute.xlu0 %920
      %924 = vset.pattern.permute.xlu0 2
      %925 = vperm.xlu0 %924, %v811
      %v926 = vpop.permute.xlu0 %925
      %929 = vset.pattern.permute.xlu0 2
      %930 = vperm.xlu0 %929, %v812
      %v931 = vpop.permute.xlu0 %930
      %934 = vset.pattern.permute.xlu0 2
      %935 = vperm.xlu0 %934, %v813
      %v936 = vpop.permute.xlu0 %935
      %939 = vset.pattern.permute.xlu0 2
      %940 = vperm.xlu0 %939, %v814
      %v941 = vpop.permute.xlu0 %940
      %944 = vset.pattern.permute.xlu0 2
      %945 = vperm.xlu0 %944, %v815
      %v946 = vpop.permute.xlu0 %945
      %v948 = vsel %vm912, %v921, 0.0
      %v949 = vsel %vm913, %v926, 0.0
      %v950 = vsel %vm914, %v931, 0.0
      %v951 = vsel %vm915, %v936, 0.0
      %v952 = vsel %vm916, %v941, 0.0
      %v953 = vsel %vm917, %v946, 0.0
      %v954 = vadd.f32 %v882, %v948
      %v955 = vadd.f32 %v883, %v949
      %v956 = vadd.f32 %v884, %v950
      %v957 = vadd.f32 %v885, %v951
      %v958 = vadd.f32 %v886, %v952
      %v959 = vadd.f32 %v887, %v953
      %v960 = vmul.f32 %v570, 0.25
      %v961 = vmul.f32 %v571, 0.25
      %v962 = vmul.f32 %v572, 0.25
      %v963 = vmul.f32 %v573, 0.25
      %v964 = vmul.f32 %v574, 0.25
      %v965 = vmul.f32 %v575, 0.25
      %v966 = vmul.f32 %v624, %v960
      %v967 = vmul.f32 %v625, %v961
      %v968 = vmul.f32 %v626, %v962
      %v969 = vmul.f32 %v627, %v963
      %v970 = vmul.f32 %v628, %v964
      %v971 = vmul.f32 %v629, %v965
      %v972 = vmul.f32 %v600, %v960
      %v973 = vmul.f32 %v601, %v961
      %v974 = vmul.f32 %v602, %v962
      %v975 = vmul.f32 %v603, %v963
      %v976 = vmul.f32 %v604, %v964
      %v977 = vmul.f32 %v605, %v965
      %978 = vset.pattern.permute.xlu0 2
      %979 = vperm.xlu0 %978, %v606
      %v980 = vpop.permute.xlu0 %979
      %982 = vset.pattern.permute.xlu0 2
      %983 = vperm.xlu0 %982, %v607
      %v984 = vpop.permute.xlu0 %983
      %986 = vset.pattern.permute.xlu0 2
      %987 = vperm.xlu0 %986, %v608
      %v988 = vpop.permute.xlu0 %987
      %990 = vset.pattern.permute.xlu0 2
      %991 = vperm.xlu0 %990, %v609
      %v992 = vpop.permute.xlu0 %991
      %994 = vset.pattern.permute.xlu0 2
      %995 = vperm.xlu0 %994, %v610
      %v996 = vpop.permute.xlu0 %995
      %998 = vset.pattern.permute.xlu0 2
      %999 = vperm.xlu0 %998, %v611
      %v1000 = vpop.permute.xlu0 %999
      %vm1002 = vcmp.eq.f32.partialorder %v221, %v980
      %vm1003 = vcmp.eq.f32.partialorder %v221, %v984
      %vm1004 = vcmp.eq.f32.partialorder %v221, %v988
      %vm1005 = vcmp.eq.f32.partialorder %v221, %v992
      %vm1006 = vcmp.eq.f32.partialorder %v221, %v996
      %vm1007 = vcmp.eq.f32.partialorder %v221, %v1000
      %1009 = vset.pattern.permute.xlu0 2
      %1010 = vperm.xlu0 %1009, %v966
      %v1011 = vpop.permute.xlu0 %1010
      %1014 = vset.pattern.permute.xlu0 2
      %1015 = vperm.xlu0 %1014, %v967
      %v1016 = vpop.permute.xlu0 %1015
      %1019 = vset.pattern.permute.xlu0 2
      %1020 = vperm.xlu0 %1019, %v968
      %v1021 = vpop.permute.xlu0 %1020
      %1024 = vset.pattern.permute.xlu0 2
      %1025 = vperm.xlu0 %1024, %v969
      %v1026 = vpop.permute.xlu0 %1025
      %1029 = vset.pattern.permute.xlu0 2
      %1030 = vperm.xlu0 %1029, %v970
      %v1031 = vpop.permute.xlu0 %1030
      %1034 = vset.pattern.permute.xlu0 2
      %1035 = vperm.xlu0 %1034, %v971
      %v1036 = vpop.permute.xlu0 %1035
      %v1038 = vsel %vm1002, %v1011, 0.0
      %v1039 = vsel %vm1003, %v1016, 0.0
      %v1040 = vsel %vm1004, %v1021, 0.0
      %v1041 = vsel %vm1005, %v1026, 0.0
      %v1042 = vsel %vm1006, %v1031, 0.0
      %v1043 = vsel %vm1007, %v1036, 0.0
      %v1044 = vadd.f32 %v954, %v1038
      %v1045 = vadd.f32 %v955, %v1039
      %v1046 = vadd.f32 %v956, %v1040
      %v1047 = vadd.f32 %v957, %v1041
      %v1048 = vadd.f32 %v958, %v1042
      %v1049 = vadd.f32 %v959, %v1043
      %1050 = vset.pattern.permute.xlu0 2
      %1051 = vperm.xlu0 %1050, %v618
      %v1052 = vpop.permute.xlu0 %1051
      %1054 = vset.pattern.permute.xlu0 2
      %1055 = vperm.xlu0 %1054, %v619
      %v1056 = vpop.permute.xlu0 %1055
      %1058 = vset.pattern.permute.xlu0 2
      %1059 = vperm.xlu0 %1058, %v620
      %v1060 = vpop.permute.xlu0 %1059
      %1062 = vset.pattern.permute.xlu0 2
      %1063 = vperm.xlu0 %1062, %v621
      %v1064 = vpop.permute.xlu0 %1063
      %1066 = vset.pattern.permute.xlu0 2
      %1067 = vperm.xlu0 %1066, %v622
      %v1068 = vpop.permute.xlu0 %1067
      %1070 = vset.pattern.permute.xlu0 2
      %1071 = vperm.xlu0 %1070, %v623
      %v1072 = vpop.permute.xlu0 %1071
      %vm1074 = vcmp.eq.f32.partialorder %v221, %v1052
      %vm1075 = vcmp.eq.f32.partialorder %v221, %v1056
      %vm1076 = vcmp.eq.f32.partialorder %v221, %v1060
      %vm1077 = vcmp.eq.f32.partialorder %v221, %v1064
      %vm1078 = vcmp.eq.f32.partialorder %v221, %v1068
      %vm1079 = vcmp.eq.f32.partialorder %v221, %v1072
      %1081 = vset.pattern.permute.xlu0 2
      %1082 = vperm.xlu0 %1081, %v972
      %v1083 = vpop.permute.xlu0 %1082
      %1086 = vset.pattern.permute.xlu0 2
      %1087 = vperm.xlu0 %1086, %v973
      %v1088 = vpop.permute.xlu0 %1087
      %1091 = vset.pattern.permute.xlu0 2
      %1092 = vperm.xlu0 %1091, %v974
      %v1093 = vpop.permute.xlu0 %1092
      %1096 = vset.pattern.permute.xlu0 2
      %1097 = vperm.xlu0 %1096, %v975
      %v1098 = vpop.permute.xlu0 %1097
      %1101 = vset.pattern.permute.xlu0 2
      %1102 = vperm.xlu0 %1101, %v976
      %v1103 = vpop.permute.xlu0 %1102
      %1106 = vset.pattern.permute.xlu0 2
      %1107 = vperm.xlu0 %1106, %v977
      %v1108 = vpop.permute.xlu0 %1107
      %v1110 = vsel %vm1074, %v1083, 0.0
      %v1111 = vsel %vm1075, %v1088, 0.0
      %v1112 = vsel %vm1076, %v1093, 0.0
      %v1113 = vsel %vm1077, %v1098, 0.0
      %v1114 = vsel %vm1078, %v1103, 0.0
      %v1115 = vsel %vm1079, %v1108, 0.0
      %v1116 = vadd.f32 %v1044, %v1110
      %v1117 = vadd.f32 %v1045, %v1111
      %v1118 = vadd.f32 %v1046, %v1112
      %v1119 = vadd.f32 %v1047, %v1113
      %v1120 = vadd.f32 %v1048, %v1114
      %v1121 = vadd.f32 %v1049, %v1115
      %v1122 = vlaneseq
      %v1123 = vshrl.u32 %v1122, 7
      %v1124 = vsub.s32 0, %v1123
      %v1125 = vrot.slane %v792, %v1124
      %1127 = vbcast.lane.b32.xlu0 %v1125, 256
      %v1128 = vpop.permute.xlu0 %1127
      %s1130 = sor.u32 256, 8
      %1131 = vbcast.lane.b32.xlu0 %v1125, %s1130
      %v1132 = vpop.permute.xlu0 %1131
      %v1133 = vlaneseq
      %v1134 = vshrl.u32 %v1133, 7
      %v1135 = vsub.s32 1, %v1134
      %v1136 = vrot.slane %v792, %v1135
      %1138 = vbcast.lane.b32.xlu0 %v1136, 256
      %v1139 = vpop.permute.xlu0 %1138
      %s1141 = sor.u32 256, 8
      %1142 = vbcast.lane.b32.xlu0 %v1136, %s1141
      %v1143 = vpop.permute.xlu0 %1142
      %v1144 = vlaneseq
      %v1145 = vshrl.u32 %v1144, 7
      %v1146 = vsub.s32 2, %v1145
      %v1147 = vrot.slane %v792, %v1146
      %1149 = vbcast.lane.b32.xlu0 %v1147, 256
      %v1150 = vpop.permute.xlu0 %1149
      %s1152 = sor.u32 256, 8
      %1153 = vbcast.lane.b32.xlu0 %v1147, %s1152
      %v1154 = vpop.permute.xlu0 %1153
      %v1155 = vlaneseq
      %v1156 = vshrl.u32 %v1155, 7
      %v1157 = vsub.s32 3, %v1156
      %v1158 = vrot.slane %v792, %v1157
      %1160 = vbcast.lane.b32.xlu0 %v1158, 256
      %v1161 = vpop.permute.xlu0 %1160
      %s1163 = sor.u32 256, 8
      %1164 = vbcast.lane.b32.xlu0 %v1158, %s1163
      %v1165 = vpop.permute.xlu0 %1164
      %v1166 = vlaneseq
      %v1167 = vshrl.u32 %v1166, 7
      %v1168 = vsub.s32 4, %v1167
      %v1169 = vrot.slane %v792, %v1168
      %1171 = vbcast.lane.b32.xlu0 %v1169, 256
      %v1172 = vpop.permute.xlu0 %1171
      %s1174 = sor.u32 256, 8
      %1175 = vbcast.lane.b32.xlu0 %v1169, %s1174
      %v1176 = vpop.permute.xlu0 %1175
      %v1177 = vlaneseq
      %v1178 = vshrl.u32 %v1177, 7
      %v1179 = vsub.s32 5, %v1178
      %v1180 = vrot.slane %v792, %v1179
      %1182 = vbcast.lane.b32.xlu0 %v1180, 256
      %v1183 = vpop.permute.xlu0 %1182
      %s1185 = sor.u32 256, 8
      %1186 = vbcast.lane.b32.xlu0 %v1180, %s1185
      %v1187 = vpop.permute.xlu0 %1186
      %v1188 = vlaneseq
      %v1189 = vshrl.u32 %v1188, 7
      %v1190 = vsub.s32 6, %v1189
      %v1191 = vrot.slane %v792, %v1190
      %1193 = vbcast.lane.b32.xlu0 %v1191, 256
      %v1194 = vpop.permute.xlu0 %1193
      %s1196 = sor.u32 256, 8
      %1197 = vbcast.lane.b32.xlu0 %v1191, %s1196
      %v1198 = vpop.permute.xlu0 %1197
      %v1199 = vlaneseq
      %v1200 = vshrl.u32 %v1199, 7
      %v1201 = vsub.s32 7, %v1200
      %v1202 = vrot.slane %v792, %v1201
      %1204 = vbcast.lane.b32.xlu0 %v1202, 256
      %v1205 = vpop.permute.xlu0 %1204
      %s1207 = sor.u32 256, 8
      %1208 = vbcast.lane.b32.xlu0 %v1202, %s1207
      %v1209 = vpop.permute.xlu0 %1208
      %v1210 = vlaneseq
      %v1211 = vshrl.u32 %v1210, 7
      %v1212 = vsub.s32 0, %v1211
      %v1213 = vrot.slane %v793, %v1212
      %1215 = vbcast.lane.b32.xlu0 %v1213, 256
      %v1216 = vpop.permute.xlu0 %1215
      %s1218 = sor.u32 256, 8
      %1219 = vbcast.lane.b32.xlu0 %v1213, %s1218
      %v1220 = vpop.permute.xlu0 %1219
      %v1221 = vlaneseq
      %v1222 = vshrl.u32 %v1221, 7
      %v1223 = vsub.s32 1, %v1222
      %v1224 = vrot.slane %v793, %v1223
      %1226 = vbcast.lane.b32.xlu0 %v1224, 256
      %v1227 = vpop.permute.xlu0 %1226
      %s1229 = sor.u32 256, 8
      %1230 = vbcast.lane.b32.xlu0 %v1224, %s1229
      %v1231 = vpop.permute.xlu0 %1230
      %v1232 = vlaneseq
      %v1233 = vshrl.u32 %v1232, 7
      %v1234 = vsub.s32 2, %v1233
      %v1235 = vrot.slane %v793, %v1234
      %1237 = vbcast.lane.b32.xlu0 %v1235, 256
      %v1238 = vpop.permute.xlu0 %1237
      %s1240 = sor.u32 256, 8
      %1241 = vbcast.lane.b32.xlu0 %v1235, %s1240
      %v1242 = vpop.permute.xlu0 %1241
      %v1243 = vlaneseq
      %v1244 = vshrl.u32 %v1243, 7
      %v1245 = vsub.s32 3, %v1244
      %v1246 = vrot.slane %v793, %v1245
      %1248 = vbcast.lane.b32.xlu0 %v1246, 256
      %v1249 = vpop.permute.xlu0 %1248
      %s1251 = sor.u32 256, 8
      %1252 = vbcast.lane.b32.xlu0 %v1246, %s1251
      %v1253 = vpop.permute.xlu0 %1252
      %v1254 = vlaneseq
      %v1255 = vshrl.u32 %v1254, 7
      %v1256 = vsub.s32 4, %v1255
      %v1257 = vrot.slane %v793, %v1256
      %1259 = vbcast.lane.b32.xlu0 %v1257, 256
      %v1260 = vpop.permute.xlu0 %1259
      %s1262 = sor.u32 256, 8
      %1263 = vbcast.lane.b32.xlu0 %v1257, %s1262
      %v1264 = vpop.permute.xlu0 %1263
      %v1265 = vlaneseq
      %v1266 = vshrl.u32 %v1265, 7
      %v1267 = vsub.s32 5, %v1266
      %v1268 = vrot.slane %v793, %v1267
      %1270 = vbcast.lane.b32.xlu0 %v1268, 256
      %v1271 = vpop.permute.xlu0 %1270
      %s1273 = sor.u32 256, 8
      %1274 = vbcast.lane.b32.xlu0 %v1268, %s1273
      %v1275 = vpop.permute.xlu0 %1274
      %v1276 = vlaneseq
      %v1277 = vshrl.u32 %v1276, 7
      %v1278 = vsub.s32 6, %v1277
      %v1279 = vrot.slane %v793, %v1278
      %1281 = vbcast.lane.b32.xlu0 %v1279, 256
      %v1282 = vpop.permute.xlu0 %1281
      %s1284 = sor.u32 256, 8
      %1285 = vbcast.lane.b32.xlu0 %v1279, %s1284
      %v1286 = vpop.permute.xlu0 %1285
      %v1287 = vlaneseq
      %v1288 = vshrl.u32 %v1287, 7
      %v1289 = vsub.s32 7, %v1288
      %v1290 = vrot.slane %v793, %v1289
      %1292 = vbcast.lane.b32.xlu0 %v1290, 256
      %v1293 = vpop.permute.xlu0 %1292
      %s1295 = sor.u32 256, 8
      %1296 = vbcast.lane.b32.xlu0 %v1290, %s1295
      %v1297 = vpop.permute.xlu0 %1296
      %v1298 = vlaneseq
      %v1299 = vshrl.u32 %v1298, 7
      %v1300 = vsub.s32 0, %v1299
      %v1301 = vrot.slane %v794, %v1300
      %1303 = vbcast.lane.b32.xlu0 %v1301, 256
      %v1304 = vpop.permute.xlu0 %1303
      %s1306 = sor.u32 256, 8
      %1307 = vbcast.lane.b32.xlu0 %v1301, %s1306
      %v1308 = vpop.permute.xlu0 %1307
      %v1309 = vlaneseq
      %v1310 = vshrl.u32 %v1309, 7
      %v1311 = vsub.s32 1, %v1310
      %v1312 = vrot.slane %v794, %v1311
      %1314 = vbcast.lane.b32.xlu0 %v1312, 256
      %v1315 = vpop.permute.xlu0 %1314
      %s1317 = sor.u32 256, 8
      %1318 = vbcast.lane.b32.xlu0 %v1312, %s1317
      %v1319 = vpop.permute.xlu0 %1318
      %v1320 = vlaneseq
      %v1321 = vshrl.u32 %v1320, 7
      %v1322 = vsub.s32 2, %v1321
      %v1323 = vrot.slane %v794, %v1322
      %1325 = vbcast.lane.b32.xlu0 %v1323, 256
      %v1326 = vpop.permute.xlu0 %1325
      %s1328 = sor.u32 256, 8
      %1329 = vbcast.lane.b32.xlu0 %v1323, %s1328
      %v1330 = vpop.permute.xlu0 %1329
      %v1331 = vlaneseq
      %v1332 = vshrl.u32 %v1331, 7
      %v1333 = vsub.s32 3, %v1332
      %v1334 = vrot.slane %v794, %v1333
      %1336 = vbcast.lane.b32.xlu0 %v1334, 256
      %v1337 = vpop.permute.xlu0 %1336
      %s1339 = sor.u32 256, 8
      %1340 = vbcast.lane.b32.xlu0 %v1334, %s1339
      %v1341 = vpop.permute.xlu0 %1340
      %v1342 = vlaneseq
      %v1343 = vshrl.u32 %v1342, 7
      %v1344 = vsub.s32 4, %v1343
      %v1345 = vrot.slane %v794, %v1344
      %1347 = vbcast.lane.b32.xlu0 %v1345, 256
      %v1348 = vpop.permute.xlu0 %1347
      %s1350 = sor.u32 256, 8
      %1351 = vbcast.lane.b32.xlu0 %v1345, %s1350
      %v1352 = vpop.permute.xlu0 %1351
      %v1353 = vlaneseq
      %v1354 = vshrl.u32 %v1353, 7
      %v1355 = vsub.s32 5, %v1354
      %v1356 = vrot.slane %v794, %v1355
      %1358 = vbcast.lane.b32.xlu0 %v1356, 256
      %v1359 = vpop.permute.xlu0 %1358
      %s1361 = sor.u32 256, 8
      %1362 = vbcast.lane.b32.xlu0 %v1356, %s1361
      %v1363 = vpop.permute.xlu0 %1362
      %v1364 = vlaneseq
      %v1365 = vshrl.u32 %v1364, 7
      %v1366 = vsub.s32 6, %v1365
      %v1367 = vrot.slane %v794, %v1366
      %1369 = vbcast.lane.b32.xlu0 %v1367, 256
      %v1370 = vpop.permute.xlu0 %1369
      %s1372 = sor.u32 256, 8
      %1373 = vbcast.lane.b32.xlu0 %v1367, %s1372
      %v1374 = vpop.permute.xlu0 %1373
      %v1375 = vlaneseq
      %v1376 = vshrl.u32 %v1375, 7
      %v1377 = vsub.s32 7, %v1376
      %v1378 = vrot.slane %v794, %v1377
      %1380 = vbcast.lane.b32.xlu0 %v1378, 256
      %v1381 = vpop.permute.xlu0 %1380
      %s1383 = sor.u32 256, 8
      %1384 = vbcast.lane.b32.xlu0 %v1378, %s1383
      %v1385 = vpop.permute.xlu0 %1384
      %v1386 = vlaneseq
      %v1387 = vshrl.u32 %v1386, 7
      %v1388 = vsub.s32 0, %v1387
      %v1389 = vrot.slane %v795, %v1388
      %1391 = vbcast.lane.b32.xlu0 %v1389, 256
      %v1392 = vpop.permute.xlu0 %1391
      %s1394 = sor.u32 256, 8
      %1395 = vbcast.lane.b32.xlu0 %v1389, %s1394
      %v1396 = vpop.permute.xlu0 %1395
      %v1397 = vlaneseq
      %v1398 = vshrl.u32 %v1397, 7
      %v1399 = vsub.s32 1, %v1398
      %v1400 = vrot.slane %v795, %v1399
      %1402 = vbcast.lane.b32.xlu0 %v1400, 256
      %v1403 = vpop.permute.xlu0 %1402
      %s1405 = sor.u32 256, 8
      %1406 = vbcast.lane.b32.xlu0 %v1400, %s1405
      %v1407 = vpop.permute.xlu0 %1406
      %v1408 = vlaneseq
      %v1409 = vshrl.u32 %v1408, 7
      %v1410 = vsub.s32 2, %v1409
      %v1411 = vrot.slane %v795, %v1410
      %1413 = vbcast.lane.b32.xlu0 %v1411, 256
      %v1414 = vpop.permute.xlu0 %1413
      %s1416 = sor.u32 256, 8
      %1417 = vbcast.lane.b32.xlu0 %v1411, %s1416
      %v1418 = vpop.permute.xlu0 %1417
      %v1419 = vlaneseq
      %v1420 = vshrl.u32 %v1419, 7
      %v1421 = vsub.s32 3, %v1420
      %v1422 = vrot.slane %v795, %v1421
      %1424 = vbcast.lane.b32.xlu0 %v1422, 256
      %v1425 = vpop.permute.xlu0 %1424
      %s1427 = sor.u32 256, 8
      %1428 = vbcast.lane.b32.xlu0 %v1422, %s1427
      %v1429 = vpop.permute.xlu0 %1428
      %v1430 = vlaneseq
      %v1431 = vshrl.u32 %v1430, 7
      %v1432 = vsub.s32 4, %v1431
      %v1433 = vrot.slane %v795, %v1432
      %1435 = vbcast.lane.b32.xlu0 %v1433, 256
      %v1436 = vpop.permute.xlu0 %1435
      %s1438 = sor.u32 256, 8
      %1439 = vbcast.lane.b32.xlu0 %v1433, %s1438
      %v1440 = vpop.permute.xlu0 %1439
      %v1441 = vlaneseq
      %v1442 = vshrl.u32 %v1441, 7
      %v1443 = vsub.s32 5, %v1442
      %v1444 = vrot.slane %v795, %v1443
      %1446 = vbcast.lane.b32.xlu0 %v1444, 256
      %v1447 = vpop.permute.xlu0 %1446
      %s1449 = sor.u32 256, 8
      %1450 = vbcast.lane.b32.xlu0 %v1444, %s1449
      %v1451 = vpop.permute.xlu0 %1450
      %v1452 = vlaneseq
      %v1453 = vshrl.u32 %v1452, 7
      %v1454 = vsub.s32 6, %v1453
      %v1455 = vrot.slane %v795, %v1454
      %1457 = vbcast.lane.b32.xlu0 %v1455, 256
      %v1458 = vpop.permute.xlu0 %1457
      %s1460 = sor.u32 256, 8
      %1461 = vbcast.lane.b32.xlu0 %v1455, %s1460
      %v1462 = vpop.permute.xlu0 %1461
      %v1463 = vlaneseq
      %v1464 = vshrl.u32 %v1463, 7
      %v1465 = vsub.s32 7, %v1464
      %v1466 = vrot.slane %v795, %v1465
      %1468 = vbcast.lane.b32.xlu0 %v1466, 256
      %v1469 = vpop.permute.xlu0 %1468
      %s1471 = sor.u32 256, 8
      %1472 = vbcast.lane.b32.xlu0 %v1466, %s1471
      %v1473 = vpop.permute.xlu0 %1472
      %v1474 = vlaneseq
      %v1475 = vshrl.u32 %v1474, 7
      %v1476 = vsub.s32 0, %v1475
      %v1477 = vrot.slane %v796, %v1476
      %1479 = vbcast.lane.b32.xlu0 %v1477, 256
      %v1480 = vpop.permute.xlu0 %1479
      %s1482 = sor.u32 256, 8
      %1483 = vbcast.lane.b32.xlu0 %v1477, %s1482
      %v1484 = vpop.permute.xlu0 %1483
      %v1485 = vlaneseq
      %v1486 = vshrl.u32 %v1485, 7
      %v1487 = vsub.s32 1, %v1486
      %v1488 = vrot.slane %v796, %v1487
      %1490 = vbcast.lane.b32.xlu0 %v1488, 256
      %v1491 = vpop.permute.xlu0 %1490
      %s1493 = sor.u32 256, 8
      %1494 = vbcast.lane.b32.xlu0 %v1488, %s1493
      %v1495 = vpop.permute.xlu0 %1494
      %v1496 = vlaneseq
      %v1497 = vshrl.u32 %v1496, 7
      %v1498 = vsub.s32 2, %v1497
      %v1499 = vrot.slane %v796, %v1498
      %1501 = vbcast.lane.b32.xlu0 %v1499, 256
      %v1502 = vpop.permute.xlu0 %1501
      %s1504 = sor.u32 256, 8
      %1505 = vbcast.lane.b32.xlu0 %v1499, %s1504
      %v1506 = vpop.permute.xlu0 %1505
      %v1507 = vlaneseq
      %v1508 = vshrl.u32 %v1507, 7
      %v1509 = vsub.s32 3, %v1508
      %v1510 = vrot.slane %v796, %v1509
      %1512 = vbcast.lane.b32.xlu0 %v1510, 256
      %v1513 = vpop.permute.xlu0 %1512
      %s1515 = sor.u32 256, 8
      %1516 = vbcast.lane.b32.xlu0 %v1510, %s1515
      %v1517 = vpop.permute.xlu0 %1516
      %v1518 = vlaneseq
      %v1519 = vshrl.u32 %v1518, 7
      %v1520 = vsub.s32 4, %v1519
      %v1521 = vrot.slane %v796, %v1520
      %1523 = vbcast.lane.b32.xlu0 %v1521, 256
      %v1524 = vpop.permute.xlu0 %1523
      %s1526 = sor.u32 256, 8
      %1527 = vbcast.lane.b32.xlu0 %v1521, %s1526
      %v1528 = vpop.permute.xlu0 %1527
      %v1529 = vlaneseq
      %v1530 = vshrl.u32 %v1529, 7
      %v1531 = vsub.s32 5, %v1530
      %v1532 = vrot.slane %v796, %v1531
      %1534 = vbcast.lane.b32.xlu0 %v1532, 256
      %v1535 = vpop.permute.xlu0 %1534
      %s1537 = sor.u32 256, 8
      %1538 = vbcast.lane.b32.xlu0 %v1532, %s1537
      %v1539 = vpop.permute.xlu0 %1538
      %v1540 = vlaneseq
      %v1541 = vshrl.u32 %v1540, 7
      %v1542 = vsub.s32 6, %v1541
      %v1543 = vrot.slane %v796, %v1542
      %1545 = vbcast.lane.b32.xlu0 %v1543, 256
      %v1546 = vpop.permute.xlu0 %1545
      %s1548 = sor.u32 256, 8
      %1549 = vbcast.lane.b32.xlu0 %v1543, %s1548
      %v1550 = vpop.permute.xlu0 %1549
      %v1551 = vlaneseq
      %v1552 = vshrl.u32 %v1551, 7
      %v1553 = vsub.s32 7, %v1552
      %v1554 = vrot.slane %v796, %v1553
      %1556 = vbcast.lane.b32.xlu0 %v1554, 256
      %v1557 = vpop.permute.xlu0 %1556
      %s1559 = sor.u32 256, 8
      %1560 = vbcast.lane.b32.xlu0 %v1554, %s1559
      %v1561 = vpop.permute.xlu0 %1560
      %v1562 = vlaneseq
      %v1563 = vshrl.u32 %v1562, 7
      %v1564 = vsub.s32 0, %v1563
      %v1565 = vrot.slane %v797, %v1564
      %1567 = vbcast.lane.b32.xlu0 %v1565, 256
      %v1568 = vpop.permute.xlu0 %1567
      %s1570 = sor.u32 256, 8
      %1571 = vbcast.lane.b32.xlu0 %v1565, %s1570
      %v1572 = vpop.permute.xlu0 %1571
      %v1573 = vlaneseq
      %v1574 = vshrl.u32 %v1573, 7
      %v1575 = vsub.s32 1, %v1574
      %v1576 = vrot.slane %v797, %v1575
      %1578 = vbcast.lane.b32.xlu0 %v1576, 256
      %v1579 = vpop.permute.xlu0 %1578
      %s1581 = sor.u32 256, 8
      %1582 = vbcast.lane.b32.xlu0 %v1576, %s1581
      %v1583 = vpop.permute.xlu0 %1582
      %v1584 = vlaneseq
      %v1585 = vshrl.u32 %v1584, 7
      %v1586 = vsub.s32 2, %v1585
      %v1587 = vrot.slane %v797, %v1586
      %1589 = vbcast.lane.b32.xlu0 %v1587, 256
      %v1590 = vpop.permute.xlu0 %1589
      %s1592 = sor.u32 256, 8
      %1593 = vbcast.lane.b32.xlu0 %v1587, %s1592
      %v1594 = vpop.permute.xlu0 %1593
      %v1595 = vlaneseq
      %v1596 = vshrl.u32 %v1595, 7
      %v1597 = vsub.s32 3, %v1596
      %v1598 = vrot.slane %v797, %v1597
      %1600 = vbcast.lane.b32.xlu0 %v1598, 256
      %v1601 = vpop.permute.xlu0 %1600
      %s1603 = sor.u32 256, 8
      %1604 = vbcast.lane.b32.xlu0 %v1598, %s1603
      %v1605 = vpop.permute.xlu0 %1604
      %v1606 = vlaneseq
      %v1607 = vshrl.u32 %v1606, 7
      %v1608 = vsub.s32 4, %v1607
      %v1609 = vrot.slane %v797, %v1608
      %1611 = vbcast.lane.b32.xlu0 %v1609, 256
      %v1612 = vpop.permute.xlu0 %1611
      %s1614 = sor.u32 256, 8
      %1615 = vbcast.lane.b32.xlu0 %v1609, %s1614
      %v1616 = vpop.permute.xlu0 %1615
      %v1617 = vlaneseq
      %v1618 = vshrl.u32 %v1617, 7
      %v1619 = vsub.s32 5, %v1618
      %v1620 = vrot.slane %v797, %v1619
      %1622 = vbcast.lane.b32.xlu0 %v1620, 256
      %v1623 = vpop.permute.xlu0 %1622
      %s1625 = sor.u32 256, 8
      %1626 = vbcast.lane.b32.xlu0 %v1620, %s1625
      %v1627 = vpop.permute.xlu0 %1626
      %v1628 = vlaneseq
      %v1629 = vshrl.u32 %v1628, 7
      %v1630 = vsub.s32 6, %v1629
      %v1631 = vrot.slane %v797, %v1630
      %1633 = vbcast.lane.b32.xlu0 %v1631, 256
      %v1634 = vpop.permute.xlu0 %1633
      %s1636 = sor.u32 256, 8
      %1637 = vbcast.lane.b32.xlu0 %v1631, %s1636
      %v1638 = vpop.permute.xlu0 %1637
      %v1639 = vlaneseq
      %v1640 = vshrl.u32 %v1639, 7
      %v1641 = vsub.s32 7, %v1640
      %v1642 = vrot.slane %v797, %v1641
      %1644 = vbcast.lane.b32.xlu0 %v1642, 256
      %v1645 = vpop.permute.xlu0 %1644
      %s1647 = sor.u32 256, 8
      %1648 = vbcast.lane.b32.xlu0 %v1642, %s1647
      %v1649 = vpop.permute.xlu0 %1648
      %v1656 = vcombine.high %v1116, %v1116
      %v1658 = vunpack.c.l.s4 1966171168
      %v1659 = vunpack.c.0.s8 %v1658
      %v1660 = vlaneseq
      %v1661 = vshrl.u32 %v1660, 7
      %v1662 = vsub.s32 %v1659, %v1661
      %v1663 = vrot.slane %v1116, %v1662
      %v1665 = vunpack.c.l.s4 1966171168
      %v1666 = vunpack.c.0.s8 %v1665
      %v1667 = vlaneseq
      %v1668 = vshrl.u32 %v1667, 7
      %v1669 = vsub.s32 %v1666, %v1668
      %v1670 = vrot.slane %v1656, %v1669
      %v1671 = vcombine.high %v1663, %v1663
      %v1672 = vcombine.high %v1670, %v1670
      %v1674 = vunpack.c.l.s4 1966171168
      %v1675 = vunpack.c.0.s8 %v1674
      %v1676 = vlaneseq
      %v1677 = vshrl.u32 %v1676, 7
      %v1678 = vsub.s32 %v1675, %v1677
      %v1679 = vrot.slane %v1663, %v1678
      %v1681 = vunpack.c.l.s4 1966171168
      %v1682 = vunpack.c.0.s8 %v1681
      %v1683 = vlaneseq
      %v1684 = vshrl.u32 %v1683, 7
      %v1685 = vsub.s32 %v1682, %v1684
      %v1686 = vrot.slane %v1670, %v1685
      %v1688 = vunpack.c.l.s4 1966171168
      %v1689 = vunpack.c.0.s8 %v1688
      %v1690 = vlaneseq
      %v1691 = vshrl.u32 %v1690, 7
      %v1692 = vsub.s32 %v1689, %v1691
      %v1693 = vrot.slane %v1671, %v1692
      %v1695 = vunpack.c.l.s4 1966171168
      %v1696 = vunpack.c.0.s8 %v1695
      %v1697 = vlaneseq
      %v1698 = vshrl.u32 %v1697, 7
      %v1699 = vsub.s32 %v1696, %v1698
      %v1700 = vrot.slane %v1672, %v1699
      %v1701 = vcombine.high %v1679, %v1679
      %v1702 = vcombine.high %v1686, %v1686
      %v1703 = vcombine.high %v1693, %v1693
      %v1704 = vcombine.high %v1700, %v1700
      %v1705 = vcombine.high %v1117, %v1117
      %v1707 = vunpack.c.l.s4 1966171168
      %v1708 = vunpack.c.0.s8 %v1707
      %v1709 = vlaneseq
      %v1710 = vshrl.u32 %v1709, 7
      %v1711 = vsub.s32 %v1708, %v1710
      %v1712 = vrot.slane %v1117, %v1711
      %v1714 = vunpack.c.l.s4 1966171168
      %v1715 = vunpack.c.0.s8 %v1714
      %v1716 = vlaneseq
      %v1717 = vshrl.u32 %v1716, 7
      %v1718 = vsub.s32 %v1715, %v1717
      %v1719 = vrot.slane %v1705, %v1718
      %v1720 = vcombine.high %v1712, %v1712
      %v1721 = vcombine.high %v1719, %v1719
      %v1723 = vunpack.c.l.s4 1966171168
      %v1724 = vunpack.c.0.s8 %v1723
      %v1725 = vlaneseq
      %v1726 = vshrl.u32 %v1725, 7
      %v1727 = vsub.s32 %v1724, %v1726
      %v1728 = vrot.slane %v1712, %v1727
      %v1730 = vunpack.c.l.s4 1966171168
      %v1731 = vunpack.c.0.s8 %v1730
      %v1732 = vlaneseq
      %v1733 = vshrl.u32 %v1732, 7
      %v1734 = vsub.s32 %v1731, %v1733
      %v1735 = vrot.slane %v1719, %v1734
      %v1737 = vunpack.c.l.s4 1966171168
      %v1738 = vunpack.c.0.s8 %v1737
      %v1739 = vlaneseq
      %v1740 = vshrl.u32 %v1739, 7
      %v1741 = vsub.s32 %v1738, %v1740
      %v1742 = vrot.slane %v1720, %v1741
      %v1744 = vunpack.c.l.s4 1966171168
      %v1745 = vunpack.c.0.s8 %v1744
      %v1746 = vlaneseq
      %v1747 = vshrl.u32 %v1746, 7
      %v1748 = vsub.s32 %v1745, %v1747
      %v1749 = vrot.slane %v1721, %v1748
      %v1750 = vcombine.high %v1728, %v1728
      %v1751 = vcombine.high %v1735, %v1735
      %v1752 = vcombine.high %v1742, %v1742
      %v1753 = vcombine.high %v1749, %v1749
      %v1754 = vcombine.high %v1118, %v1118
      %v1756 = vunpack.c.l.s4 1966171168
      %v1757 = vunpack.c.0.s8 %v1756
      %v1758 = vlaneseq
      %v1759 = vshrl.u32 %v1758, 7
      %v1760 = vsub.s32 %v1757, %v1759
      %v1761 = vrot.slane %v1118, %v1760
      %v1763 = vunpack.c.l.s4 1966171168
      %v1764 = vunpack.c.0.s8 %v1763
      %v1765 = vlaneseq
      %v1766 = vshrl.u32 %v1765, 7
      %v1767 = vsub.s32 %v1764, %v1766
      %v1768 = vrot.slane %v1754, %v1767
      %v1769 = vcombine.high %v1761, %v1761
      %v1770 = vcombine.high %v1768, %v1768
      %v1772 = vunpack.c.l.s4 1966171168
      %v1773 = vunpack.c.0.s8 %v1772
      %v1774 = vlaneseq
      %v1775 = vshrl.u32 %v1774, 7
      %v1776 = vsub.s32 %v1773, %v1775
      %v1777 = vrot.slane %v1761, %v1776
      %v1779 = vunpack.c.l.s4 1966171168
      %v1780 = vunpack.c.0.s8 %v1779
      %v1781 = vlaneseq
      %v1782 = vshrl.u32 %v1781, 7
      %v1783 = vsub.s32 %v1780, %v1782
      %v1784 = vrot.slane %v1768, %v1783
      %v1786 = vunpack.c.l.s4 1966171168
      %v1787 = vunpack.c.0.s8 %v1786
      %v1788 = vlaneseq
      %v1789 = vshrl.u32 %v1788, 7
      %v1790 = vsub.s32 %v1787, %v1789
      %v1791 = vrot.slane %v1769, %v1790
      %v1793 = vunpack.c.l.s4 1966171168
      %v1794 = vunpack.c.0.s8 %v1793
      %v1795 = vlaneseq
      %v1796 = vshrl.u32 %v1795, 7
      %v1797 = vsub.s32 %v1794, %v1796
      %v1798 = vrot.slane %v1770, %v1797
      %v1799 = vcombine.high %v1777, %v1777
      %v1800 = vcombine.high %v1784, %v1784
      %v1801 = vcombine.high %v1791, %v1791
      %v1802 = vcombine.high %v1798, %v1798
      %v1803 = vcombine.high %v1119, %v1119
      %v1805 = vunpack.c.l.s4 1966171168
      %v1806 = vunpack.c.0.s8 %v1805
      %v1807 = vlaneseq
      %v1808 = vshrl.u32 %v1807, 7
      %v1809 = vsub.s32 %v1806, %v1808
      %v1810 = vrot.slane %v1119, %v1809
      %v1812 = vunpack.c.l.s4 1966171168
      %v1813 = vunpack.c.0.s8 %v1812
      %v1814 = vlaneseq
      %v1815 = vshrl.u32 %v1814, 7
      %v1816 = vsub.s32 %v1813, %v1815
      %v1817 = vrot.slane %v1803, %v1816
      %v1818 = vcombine.high %v1810, %v1810
      %v1819 = vcombine.high %v1817, %v1817
      %v1821 = vunpack.c.l.s4 1966171168
      %v1822 = vunpack.c.0.s8 %v1821
      %v1823 = vlaneseq
      %v1824 = vshrl.u32 %v1823, 7
      %v1825 = vsub.s32 %v1822, %v1824
      %v1826 = vrot.slane %v1810, %v1825
      %v1828 = vunpack.c.l.s4 1966171168
      %v1829 = vunpack.c.0.s8 %v1828
      %v1830 = vlaneseq
      %v1831 = vshrl.u32 %v1830, 7
      %v1832 = vsub.s32 %v1829, %v1831
      %v1833 = vrot.slane %v1817, %v1832
      %v1835 = vunpack.c.l.s4 1966171168
      %v1836 = vunpack.c.0.s8 %v1835
      %v1837 = vlaneseq
      %v1838 = vshrl.u32 %v1837, 7
      %v1839 = vsub.s32 %v1836, %v1838
      %v1840 = vrot.slane %v1818, %v1839
      %v1842 = vunpack.c.l.s4 1966171168
      %v1843 = vunpack.c.0.s8 %v1842
      %v1844 = vlaneseq
      %v1845 = vshrl.u32 %v1844, 7
      %v1846 = vsub.s32 %v1843, %v1845
      %v1847 = vrot.slane %v1819, %v1846
      %v1848 = vcombine.high %v1826, %v1826
      %v1849 = vcombine.high %v1833, %v1833
      %v1850 = vcombine.high %v1840, %v1840
      %v1851 = vcombine.high %v1847, %v1847
      %v1852 = vcombine.high %v1120, %v1120
      %v1854 = vunpack.c.l.s4 1966171168
      %v1855 = vunpack.c.0.s8 %v1854
      %v1856 = vlaneseq
      %v1857 = vshrl.u32 %v1856, 7
      %v1858 = vsub.s32 %v1855, %v1857
      %v1859 = vrot.slane %v1120, %v1858
      %v1861 = vunpack.c.l.s4 1966171168
      %v1862 = vunpack.c.0.s8 %v1861
      %v1863 = vlaneseq
      %v1864 = vshrl.u32 %v1863, 7
      %v1865 = vsub.s32 %v1862, %v1864
      %v1866 = vrot.slane %v1852, %v1865
      %v1867 = vcombine.high %v1859, %v1859
      %v1868 = vcombine.high %v1866, %v1866
      %v1870 = vunpack.c.l.s4 1966171168
      %v1871 = vunpack.c.0.s8 %v1870
      %v1872 = vlaneseq
      %v1873 = vshrl.u32 %v1872, 7
      %v1874 = vsub.s32 %v1871, %v1873
      %v1875 = vrot.slane %v1859, %v1874
      %v1877 = vunpack.c.l.s4 1966171168
      %v1878 = vunpack.c.0.s8 %v1877
      %v1879 = vlaneseq
      %v1880 = vshrl.u32 %v1879, 7
      %v1881 = vsub.s32 %v1878, %v1880
      %v1882 = vrot.slane %v1866, %v1881
      %v1884 = vunpack.c.l.s4 1966171168
      %v1885 = vunpack.c.0.s8 %v1884
      %v1886 = vlaneseq
      %v1887 = vshrl.u32 %v1886, 7
      %v1888 = vsub.s32 %v1885, %v1887
      %v1889 = vrot.slane %v1867, %v1888
      %v1891 = vunpack.c.l.s4 1966171168
      %v1892 = vunpack.c.0.s8 %v1891
      %v1893 = vlaneseq
      %v1894 = vshrl.u32 %v1893, 7
      %v1895 = vsub.s32 %v1892, %v1894
      %v1896 = vrot.slane %v1868, %v1895
      %v1897 = vcombine.high %v1875, %v1875
      %v1898 = vcombine.high %v1882, %v1882
      %v1899 = vcombine.high %v1889, %v1889
      %v1900 = vcombine.high %v1896, %v1896
      %v1901 = vcombine.high %v1121, %v1121
      %v1903 = vunpack.c.l.s4 1966171168
      %v1904 = vunpack.c.0.s8 %v1903
      %v1905 = vlaneseq
      %v1906 = vshrl.u32 %v1905, 7
      %v1907 = vsub.s32 %v1904, %v1906
      %v1908 = vrot.slane %v1121, %v1907
      %v1910 = vunpack.c.l.s4 1966171168
      %v1911 = vunpack.c.0.s8 %v1910
      %v1912 = vlaneseq
      %v1913 = vshrl.u32 %v1912, 7
      %v1914 = vsub.s32 %v1911, %v1913
      %v1915 = vrot.slane %v1901, %v1914
      %v1916 = vcombine.high %v1908, %v1908
      %v1917 = vcombine.high %v1915, %v1915
      %v1919 = vunpack.c.l.s4 1966171168
      %v1920 = vunpack.c.0.s8 %v1919
      %v1921 = vlaneseq
      %v1922 = vshrl.u32 %v1921, 7
      %v1923 = vsub.s32 %v1920, %v1922
      %v1924 = vrot.slane %v1908, %v1923
      %v1926 = vunpack.c.l.s4 1966171168
      %v1927 = vunpack.c.0.s8 %v1926
      %v1928 = vlaneseq
      %v1929 = vshrl.u32 %v1928, 7
      %v1930 = vsub.s32 %v1927, %v1929
      %v1931 = vrot.slane %v1915, %v1930
      %v1933 = vunpack.c.l.s4 1966171168
      %v1934 = vunpack.c.0.s8 %v1933
      %v1935 = vlaneseq
      %v1936 = vshrl.u32 %v1935, 7
      %v1937 = vsub.s32 %v1934, %v1936
      %v1938 = vrot.slane %v1916, %v1937
      %v1940 = vunpack.c.l.s4 1966171168
      %v1941 = vunpack.c.0.s8 %v1940
      %v1942 = vlaneseq
      %v1943 = vshrl.u32 %v1942, 7
      %v1944 = vsub.s32 %v1941, %v1943
      %v1945 = vrot.slane %v1917, %v1944
      %v1946 = vcombine.high %v1924, %v1924
      %v1947 = vcombine.high %v1931, %v1931
      %v1948 = vcombine.high %v1938, %v1938
      %v1949 = vcombine.high %v1945, %v1945
      %v1950 = vlaneseq
      %v1951 = vshrl.u32 %v1950, 7
      %v1952 = vsub.s32 0, %v1951
      %v1953 = vrot.slane %v1679, %v1952
      %v1954 = vlaneseq
      %v1955 = vshrl.u32 %v1954, 7
      %v1956 = vsub.s32 0, %v1955
      %v1957 = vrot.slane %v1693, %v1956
      %v1958 = vlaneseq
      %v1959 = vshrl.u32 %v1958, 7
      %v1960 = vsub.s32 0, %v1959
      %v1961 = vrot.slane %v1701, %v1960
      %v1962 = vlaneseq
      %v1963 = vshrl.u32 %v1962, 7
      %v1964 = vsub.s32 0, %v1963
      %v1965 = vrot.slane %v1703, %v1964
      %v1966 = vlaneseq
      %v1967 = vshrl.u32 %v1966, 7
      %v1968 = vsub.s32 0, %v1967
      %v1969 = vrot.slane %v1686, %v1968
      %v1970 = vlaneseq
      %v1971 = vshrl.u32 %v1970, 7
      %v1972 = vsub.s32 0, %v1971
      %v1973 = vrot.slane %v1700, %v1972
      %v1974 = vlaneseq
      %v1975 = vshrl.u32 %v1974, 7
      %v1976 = vsub.s32 0, %v1975
      %v1977 = vrot.slane %v1702, %v1976
      %v1978 = vlaneseq
      %v1979 = vshrl.u32 %v1978, 7
      %v1980 = vsub.s32 0, %v1979
      %v1981 = vrot.slane %v1704, %v1980
      %v1982 = vlaneseq
      %v1983 = vshrl.u32 %v1982, 7
      %v1984 = vsub.s32 0, %v1983
      %v1985 = vrot.slane %v1728, %v1984
      %v1986 = vlaneseq
      %v1987 = vshrl.u32 %v1986, 7
      %v1988 = vsub.s32 0, %v1987
      %v1989 = vrot.slane %v1742, %v1988
      %v1990 = vlaneseq
      %v1991 = vshrl.u32 %v1990, 7
      %v1992 = vsub.s32 0, %v1991
      %v1993 = vrot.slane %v1750, %v1992
      %v1994 = vlaneseq
      %v1995 = vshrl.u32 %v1994, 7
      %v1996 = vsub.s32 0, %v1995
      %v1997 = vrot.slane %v1752, %v1996
      %v1998 = vlaneseq
      %v1999 = vshrl.u32 %v1998, 7
      %v2000 = vsub.s32 0, %v1999
      %v2001 = vrot.slane %v1735, %v2000
      %v2002 = vlaneseq
      %v2003 = vshrl.u32 %v2002, 7
      %v2004 = vsub.s32 0, %v2003
      %v2005 = vrot.slane %v1749, %v2004
      %v2006 = vlaneseq
      %v2007 = vshrl.u32 %v2006, 7
      %v2008 = vsub.s32 0, %v2007
      %v2009 = vrot.slane %v1751, %v2008
      %v2010 = vlaneseq
      %v2011 = vshrl.u32 %v2010, 7
      %v2012 = vsub.s32 0, %v2011
      %v2013 = vrot.slane %v1753, %v2012
      %v2014 = vlaneseq
      %v2015 = vshrl.u32 %v2014, 7
      %v2016 = vsub.s32 0, %v2015
      %v2017 = vrot.slane %v1777, %v2016
      %v2018 = vlaneseq
      %v2019 = vshrl.u32 %v2018, 7
      %v2020 = vsub.s32 0, %v2019
      %v2021 = vrot.slane %v1791, %v2020
      %v2022 = vlaneseq
      %v2023 = vshrl.u32 %v2022, 7
      %v2024 = vsub.s32 0, %v2023
      %v2025 = vrot.slane %v1799, %v2024
      %v2026 = vlaneseq
      %v2027 = vshrl.u32 %v2026, 7
      %v2028 = vsub.s32 0, %v2027
      %v2029 = vrot.slane %v1801, %v2028
      %v2030 = vlaneseq
      %v2031 = vshrl.u32 %v2030, 7
      %v2032 = vsub.s32 0, %v2031
      %v2033 = vrot.slane %v1784, %v2032
      %v2034 = vlaneseq
      %v2035 = vshrl.u32 %v2034, 7
      %v2036 = vsub.s32 0, %v2035
      %v2037 = vrot.slane %v1798, %v2036
      %v2038 = vlaneseq
      %v2039 = vshrl.u32 %v2038, 7
      %v2040 = vsub.s32 0, %v2039
      %v2041 = vrot.slane %v1800, %v2040
      %v2042 = vlaneseq
      %v2043 = vshrl.u32 %v2042, 7
      %v2044 = vsub.s32 0, %v2043
      %v2045 = vrot.slane %v1802, %v2044
      %v2046 = vlaneseq
      %v2047 = vshrl.u32 %v2046, 7
      %v2048 = vsub.s32 0, %v2047
      %v2049 = vrot.slane %v1826, %v2048
      %v2050 = vlaneseq
      %v2051 = vshrl.u32 %v2050, 7
      %v2052 = vsub.s32 0, %v2051
      %v2053 = vrot.slane %v1840, %v2052
      %v2054 = vlaneseq
      %v2055 = vshrl.u32 %v2054, 7
      %v2056 = vsub.s32 0, %v2055
      %v2057 = vrot.slane %v1848, %v2056
      %v2058 = vlaneseq
      %v2059 = vshrl.u32 %v2058, 7
      %v2060 = vsub.s32 0, %v2059
      %v2061 = vrot.slane %v1850, %v2060
      %v2062 = vlaneseq
      %v2063 = vshrl.u32 %v2062, 7
      %v2064 = vsub.s32 0, %v2063
      %v2065 = vrot.slane %v1833, %v2064
      %v2066 = vlaneseq
      %v2067 = vshrl.u32 %v2066, 7
      %v2068 = vsub.s32 0, %v2067
      %v2069 = vrot.slane %v1847, %v2068
      %v2070 = vlaneseq
      %v2071 = vshrl.u32 %v2070, 7
      %v2072 = vsub.s32 0, %v2071
      %v2073 = vrot.slane %v1849, %v2072
      %v2074 = vlaneseq
      %v2075 = vshrl.u32 %v2074, 7
      %v2076 = vsub.s32 0, %v2075
      %v2077 = vrot.slane %v1851, %v2076
      %v2078 = vlaneseq
      %v2079 = vshrl.u32 %v2078, 7
      %v2080 = vsub.s32 0, %v2079
      %v2081 = vrot.slane %v1875, %v2080
      %v2082 = vlaneseq
      %v2083 = vshrl.u32 %v2082, 7
      %v2084 = vsub.s32 0, %v2083
      %v2085 = vrot.slane %v1889, %v2084
      %v2086 = vlaneseq
      %v2087 = vshrl.u32 %v2086, 7
      %v2088 = vsub.s32 0, %v2087
      %v2089 = vrot.slane %v1897, %v2088
      %v2090 = vlaneseq
      %v2091 = vshrl.u32 %v2090, 7
      %v2092 = vsub.s32 0, %v2091
      %v2093 = vrot.slane %v1899, %v2092
      %v2094 = vlaneseq
      %v2095 = vshrl.u32 %v2094, 7
      %v2096 = vsub.s32 0, %v2095
      %v2097 = vrot.slane %v1882, %v2096
      %v2098 = vlaneseq
      %v2099 = vshrl.u32 %v2098, 7
      %v2100 = vsub.s32 0, %v2099
      %v2101 = vrot.slane %v1896, %v2100
      %v2102 = vlaneseq
      %v2103 = vshrl.u32 %v2102, 7
      %v2104 = vsub.s32 0, %v2103
      %v2105 = vrot.slane %v1898, %v2104
      %v2106 = vlaneseq
      %v2107 = vshrl.u32 %v2106, 7
      %v2108 = vsub.s32 0, %v2107
      %v2109 = vrot.slane %v1900, %v2108
      %v2110 = vlaneseq
      %v2111 = vshrl.u32 %v2110, 7
      %v2112 = vsub.s32 0, %v2111
      %v2113 = vrot.slane %v1924, %v2112
      %v2114 = vlaneseq
      %v2115 = vshrl.u32 %v2114, 7
      %v2116 = vsub.s32 0, %v2115
      %v2117 = vrot.slane %v1938, %v2116
      %v2118 = vlaneseq
      %v2119 = vshrl.u32 %v2118, 7
      %v2120 = vsub.s32 0, %v2119
      %v2121 = vrot.slane %v1946, %v2120
      %v2122 = vlaneseq
      %v2123 = vshrl.u32 %v2122, 7
      %v2124 = vsub.s32 0, %v2123
      %v2125 = vrot.slane %v1948, %v2124
      %v2126 = vlaneseq
      %v2127 = vshrl.u32 %v2126, 7
      %v2128 = vsub.s32 0, %v2127
      %v2129 = vrot.slane %v1931, %v2128
      %v2130 = vlaneseq
      %v2131 = vshrl.u32 %v2130, 7
      %v2132 = vsub.s32 0, %v2131
      %v2133 = vrot.slane %v1945, %v2132
      %v2134 = vlaneseq
      %v2135 = vshrl.u32 %v2134, 7
      %v2136 = vsub.s32 0, %v2135
      %v2137 = vrot.slane %v1947, %v2136
      %v2138 = vlaneseq
      %v2139 = vshrl.u32 %v2138, 7
      %v2140 = vsub.s32 0, %v2139
      %v2141 = vrot.slane %v1949, %v2140
      %v2190 = vmul.f32 %v1128, %v1953
      %v2191 = vmul.f32 %v1132, %v1953
      %v2192 = vmul.f32 %v1139, %v1957
      %v2193 = vmul.f32 %v1143, %v1957
      %v2194 = vmul.f32 %v1150, %v1961
      %v2195 = vmul.f32 %v1154, %v1961
      %v2196 = vmul.f32 %v1161, %v1965
      %v2197 = vmul.f32 %v1165, %v1965
      %v2198 = vmul.f32 %v1172, %v1969
      %v2199 = vmul.f32 %v1176, %v1969
      %v2200 = vmul.f32 %v1183, %v1973
      %v2201 = vmul.f32 %v1187, %v1973
      %v2202 = vmul.f32 %v1194, %v1977
      %v2203 = vmul.f32 %v1198, %v1977
      %v2204 = vmul.f32 %v1205, %v1981
      %v2205 = vmul.f32 %v1209, %v1981
      %v2206 = vmul.f32 %v1216, %v1985
      %v2207 = vmul.f32 %v1220, %v1985
      %v2208 = vmul.f32 %v1227, %v1989
      %v2209 = vmul.f32 %v1231, %v1989
      %v2210 = vmul.f32 %v1238, %v1993
      %v2211 = vmul.f32 %v1242, %v1993
      %v2212 = vmul.f32 %v1249, %v1997
      %v2213 = vmul.f32 %v1253, %v1997
      %v2214 = vmul.f32 %v1260, %v2001
      %v2215 = vmul.f32 %v1264, %v2001
      %v2216 = vmul.f32 %v1271, %v2005
      %v2217 = vmul.f32 %v1275, %v2005
      %v2218 = vmul.f32 %v1282, %v2009
      %v2219 = vmul.f32 %v1286, %v2009
      %v2220 = vmul.f32 %v1293, %v2013
      %v2221 = vmul.f32 %v1297, %v2013
      %v2222 = vmul.f32 %v1304, %v2017
      %v2223 = vmul.f32 %v1308, %v2017
      %v2224 = vmul.f32 %v1315, %v2021
      %v2225 = vmul.f32 %v1319, %v2021
      %v2226 = vmul.f32 %v1326, %v2025
      %v2227 = vmul.f32 %v1330, %v2025
      %v2228 = vmul.f32 %v1337, %v2029
      %v2229 = vmul.f32 %v1341, %v2029
      %v2230 = vmul.f32 %v1348, %v2033
      %v2231 = vmul.f32 %v1352, %v2033
      %v2232 = vmul.f32 %v1359, %v2037
      %v2233 = vmul.f32 %v1363, %v2037
      %v2234 = vmul.f32 %v1370, %v2041
      %v2235 = vmul.f32 %v1374, %v2041
      %v2236 = vmul.f32 %v1381, %v2045
      %v2237 = vmul.f32 %v1385, %v2045
      %v2238 = vmul.f32 %v1392, %v2049
      %v2239 = vmul.f32 %v1396, %v2049
      %v2240 = vmul.f32 %v1403, %v2053
      %v2241 = vmul.f32 %v1407, %v2053
      %v2242 = vmul.f32 %v1414, %v2057
      %v2243 = vmul.f32 %v1418, %v2057
      %v2244 = vmul.f32 %v1425, %v2061
      %v2245 = vmul.f32 %v1429, %v2061
      %v2246 = vmul.f32 %v1436, %v2065
      %v2247 = vmul.f32 %v1440, %v2065
      %v2248 = vmul.f32 %v1447, %v2069
      %v2249 = vmul.f32 %v1451, %v2069
      %v2250 = vmul.f32 %v1458, %v2073
      %v2251 = vmul.f32 %v1462, %v2073
      %v2252 = vmul.f32 %v1469, %v2077
      %v2253 = vmul.f32 %v1473, %v2077
      %v2254 = vmul.f32 %v1480, %v2081
      %v2255 = vmul.f32 %v1484, %v2081
      %v2256 = vmul.f32 %v1491, %v2085
      %v2257 = vmul.f32 %v1495, %v2085
      %v2258 = vmul.f32 %v1502, %v2089
      %v2259 = vmul.f32 %v1506, %v2089
      %v2260 = vmul.f32 %v1513, %v2093
      %v2261 = vmul.f32 %v1517, %v2093
      %v2262 = vmul.f32 %v1524, %v2097
      %v2263 = vmul.f32 %v1528, %v2097
      %v2264 = vmul.f32 %v1535, %v2101
      %v2265 = vmul.f32 %v1539, %v2101
      %v2266 = vmul.f32 %v1546, %v2105
      %v2267 = vmul.f32 %v1550, %v2105
      %v2268 = vmul.f32 %v1557, %v2109
      %v2269 = vmul.f32 %v1561, %v2109
      %v2270 = vmul.f32 %v1568, %v2113
      %v2271 = vmul.f32 %v1572, %v2113
      %v2272 = vmul.f32 %v1579, %v2117
      %v2273 = vmul.f32 %v1583, %v2117
      %v2274 = vmul.f32 %v1590, %v2121
      %v2275 = vmul.f32 %v1594, %v2121
      %v2276 = vmul.f32 %v1601, %v2125
      %v2277 = vmul.f32 %v1605, %v2125
      %v2278 = vmul.f32 %v1612, %v2129
      %v2279 = vmul.f32 %v1616, %v2129
      %v2280 = vmul.f32 %v1623, %v2133
      %v2281 = vmul.f32 %v1627, %v2133
      %v2282 = vmul.f32 %v1634, %v2137
      %v2283 = vmul.f32 %v1638, %v2137
      %v2284 = vmul.f32 %v1645, %v2141
      %v2285 = vmul.f32 %v1649, %v2141
      %v2286 = vcombine.low %v2190, %v2194
      %v2287 = vcombine.high %v2190, %v2194
      %v2289 = vunpack.c.l.s4 1983009808
      %v2290 = vunpack.c.0.s8 %v2289
      %v2291 = vlaneseq
      %v2292 = vshrl.u32 %v2291, 7
      %v2293 = vsub.s32 %v2290, %v2292
      %v2294 = vrot.slane %v2286, %v2293
      %v2296 = vunpack.c.l.s4 1983009808
      %v2297 = vunpack.c.0.s8 %v2296
      %v2298 = vlaneseq
      %v2299 = vshrl.u32 %v2298, 7
      %v2300 = vsub.s32 %v2297, %v2299
      %v2301 = vrot.slane %v2287, %v2300
      %v2302 = vcombine.low %v2192, %v2196
      %v2303 = vcombine.high %v2192, %v2196
      %v2305 = vunpack.c.l.s4 1983009808
      %v2306 = vunpack.c.0.s8 %v2305
      %v2307 = vlaneseq
      %v2308 = vshrl.u32 %v2307, 7
      %v2309 = vsub.s32 %v2306, %v2308
      %v2310 = vrot.slane %v2302, %v2309
      %v2312 = vunpack.c.l.s4 1983009808
      %v2313 = vunpack.c.0.s8 %v2312
      %v2314 = vlaneseq
      %v2315 = vshrl.u32 %v2314, 7
      %v2316 = vsub.s32 %v2313, %v2315
      %v2317 = vrot.slane %v2303, %v2316
      %v2318 = vcombine.low %v2198, %v2202
      %v2319 = vcombine.high %v2198, %v2202
      %v2321 = vunpack.c.l.s4 1983009808
      %v2322 = vunpack.c.0.s8 %v2321
      %v2323 = vlaneseq
      %v2324 = vshrl.u32 %v2323, 7
      %v2325 = vsub.s32 %v2322, %v2324
      %v2326 = vrot.slane %v2318, %v2325
      %v2328 = vunpack.c.l.s4 1983009808
      %v2329 = vunpack.c.0.s8 %v2328
      %v2330 = vlaneseq
      %v2331 = vshrl.u32 %v2330, 7
      %v2332 = vsub.s32 %v2329, %v2331
      %v2333 = vrot.slane %v2319, %v2332
      %v2334 = vcombine.low %v2200, %v2204
      %v2335 = vcombine.high %v2200, %v2204
      %v2337 = vunpack.c.l.s4 1983009808
      %v2338 = vunpack.c.0.s8 %v2337
      %v2339 = vlaneseq
      %v2340 = vshrl.u32 %v2339, 7
      %v2341 = vsub.s32 %v2338, %v2340
      %v2342 = vrot.slane %v2334, %v2341
      %v2344 = vunpack.c.l.s4 1983009808
      %v2345 = vunpack.c.0.s8 %v2344
      %v2346 = vlaneseq
      %v2347 = vshrl.u32 %v2346, 7
      %v2348 = vsub.s32 %v2345, %v2347
      %v2349 = vrot.slane %v2335, %v2348
      %v2350 = vcombine.low %v2294, %v2310
      %v2351 = vcombine.high %v2294, %v2310
      %v2353 = vunpack.c.l.s4 1934713408
      %v2354 = vunpack.c.0.s8 %v2353
      %v2355 = vlaneseq
      %v2356 = vshrl.u32 %v2355, 7
      %v2357 = vsub.s32 %v2354, %v2356
      %v2358 = vrot.slane %v2350, %v2357
      %v2360 = vunpack.c.l.s4 1934713408
      %v2361 = vunpack.c.0.s8 %v2360
      %v2362 = vlaneseq
      %v2363 = vshrl.u32 %v2362, 7
      %v2364 = vsub.s32 %v2361, %v2363
      %v2365 = vrot.slane %v2351, %v2364
      %v2366 = vcombine.low %v2301, %v2317
      %v2367 = vcombine.high %v2301, %v2317
      %v2369 = vunpack.c.l.s4 1934713408
      %v2370 = vunpack.c.0.s8 %v2369
      %v2371 = vlaneseq
      %v2372 = vshrl.u32 %v2371, 7
      %v2373 = vsub.s32 %v2370, %v2372
      %v2374 = vrot.slane %v2366, %v2373
      %v2376 = vunpack.c.l.s4 1934713408
      %v2377 = vunpack.c.0.s8 %v2376
      %v2378 = vlaneseq
      %v2379 = vshrl.u32 %v2378, 7
      %v2380 = vsub.s32 %v2377, %v2379
      %v2381 = vrot.slane %v2367, %v2380
      %v2382 = vcombine.low %v2326, %v2342
      %v2383 = vcombine.high %v2326, %v2342
      %v2385 = vunpack.c.l.s4 1934713408
      %v2386 = vunpack.c.0.s8 %v2385
      %v2387 = vlaneseq
      %v2388 = vshrl.u32 %v2387, 7
      %v2389 = vsub.s32 %v2386, %v2388
      %v2390 = vrot.slane %v2382, %v2389
      %v2392 = vunpack.c.l.s4 1934713408
      %v2393 = vunpack.c.0.s8 %v2392
      %v2394 = vlaneseq
      %v2395 = vshrl.u32 %v2394, 7
      %v2396 = vsub.s32 %v2393, %v2395
      %v2397 = vrot.slane %v2383, %v2396
      %v2398 = vcombine.low %v2333, %v2349
      %v2399 = vcombine.high %v2333, %v2349
      %v2401 = vunpack.c.l.s4 1934713408
      %v2402 = vunpack.c.0.s8 %v2401
      %v2403 = vlaneseq
      %v2404 = vshrl.u32 %v2403, 7
      %v2405 = vsub.s32 %v2402, %v2404
      %v2406 = vrot.slane %v2398, %v2405
      %v2408 = vunpack.c.l.s4 1934713408
      %v2409 = vunpack.c.0.s8 %v2408
      %v2410 = vlaneseq
      %v2411 = vshrl.u32 %v2410, 7
      %v2412 = vsub.s32 %v2409, %v2411
      %v2413 = vrot.slane %v2399, %v2412
      %v2414 = vcombine.low %v2358, %v2390
      %v2415 = vcombine.high %v2358, %v2390
      %v2416 = vcombine.low %v2365, %v2397
      %v2417 = vcombine.high %v2365, %v2397
      %v2418 = vcombine.low %v2374, %v2406
      %v2419 = vcombine.high %v2374, %v2406
      %v2420 = vcombine.low %v2381, %v2413
      %v2421 = vcombine.high %v2381, %v2413
      %v2422 = vcombine.low %v2206, %v2210
      %v2423 = vcombine.high %v2206, %v2210
      %v2425 = vunpack.c.l.s4 1983009808
      %v2426 = vunpack.c.0.s8 %v2425
      %v2427 = vlaneseq
      %v2428 = vshrl.u32 %v2427, 7
      %v2429 = vsub.s32 %v2426, %v2428
      %v2430 = vrot.slane %v2422, %v2429
      %v2432 = vunpack.c.l.s4 1983009808
      %v2433 = vunpack.c.0.s8 %v2432
      %v2434 = vlaneseq
      %v2435 = vshrl.u32 %v2434, 7
      %v2436 = vsub.s32 %v2433, %v2435
      %v2437 = vrot.slane %v2423, %v2436
      %v2438 = vcombine.low %v2208, %v2212
      %v2439 = vcombine.high %v2208, %v2212
      %v2441 = vunpack.c.l.s4 1983009808
      %v2442 = vunpack.c.0.s8 %v2441
      %v2443 = vlaneseq
      %v2444 = vshrl.u32 %v2443, 7
      %v2445 = vsub.s32 %v2442, %v2444
      %v2446 = vrot.slane %v2438, %v2445
      %v2448 = vunpack.c.l.s4 1983009808
      %v2449 = vunpack.c.0.s8 %v2448
      %v2450 = vlaneseq
      %v2451 = vshrl.u32 %v2450, 7
      %v2452 = vsub.s32 %v2449, %v2451
      %v2453 = vrot.slane %v2439, %v2452
      %v2454 = vcombine.low %v2214, %v2218
      %v2455 = vcombine.high %v2214, %v2218
      %v2457 = vunpack.c.l.s4 1983009808
      %v2458 = vunpack.c.0.s8 %v2457
      %v2459 = vlaneseq
      %v2460 = vshrl.u32 %v2459, 7
      %v2461 = vsub.s32 %v2458, %v2460
      %v2462 = vrot.slane %v2454, %v2461
      %v2464 = vunpack.c.l.s4 1983009808
      %v2465 = vunpack.c.0.s8 %v2464
      %v2466 = vlaneseq
      %v2467 = vshrl.u32 %v2466, 7
      %v2468 = vsub.s32 %v2465, %v2467
      %v2469 = vrot.slane %v2455, %v2468
      %v2470 = vcombine.low %v2216, %v2220
      %v2471 = vcombine.high %v2216, %v2220
      %v2473 = vunpack.c.l.s4 1983009808
      %v2474 = vunpack.c.0.s8 %v2473
      %v2475 = vlaneseq
      %v2476 = vshrl.u32 %v2475, 7
      %v2477 = vsub.s32 %v2474, %v2476
      %v2478 = vrot.slane %v2470, %v2477
      %v2480 = vunpack.c.l.s4 1983009808
      %v2481 = vunpack.c.0.s8 %v2480
      %v2482 = vlaneseq
      %v2483 = vshrl.u32 %v2482, 7
      %v2484 = vsub.s32 %v2481, %v2483
      %v2485 = vrot.slane %v2471, %v2484
      %v2486 = vcombine.low %v2430, %v2446
      %v2487 = vcombine.high %v2430, %v2446
      %v2489 = vunpack.c.l.s4 1934713408
      %v2490 = vunpack.c.0.s8 %v2489
      %v2491 = vlaneseq
      %v2492 = vshrl.u32 %v2491, 7
      %v2493 = vsub.s32 %v2490, %v2492
      %v2494 = vrot.slane %v2486, %v2493
      %v2496 = vunpack.c.l.s4 1934713408
      %v2497 = vunpack.c.0.s8 %v2496
      %v2498 = vlaneseq
      %v2499 = vshrl.u32 %v2498, 7
      %v2500 = vsub.s32 %v2497, %v2499
      %v2501 = vrot.slane %v2487, %v2500
      %v2502 = vcombine.low %v2437, %v2453
      %v2503 = vcombine.high %v2437, %v2453
      %v2505 = vunpack.c.l.s4 1934713408
      %v2506 = vunpack.c.0.s8 %v2505
      %v2507 = vlaneseq
      %v2508 = vshrl.u32 %v2507, 7
      %v2509 = vsub.s32 %v2506, %v2508
      %v2510 = vrot.slane %v2502, %v2509
      %v2512 = vunpack.c.l.s4 1934713408
      %v2513 = vunpack.c.0.s8 %v2512
      %v2514 = vlaneseq
      %v2515 = vshrl.u32 %v2514, 7
      %v2516 = vsub.s32 %v2513, %v2515
      %v2517 = vrot.slane %v2503, %v2516
      %v2518 = vcombine.low %v2462, %v2478
      %v2519 = vcombine.high %v2462, %v2478
      %v2521 = vunpack.c.l.s4 1934713408
      %v2522 = vunpack.c.0.s8 %v2521
      %v2523 = vlaneseq
      %v2524 = vshrl.u32 %v2523, 7
      %v2525 = vsub.s32 %v2522, %v2524
      %v2526 = vrot.slane %v2518, %v2525
      %v2528 = vunpack.c.l.s4 1934713408
      %v2529 = vunpack.c.0.s8 %v2528
      %v2530 = vlaneseq
      %v2531 = vshrl.u32 %v2530, 7
      %v2532 = vsub.s32 %v2529, %v2531
      %v2533 = vrot.slane %v2519, %v2532
      %v2534 = vcombine.low %v2469, %v2485
      %v2535 = vcombine.high %v2469, %v2485
      %v2537 = vunpack.c.l.s4 1934713408
      %v2538 = vunpack.c.0.s8 %v2537
      %v2539 = vlaneseq
      %v2540 = vshrl.u32 %v2539, 7
      %v2541 = vsub.s32 %v2538, %v2540
      %v2542 = vrot.slane %v2534, %v2541
      %v2544 = vunpack.c.l.s4 1934713408
      %v2545 = vunpack.c.0.s8 %v2544
      %v2546 = vlaneseq
      %v2547 = vshrl.u32 %v2546, 7
      %v2548 = vsub.s32 %v2545, %v2547
      %v2549 = vrot.slane %v2535, %v2548
      %v2550 = vcombine.low %v2494, %v2526
      %v2551 = vcombine.high %v2494, %v2526
      %v2552 = vcombine.low %v2501, %v2533
      %v2553 = vcombine.high %v2501, %v2533
      %v2554 = vcombine.low %v2510, %v2542
      %v2555 = vcombine.high %v2510, %v2542
      %v2556 = vcombine.low %v2517, %v2549
      %v2557 = vcombine.high %v2517, %v2549
      %v2558 = vcombine.low %v2222, %v2226
      %v2559 = vcombine.high %v2222, %v2226
      %v2561 = vunpack.c.l.s4 1983009808
      %v2562 = vunpack.c.0.s8 %v2561
      %v2563 = vlaneseq
      %v2564 = vshrl.u32 %v2563, 7
      %v2565 = vsub.s32 %v2562, %v2564
      %v2566 = vrot.slane %v2558, %v2565
      %v2568 = vunpack.c.l.s4 1983009808
      %v2569 = vunpack.c.0.s8 %v2568
      %v2570 = vlaneseq
      %v2571 = vshrl.u32 %v2570, 7
      %v2572 = vsub.s32 %v2569, %v2571
      %v2573 = vrot.slane %v2559, %v2572
      %v2574 = vcombine.low %v2224, %v2228
      %v2575 = vcombine.high %v2224, %v2228
      %v2577 = vunpack.c.l.s4 1983009808
      %v2578 = vunpack.c.0.s8 %v2577
      %v2579 = vlaneseq
      %v2580 = vshrl.u32 %v2579, 7
      %v2581 = vsub.s32 %v2578, %v2580
      %v2582 = vrot.slane %v2574, %v2581
      %v2584 = vunpack.c.l.s4 1983009808
      %v2585 = vunpack.c.0.s8 %v2584
      %v2586 = vlaneseq
      %v2587 = vshrl.u32 %v2586, 7
      %v2588 = vsub.s32 %v2585, %v2587
      %v2589 = vrot.slane %v2575, %v2588
      %v2590 = vcombine.low %v2230, %v2234
      %v2591 = vcombine.high %v2230, %v2234
      %v2593 = vunpack.c.l.s4 1983009808
      %v2594 = vunpack.c.0.s8 %v2593
      %v2595 = vlaneseq
      %v2596 = vshrl.u32 %v2595, 7
      %v2597 = vsub.s32 %v2594, %v2596
      %v2598 = vrot.slane %v2590, %v2597
      %v2600 = vunpack.c.l.s4 1983009808
      %v2601 = vunpack.c.0.s8 %v2600
      %v2602 = vlaneseq
      %v2603 = vshrl.u32 %v2602, 7
      %v2604 = vsub.s32 %v2601, %v2603
      %v2605 = vrot.slane %v2591, %v2604
      %v2606 = vcombine.low %v2232, %v2236
      %v2607 = vcombine.high %v2232, %v2236
      %v2609 = vunpack.c.l.s4 1983009808
      %v2610 = vunpack.c.0.s8 %v2609
      %v2611 = vlaneseq
      %v2612 = vshrl.u32 %v2611, 7
      %v2613 = vsub.s32 %v2610, %v2612
      %v2614 = vrot.slane %v2606, %v2613
      %v2616 = vunpack.c.l.s4 1983009808
      %v2617 = vunpack.c.0.s8 %v2616
      %v2618 = vlaneseq
      %v2619 = vshrl.u32 %v2618, 7
      %v2620 = vsub.s32 %v2617, %v2619
      %v2621 = vrot.slane %v2607, %v2620
      %v2622 = vcombine.low %v2566, %v2582
      %v2623 = vcombine.high %v2566, %v2582
      %v2625 = vunpack.c.l.s4 1934713408
      %v2626 = vunpack.c.0.s8 %v2625
      %v2627 = vlaneseq
      %v2628 = vshrl.u32 %v2627, 7
      %v2629 = vsub.s32 %v2626, %v2628
      %v2630 = vrot.slane %v2622, %v2629
      %v2632 = vunpack.c.l.s4 1934713408
      %v2633 = vunpack.c.0.s8 %v2632
      %v2634 = vlaneseq
      %v2635 = vshrl.u32 %v2634, 7
      %v2636 = vsub.s32 %v2633, %v2635
      %v2637 = vrot.slane %v2623, %v2636
      %v2638 = vcombine.low %v2573, %v2589
      %v2639 = vcombine.high %v2573, %v2589
      %v2641 = vunpack.c.l.s4 1934713408
      %v2642 = vunpack.c.0.s8 %v2641
      %v2643 = vlaneseq
      %v2644 = vshrl.u32 %v2643, 7
      %v2645 = vsub.s32 %v2642, %v2644
      %v2646 = vrot.slane %v2638, %v2645
      %v2648 = vunpack.c.l.s4 1934713408
      %v2649 = vunpack.c.0.s8 %v2648
      %v2650 = vlaneseq
      %v2651 = vshrl.u32 %v2650, 7
      %v2652 = vsub.s32 %v2649, %v2651
      %v2653 = vrot.slane %v2639, %v2652
      %v2654 = vcombine.low %v2598, %v2614
      %v2655 = vcombine.high %v2598, %v2614
      %v2657 = vunpack.c.l.s4 1934713408
      %v2658 = vunpack.c.0.s8 %v2657
      %v2659 = vlaneseq
      %v2660 = vshrl.u32 %v2659, 7
      %v2661 = vsub.s32 %v2658, %v2660
      %v2662 = vrot.slane %v2654, %v2661
      %v2664 = vunpack.c.l.s4 1934713408
      %v2665 = vunpack.c.0.s8 %v2664
      %v2666 = vlaneseq
      %v2667 = vshrl.u32 %v2666, 7
      %v2668 = vsub.s32 %v2665, %v2667
      %v2669 = vrot.slane %v2655, %v2668
      %v2670 = vcombine.low %v2605, %v2621
      %v2671 = vcombine.high %v2605, %v2621
      %v2673 = vunpack.c.l.s4 1934713408
      %v2674 = vunpack.c.0.s8 %v2673
      %v2675 = vlaneseq
      %v2676 = vshrl.u32 %v2675, 7
      %v2677 = vsub.s32 %v2674, %v2676
      %v2678 = vrot.slane %v2670, %v2677
      %v2680 = vunpack.c.l.s4 1934713408
      %v2681 = vunpack.c.0.s8 %v2680
      %v2682 = vlaneseq
      %v2683 = vshrl.u32 %v2682, 7
      %v2684 = vsub.s32 %v2681, %v2683
      %v2685 = vrot.slane %v2671, %v2684
      %v2686 = vcombine.low %v2630, %v2662
      %v2687 = vcombine.high %v2630, %v2662
      %v2688 = vcombine.low %v2637, %v2669
      %v2689 = vcombine.high %v2637, %v2669
      %v2690 = vcombine.low %v2646, %v2678
      %v2691 = vcombine.high %v2646, %v2678
      %v2692 = vcombine.low %v2653, %v2685
      %v2693 = vcombine.high %v2653, %v2685
      %v2694 = vcombine.low %v2238, %v2242
      %v2695 = vcombine.high %v2238, %v2242
      %v2697 = vunpack.c.l.s4 1983009808
      %v2698 = vunpack.c.0.s8 %v2697
      %v2699 = vlaneseq
      %v2700 = vshrl.u32 %v2699, 7
      %v2701 = vsub.s32 %v2698, %v2700
      %v2702 = vrot.slane %v2694, %v2701
      %v2704 = vunpack.c.l.s4 1983009808
      %v2705 = vunpack.c.0.s8 %v2704
      %v2706 = vlaneseq
      %v2707 = vshrl.u32 %v2706, 7
      %v2708 = vsub.s32 %v2705, %v2707
      %v2709 = vrot.slane %v2695, %v2708
      %v2710 = vcombine.low %v2240, %v2244
      %v2711 = vcombine.high %v2240, %v2244
      %v2713 = vunpack.c.l.s4 1983009808
      %v2714 = vunpack.c.0.s8 %v2713
      %v2715 = vlaneseq
      %v2716 = vshrl.u32 %v2715, 7
      %v2717 = vsub.s32 %v2714, %v2716
      %v2718 = vrot.slane %v2710, %v2717
      %v2720 = vunpack.c.l.s4 1983009808
      %v2721 = vunpack.c.0.s8 %v2720
      %v2722 = vlaneseq
      %v2723 = vshrl.u32 %v2722, 7
      %v2724 = vsub.s32 %v2721, %v2723
      %v2725 = vrot.slane %v2711, %v2724
      %v2726 = vcombine.low %v2246, %v2250
      %v2727 = vcombine.high %v2246, %v2250
      %v2729 = vunpack.c.l.s4 1983009808
      %v2730 = vunpack.c.0.s8 %v2729
      %v2731 = vlaneseq
      %v2732 = vshrl.u32 %v2731, 7
      %v2733 = vsub.s32 %v2730, %v2732
      %v2734 = vrot.slane %v2726, %v2733
      %v2736 = vunpack.c.l.s4 1983009808
      %v2737 = vunpack.c.0.s8 %v2736
      %v2738 = vlaneseq
      %v2739 = vshrl.u32 %v2738, 7
      %v2740 = vsub.s32 %v2737, %v2739
      %v2741 = vrot.slane %v2727, %v2740
      %v2742 = vcombine.low %v2248, %v2252
      %v2743 = vcombine.high %v2248, %v2252
      %v2745 = vunpack.c.l.s4 1983009808
      %v2746 = vunpack.c.0.s8 %v2745
      %v2747 = vlaneseq
      %v2748 = vshrl.u32 %v2747, 7
      %v2749 = vsub.s32 %v2746, %v2748
      %v2750 = vrot.slane %v2742, %v2749
      %v2752 = vunpack.c.l.s4 1983009808
      %v2753 = vunpack.c.0.s8 %v2752
      %v2754 = vlaneseq
      %v2755 = vshrl.u32 %v2754, 7
      %v2756 = vsub.s32 %v2753, %v2755
      %v2757 = vrot.slane %v2743, %v2756
      %v2758 = vcombine.low %v2702, %v2718
      %v2759 = vcombine.high %v2702, %v2718
      %v2761 = vunpack.c.l.s4 1934713408
      %v2762 = vunpack.c.0.s8 %v2761
      %v2763 = vlaneseq
      %v2764 = vshrl.u32 %v2763, 7
      %v2765 = vsub.s32 %v2762, %v2764
      %v2766 = vrot.slane %v2758, %v2765
      %v2768 = vunpack.c.l.s4 1934713408
      %v2769 = vunpack.c.0.s8 %v2768
      %v2770 = vlaneseq
      %v2771 = vshrl.u32 %v2770, 7
      %v2772 = vsub.s32 %v2769, %v2771
      %v2773 = vrot.slane %v2759, %v2772
      %v2774 = vcombine.low %v2709, %v2725
      %v2775 = vcombine.high %v2709, %v2725
      %v2777 = vunpack.c.l.s4 1934713408
      %v2778 = vunpack.c.0.s8 %v2777
      %v2779 = vlaneseq
      %v2780 = vshrl.u32 %v2779, 7
      %v2781 = vsub.s32 %v2778, %v2780
      %v2782 = vrot.slane %v2774, %v2781
      %v2784 = vunpack.c.l.s4 1934713408
      %v2785 = vunpack.c.0.s8 %v2784
      %v2786 = vlaneseq
      %v2787 = vshrl.u32 %v2786, 7
      %v2788 = vsub.s32 %v2785, %v2787
      %v2789 = vrot.slane %v2775, %v2788
      %v2790 = vcombine.low %v2734, %v2750
      %v2791 = vcombine.high %v2734, %v2750
      %v2793 = vunpack.c.l.s4 1934713408
      %v2794 = vunpack.c.0.s8 %v2793
      %v2795 = vlaneseq
      %v2796 = vshrl.u32 %v2795, 7
      %v2797 = vsub.s32 %v2794, %v2796
      %v2798 = vrot.slane %v2790, %v2797
      %v2800 = vunpack.c.l.s4 1934713408
      %v2801 = vunpack.c.0.s8 %v2800
      %v2802 = vlaneseq
      %v2803 = vshrl.u32 %v2802, 7
      %v2804 = vsub.s32 %v2801, %v2803
      %v2805 = vrot.slane %v2791, %v2804
      %v2806 = vcombine.low %v2741, %v2757
      %v2807 = vcombine.high %v2741, %v2757
      %v2809 = vunpack.c.l.s4 1934713408
      %v2810 = vunpack.c.0.s8 %v2809
      %v2811 = vlaneseq
      %v2812 = vshrl.u32 %v2811, 7
      %v2813 = vsub.s32 %v2810, %v2812
      %v2814 = vrot.slane %v2806, %v2813
      %v2816 = vunpack.c.l.s4 1934713408
      %v2817 = vunpack.c.0.s8 %v2816
      %v2818 = vlaneseq
      %v2819 = vshrl.u32 %v2818, 7
      %v2820 = vsub.s32 %v2817, %v2819
      %v2821 = vrot.slane %v2807, %v2820
      %v2822 = vcombine.low %v2766, %v2798
      %v2823 = vcombine.high %v2766, %v2798
      %v2824 = vcombine.low %v2773, %v2805
      %v2825 = vcombine.high %v2773, %v2805
      %v2826 = vcombine.low %v2782, %v2814
      %v2827 = vcombine.high %v2782, %v2814
      %v2828 = vcombine.low %v2789, %v2821
      %v2829 = vcombine.high %v2789, %v2821
      %v2830 = vcombine.low %v2254, %v2258
      %v2831 = vcombine.high %v2254, %v2258
      %v2833 = vunpack.c.l.s4 1983009808
      %v2834 = vunpack.c.0.s8 %v2833
      %v2835 = vlaneseq
      %v2836 = vshrl.u32 %v2835, 7
      %v2837 = vsub.s32 %v2834, %v2836
      %v2838 = vrot.slane %v2830, %v2837
      %v2840 = vunpack.c.l.s4 1983009808
      %v2841 = vunpack.c.0.s8 %v2840
      %v2842 = vlaneseq
      %v2843 = vshrl.u32 %v2842, 7
      %v2844 = vsub.s32 %v2841, %v2843
      %v2845 = vrot.slane %v2831, %v2844
      %v2846 = vcombine.low %v2256, %v2260
      %v2847 = vcombine.high %v2256, %v2260
      %v2849 = vunpack.c.l.s4 1983009808
      %v2850 = vunpack.c.0.s8 %v2849
      %v2851 = vlaneseq
      %v2852 = vshrl.u32 %v2851, 7
      %v2853 = vsub.s32 %v2850, %v2852
      %v2854 = vrot.slane %v2846, %v2853
      %v2856 = vunpack.c.l.s4 1983009808
      %v2857 = vunpack.c.0.s8 %v2856
      %v2858 = vlaneseq
      %v2859 = vshrl.u32 %v2858, 7
      %v2860 = vsub.s32 %v2857, %v2859
      %v2861 = vrot.slane %v2847, %v2860
      %v2862 = vcombine.low %v2262, %v2266
      %v2863 = vcombine.high %v2262, %v2266
      %v2865 = vunpack.c.l.s4 1983009808
      %v2866 = vunpack.c.0.s8 %v2865
      %v2867 = vlaneseq
      %v2868 = vshrl.u32 %v2867, 7
      %v2869 = vsub.s32 %v2866, %v2868
      %v2870 = vrot.slane %v2862, %v2869
      %v2872 = vunpack.c.l.s4 1983009808
      %v2873 = vunpack.c.0.s8 %v2872
      %v2874 = vlaneseq
      %v2875 = vshrl.u32 %v2874, 7
      %v2876 = vsub.s32 %v2873, %v2875
      %v2877 = vrot.slane %v2863, %v2876
      %v2878 = vcombine.low %v2264, %v2268
      %v2879 = vcombine.high %v2264, %v2268
      %v2881 = vunpack.c.l.s4 1983009808
      %v2882 = vunpack.c.0.s8 %v2881
      %v2883 = vlaneseq
      %v2884 = vshrl.u32 %v2883, 7
      %v2885 = vsub.s32 %v2882, %v2884
      %v2886 = vrot.slane %v2878, %v2885
      %v2888 = vunpack.c.l.s4 1983009808
      %v2889 = vunpack.c.0.s8 %v2888
      %v2890 = vlaneseq
      %v2891 = vshrl.u32 %v2890, 7
      %v2892 = vsub.s32 %v2889, %v2891
      %v2893 = vrot.slane %v2879, %v2892
      %v2894 = vcombine.low %v2838, %v2854
      %v2895 = vcombine.high %v2838, %v2854
      %v2897 = vunpack.c.l.s4 1934713408
      %v2898 = vunpack.c.0.s8 %v2897
      %v2899 = vlaneseq
      %v2900 = vshrl.u32 %v2899, 7
      %v2901 = vsub.s32 %v2898, %v2900
      %v2902 = vrot.slane %v2894, %v2901
      %v2904 = vunpack.c.l.s4 1934713408
      %v2905 = vunpack.c.0.s8 %v2904
      %v2906 = vlaneseq
      %v2907 = vshrl.u32 %v2906, 7
      %v2908 = vsub.s32 %v2905, %v2907
      %v2909 = vrot.slane %v2895, %v2908
      %v2910 = vcombine.low %v2845, %v2861
      %v2911 = vcombine.high %v2845, %v2861
      %v2913 = vunpack.c.l.s4 1934713408
      %v2914 = vunpack.c.0.s8 %v2913
      %v2915 = vlaneseq
      %v2916 = vshrl.u32 %v2915, 7
      %v2917 = vsub.s32 %v2914, %v2916
      %v2918 = vrot.slane %v2910, %v2917
      %v2920 = vunpack.c.l.s4 1934713408
      %v2921 = vunpack.c.0.s8 %v2920
      %v2922 = vlaneseq
      %v2923 = vshrl.u32 %v2922, 7
      %v2924 = vsub.s32 %v2921, %v2923
      %v2925 = vrot.slane %v2911, %v2924
      %v2926 = vcombine.low %v2870, %v2886
      %v2927 = vcombine.high %v2870, %v2886
      %v2929 = vunpack.c.l.s4 1934713408
      %v2930 = vunpack.c.0.s8 %v2929
      %v2931 = vlaneseq
      %v2932 = vshrl.u32 %v2931, 7
      %v2933 = vsub.s32 %v2930, %v2932
      %v2934 = vrot.slane %v2926, %v2933
      %v2936 = vunpack.c.l.s4 1934713408
      %v2937 = vunpack.c.0.s8 %v2936
      %v2938 = vlaneseq
      %v2939 = vshrl.u32 %v2938, 7
      %v2940 = vsub.s32 %v2937, %v2939
      %v2941 = vrot.slane %v2927, %v2940
      %v2942 = vcombine.low %v2877, %v2893
      %v2943 = vcombine.high %v2877, %v2893
      %v2945 = vunpack.c.l.s4 1934713408
      %v2946 = vunpack.c.0.s8 %v2945
      %v2947 = vlaneseq
      %v2948 = vshrl.u32 %v2947, 7
      %v2949 = vsub.s32 %v2946, %v2948
      %v2950 = vrot.slane %v2942, %v2949
      %v2952 = vunpack.c.l.s4 1934713408
      %v2953 = vunpack.c.0.s8 %v2952
      %v2954 = vlaneseq
      %v2955 = vshrl.u32 %v2954, 7
      %v2956 = vsub.s32 %v2953, %v2955
      %v2957 = vrot.slane %v2943, %v2956
      %v2958 = vcombine.low %v2902, %v2934
      %v2959 = vcombine.high %v2902, %v2934
      %v2960 = vcombine.low %v2909, %v2941
      %v2961 = vcombine.high %v2909, %v2941
      %v2962 = vcombine.low %v2918, %v2950
      %v2963 = vcombine.high %v2918, %v2950
      %v2964 = vcombine.low %v2925, %v2957
      %v2965 = vcombine.high %v2925, %v2957
      %v2966 = vcombine.low %v2270, %v2274
      %v2967 = vcombine.high %v2270, %v2274
      %v2969 = vunpack.c.l.s4 1983009808
      %v2970 = vunpack.c.0.s8 %v2969
      %v2971 = vlaneseq
      %v2972 = vshrl.u32 %v2971, 7
      %v2973 = vsub.s32 %v2970, %v2972
      %v2974 = vrot.slane %v2966, %v2973
      %v2976 = vunpack.c.l.s4 1983009808
      %v2977 = vunpack.c.0.s8 %v2976
      %v2978 = vlaneseq
      %v2979 = vshrl.u32 %v2978, 7
      %v2980 = vsub.s32 %v2977, %v2979
      %v2981 = vrot.slane %v2967, %v2980
      %v2982 = vcombine.low %v2272, %v2276
      %v2983 = vcombine.high %v2272, %v2276
      %v2985 = vunpack.c.l.s4 1983009808
      %v2986 = vunpack.c.0.s8 %v2985
      %v2987 = vlaneseq
      %v2988 = vshrl.u32 %v2987, 7
      %v2989 = vsub.s32 %v2986, %v2988
      %v2990 = vrot.slane %v2982, %v2989
      %v2992 = vunpack.c.l.s4 1983009808
      %v2993 = vunpack.c.0.s8 %v2992
      %v2994 = vlaneseq
      %v2995 = vshrl.u32 %v2994, 7
      %v2996 = vsub.s32 %v2993, %v2995
      %v2997 = vrot.slane %v2983, %v2996
      %v2998 = vcombine.low %v2278, %v2282
      %v2999 = vcombine.high %v2278, %v2282
      %v3001 = vunpack.c.l.s4 1983009808
      %v3002 = vunpack.c.0.s8 %v3001
      %v3003 = vlaneseq
      %v3004 = vshrl.u32 %v3003, 7
      %v3005 = vsub.s32 %v3002, %v3004
      %v3006 = vrot.slane %v2998, %v3005
      %v3008 = vunpack.c.l.s4 1983009808
      %v3009 = vunpack.c.0.s8 %v3008
      %v3010 = vlaneseq
      %v3011 = vshrl.u32 %v3010, 7
      %v3012 = vsub.s32 %v3009, %v3011
      %v3013 = vrot.slane %v2999, %v3012
      %v3014 = vcombine.low %v2280, %v2284
      %v3015 = vcombine.high %v2280, %v2284
      %v3017 = vunpack.c.l.s4 1983009808
      %v3018 = vunpack.c.0.s8 %v3017
      %v3019 = vlaneseq
      %v3020 = vshrl.u32 %v3019, 7
      %v3021 = vsub.s32 %v3018, %v3020
      %v3022 = vrot.slane %v3014, %v3021
      %v3024 = vunpack.c.l.s4 1983009808
      %v3025 = vunpack.c.0.s8 %v3024
      %v3026 = vlaneseq
      %v3027 = vshrl.u32 %v3026, 7
      %v3028 = vsub.s32 %v3025, %v3027
      %v3029 = vrot.slane %v3015, %v3028
      %v3030 = vcombine.low %v2974, %v2990
      %v3031 = vcombine.high %v2974, %v2990
      %v3033 = vunpack.c.l.s4 1934713408
      %v3034 = vunpack.c.0.s8 %v3033
      %v3035 = vlaneseq
      %v3036 = vshrl.u32 %v3035, 7
      %v3037 = vsub.s32 %v3034, %v3036
      %v3038 = vrot.slane %v3030, %v3037
      %v3040 = vunpack.c.l.s4 1934713408
      %v3041 = vunpack.c.0.s8 %v3040
      %v3042 = vlaneseq
      %v3043 = vshrl.u32 %v3042, 7
      %v3044 = vsub.s32 %v3041, %v3043
      %v3045 = vrot.slane %v3031, %v3044
      %v3046 = vcombine.low %v2981, %v2997
      %v3047 = vcombine.high %v2981, %v2997
      %v3049 = vunpack.c.l.s4 1934713408
      %v3050 = vunpack.c.0.s8 %v3049
      %v3051 = vlaneseq
      %v3052 = vshrl.u32 %v3051, 7
      %v3053 = vsub.s32 %v3050, %v3052
      %v3054 = vrot.slane %v3046, %v3053
      %v3056 = vunpack.c.l.s4 1934713408
      %v3057 = vunpack.c.0.s8 %v3056
      %v3058 = vlaneseq
      %v3059 = vshrl.u32 %v3058, 7
      %v3060 = vsub.s32 %v3057, %v3059
      %v3061 = vrot.slane %v3047, %v3060
      %v3062 = vcombine.low %v3006, %v3022
      %v3063 = vcombine.high %v3006, %v3022
      %v3065 = vunpack.c.l.s4 1934713408
      %v3066 = vunpack.c.0.s8 %v3065
      %v3067 = vlaneseq
      %v3068 = vshrl.u32 %v3067, 7
      %v3069 = vsub.s32 %v3066, %v3068
      %v3070 = vrot.slane %v3062, %v3069
      %v3072 = vunpack.c.l.s4 1934713408
      %v3073 = vunpack.c.0.s8 %v3072
      %v3074 = vlaneseq
      %v3075 = vshrl.u32 %v3074, 7
      %v3076 = vsub.s32 %v3073, %v3075
      %v3077 = vrot.slane %v3063, %v3076
      %v3078 = vcombine.low %v3013, %v3029
      %v3079 = vcombine.high %v3013, %v3029
      %v3081 = vunpack.c.l.s4 1934713408
      %v3082 = vunpack.c.0.s8 %v3081
      %v3083 = vlaneseq
      %v3084 = vshrl.u32 %v3083, 7
      %v3085 = vsub.s32 %v3082, %v3084
      %v3086 = vrot.slane %v3078, %v3085
      %v3088 = vunpack.c.l.s4 1934713408
      %v3089 = vunpack.c.0.s8 %v3088
      %v3090 = vlaneseq
      %v3091 = vshrl.u32 %v3090, 7
      %v3092 = vsub.s32 %v3089, %v3091
      %v3093 = vrot.slane %v3079, %v3092
      %v3094 = vcombine.low %v3038, %v3070
      %v3095 = vcombine.high %v3038, %v3070
      %v3096 = vcombine.low %v3045, %v3077
      %v3097 = vcombine.high %v3045, %v3077
      %v3098 = vcombine.low %v3054, %v3086
      %v3099 = vcombine.high %v3054, %v3086
      %v3100 = vcombine.low %v3061, %v3093
      %v3101 = vcombine.high %v3061, %v3093
      %v3102 = vcombine.low %v2191, %v2195
      %v3103 = vcombine.high %v2191, %v2195
      %v3105 = vunpack.c.l.s4 1983009808
      %v3106 = vunpack.c.0.s8 %v3105
      %v3107 = vlaneseq
      %v3108 = vshrl.u32 %v3107, 7
      %v3109 = vsub.s32 %v3106, %v3108
      %v3110 = vrot.slane %v3102, %v3109
      %v3112 = vunpack.c.l.s4 1983009808
      %v3113 = vunpack.c.0.s8 %v3112
      %v3114 = vlaneseq
      %v3115 = vshrl.u32 %v3114, 7
      %v3116 = vsub.s32 %v3113, %v3115
      %v3117 = vrot.slane %v3103, %v3116
      %v3118 = vcombine.low %v2193, %v2197
      %v3119 = vcombine.high %v2193, %v2197
      %v3121 = vunpack.c.l.s4 1983009808
      %v3122 = vunpack.c.0.s8 %v3121
      %v3123 = vlaneseq
      %v3124 = vshrl.u32 %v3123, 7
      %v3125 = vsub.s32 %v3122, %v3124
      %v3126 = vrot.slane %v3118, %v3125
      %v3128 = vunpack.c.l.s4 1983009808
      %v3129 = vunpack.c.0.s8 %v3128
      %v3130 = vlaneseq
      %v3131 = vshrl.u32 %v3130, 7
      %v3132 = vsub.s32 %v3129, %v3131
      %v3133 = vrot.slane %v3119, %v3132
      %v3134 = vcombine.low %v2199, %v2203
      %v3135 = vcombine.high %v2199, %v2203
      %v3137 = vunpack.c.l.s4 1983009808
      %v3138 = vunpack.c.0.s8 %v3137
      %v3139 = vlaneseq
      %v3140 = vshrl.u32 %v3139, 7
      %v3141 = vsub.s32 %v3138, %v3140
      %v3142 = vrot.slane %v3134, %v3141
      %v3144 = vunpack.c.l.s4 1983009808
      %v3145 = vunpack.c.0.s8 %v3144
      %v3146 = vlaneseq
      %v3147 = vshrl.u32 %v3146, 7
      %v3148 = vsub.s32 %v3145, %v3147
      %v3149 = vrot.slane %v3135, %v3148
      %v3150 = vcombine.low %v2201, %v2205
      %v3151 = vcombine.high %v2201, %v2205
      %v3153 = vunpack.c.l.s4 1983009808
      %v3154 = vunpack.c.0.s8 %v3153
      %v3155 = vlaneseq
      %v3156 = vshrl.u32 %v3155, 7
      %v3157 = vsub.s32 %v3154, %v3156
      %v3158 = vrot.slane %v3150, %v3157
      %v3160 = vunpack.c.l.s4 1983009808
      %v3161 = vunpack.c.0.s8 %v3160
      %v3162 = vlaneseq
      %v3163 = vshrl.u32 %v3162, 7
      %v3164 = vsub.s32 %v3161, %v3163
      %v3165 = vrot.slane %v3151, %v3164
      %v3166 = vcombine.low %v3110, %v3126
      %v3167 = vcombine.high %v3110, %v3126
      %v3169 = vunpack.c.l.s4 1934713408
      %v3170 = vunpack.c.0.s8 %v3169
      %v3171 = vlaneseq
      %v3172 = vshrl.u32 %v3171, 7
      %v3173 = vsub.s32 %v3170, %v3172
      %v3174 = vrot.slane %v3166, %v3173
      %v3176 = vunpack.c.l.s4 1934713408
      %v3177 = vunpack.c.0.s8 %v3176
      %v3178 = vlaneseq
      %v3179 = vshrl.u32 %v3178, 7
      %v3180 = vsub.s32 %v3177, %v3179
      %v3181 = vrot.slane %v3167, %v3180
      %v3182 = vcombine.low %v3117, %v3133
      %v3183 = vcombine.high %v3117, %v3133
      %v3185 = vunpack.c.l.s4 1934713408
      %v3186 = vunpack.c.0.s8 %v3185
      %v3187 = vlaneseq
      %v3188 = vshrl.u32 %v3187, 7
      %v3189 = vsub.s32 %v3186, %v3188
      %v3190 = vrot.slane %v3182, %v3189
      %v3192 = vunpack.c.l.s4 1934713408
      %v3193 = vunpack.c.0.s8 %v3192
      %v3194 = vlaneseq
      %v3195 = vshrl.u32 %v3194, 7
      %v3196 = vsub.s32 %v3193, %v3195
      %v3197 = vrot.slane %v3183, %v3196
      %v3198 = vcombine.low %v3142, %v3158
      %v3199 = vcombine.high %v3142, %v3158
      %v3201 = vunpack.c.l.s4 1934713408
      %v3202 = vunpack.c.0.s8 %v3201
      %v3203 = vlaneseq
      %v3204 = vshrl.u32 %v3203, 7
      %v3205 = vsub.s32 %v3202, %v3204
      %v3206 = vrot.slane %v3198, %v3205
      %v3208 = vunpack.c.l.s4 1934713408
      %v3209 = vunpack.c.0.s8 %v3208
      %v3210 = vlaneseq
      %v3211 = vshrl.u32 %v3210, 7
      %v3212 = vsub.s32 %v3209, %v3211
      %v3213 = vrot.slane %v3199, %v3212
      %v3214 = vcombine.low %v3149, %v3165
      %v3215 = vcombine.high %v3149, %v3165
      %v3217 = vunpack.c.l.s4 1934713408
      %v3218 = vunpack.c.0.s8 %v3217
      %v3219 = vlaneseq
      %v3220 = vshrl.u32 %v3219, 7
      %v3221 = vsub.s32 %v3218, %v3220
      %v3222 = vrot.slane %v3214, %v3221
      %v3224 = vunpack.c.l.s4 1934713408
      %v3225 = vunpack.c.0.s8 %v3224
      %v3226 = vlaneseq
      %v3227 = vshrl.u32 %v3226, 7
      %v3228 = vsub.s32 %v3225, %v3227
      %v3229 = vrot.slane %v3215, %v3228
      %v3230 = vcombine.low %v3174, %v3206
      %v3231 = vcombine.high %v3174, %v3206
      %v3232 = vcombine.low %v3181, %v3213
      %v3233 = vcombine.high %v3181, %v3213
      %v3234 = vcombine.low %v3190, %v3222
      %v3235 = vcombine.high %v3190, %v3222
      %v3236 = vcombine.low %v3197, %v3229
      %v3237 = vcombine.high %v3197, %v3229
      %v3238 = vcombine.low %v2207, %v2211
      %v3239 = vcombine.high %v2207, %v2211
      %v3241 = vunpack.c.l.s4 1983009808
      %v3242 = vunpack.c.0.s8 %v3241
      %v3243 = vlaneseq
      %v3244 = vshrl.u32 %v3243, 7
      %v3245 = vsub.s32 %v3242, %v3244
      %v3246 = vrot.slane %v3238, %v3245
      %v3248 = vunpack.c.l.s4 1983009808
      %v3249 = vunpack.c.0.s8 %v3248
      %v3250 = vlaneseq
      %v3251 = vshrl.u32 %v3250, 7
      %v3252 = vsub.s32 %v3249, %v3251
      %v3253 = vrot.slane %v3239, %v3252
      %v3254 = vcombine.low %v2209, %v2213
      %v3255 = vcombine.high %v2209, %v2213
      %v3257 = vunpack.c.l.s4 1983009808
      %v3258 = vunpack.c.0.s8 %v3257
      %v3259 = vlaneseq
      %v3260 = vshrl.u32 %v3259, 7
      %v3261 = vsub.s32 %v3258, %v3260
      %v3262 = vrot.slane %v3254, %v3261
      %v3264 = vunpack.c.l.s4 1983009808
      %v3265 = vunpack.c.0.s8 %v3264
      %v3266 = vlaneseq
      %v3267 = vshrl.u32 %v3266, 7
      %v3268 = vsub.s32 %v3265, %v3267
      %v3269 = vrot.slane %v3255, %v3268
      %v3270 = vcombine.low %v2215, %v2219
      %v3271 = vcombine.high %v2215, %v2219
      %v3273 = vunpack.c.l.s4 1983009808
      %v3274 = vunpack.c.0.s8 %v3273
      %v3275 = vlaneseq
      %v3276 = vshrl.u32 %v3275, 7
      %v3277 = vsub.s32 %v3274, %v3276
      %v3278 = vrot.slane %v3270, %v3277
      %v3280 = vunpack.c.l.s4 1983009808
      %v3281 = vunpack.c.0.s8 %v3280
      %v3282 = vlaneseq
      %v3283 = vshrl.u32 %v3282, 7
      %v3284 = vsub.s32 %v3281, %v3283
      %v3285 = vrot.slane %v3271, %v3284
      %v3286 = vcombine.low %v2217, %v2221
      %v3287 = vcombine.high %v2217, %v2221
      %v3289 = vunpack.c.l.s4 1983009808
      %v3290 = vunpack.c.0.s8 %v3289
      %v3291 = vlaneseq
      %v3292 = vshrl.u32 %v3291, 7
      %v3293 = vsub.s32 %v3290, %v3292
      %v3294 = vrot.slane %v3286, %v3293
      %v3296 = vunpack.c.l.s4 1983009808
      %v3297 = vunpack.c.0.s8 %v3296
      %v3298 = vlaneseq
      %v3299 = vshrl.u32 %v3298, 7
      %v3300 = vsub.s32 %v3297, %v3299
      %v3301 = vrot.slane %v3287, %v3300
      %v3302 = vcombine.low %v3246, %v3262
      %v3303 = vcombine.high %v3246, %v3262
      %v3305 = vunpack.c.l.s4 1934713408
      %v3306 = vunpack.c.0.s8 %v3305
      %v3307 = vlaneseq
      %v3308 = vshrl.u32 %v3307, 7
      %v3309 = vsub.s32 %v3306, %v3308
      %v3310 = vrot.slane %v3302, %v3309
      %v3312 = vunpack.c.l.s4 1934713408
      %v3313 = vunpack.c.0.s8 %v3312
      %v3314 = vlaneseq
      %v3315 = vshrl.u32 %v3314, 7
      %v3316 = vsub.s32 %v3313, %v3315
      %v3317 = vrot.slane %v3303, %v3316
      %v3318 = vcombine.low %v3253, %v3269
      %v3319 = vcombine.high %v3253, %v3269
      %v3321 = vunpack.c.l.s4 1934713408
      %v3322 = vunpack.c.0.s8 %v3321
      %v3323 = vlaneseq
      %v3324 = vshrl.u32 %v3323, 7
      %v3325 = vsub.s32 %v3322, %v3324
      %v3326 = vrot.slane %v3318, %v3325
      %v3328 = vunpack.c.l.s4 1934713408
      %v3329 = vunpack.c.0.s8 %v3328
      %v3330 = vlaneseq
      %v3331 = vshrl.u32 %v3330, 7
      %v3332 = vsub.s32 %v3329, %v3331
      %v3333 = vrot.slane %v3319, %v3332
      %v3334 = vcombine.low %v3278, %v3294
      %v3335 = vcombine.high %v3278, %v3294
      %v3337 = vunpack.c.l.s4 1934713408
      %v3338 = vunpack.c.0.s8 %v3337
      %v3339 = vlaneseq
      %v3340 = vshrl.u32 %v3339, 7
      %v3341 = vsub.s32 %v3338, %v3340
      %v3342 = vrot.slane %v3334, %v3341
      %v3344 = vunpack.c.l.s4 1934713408
      %v3345 = vunpack.c.0.s8 %v3344
      %v3346 = vlaneseq
      %v3347 = vshrl.u32 %v3346, 7
      %v3348 = vsub.s32 %v3345, %v3347
      %v3349 = vrot.slane %v3335, %v3348
      %v3350 = vcombine.low %v3285, %v3301
      %v3351 = vcombine.high %v3285, %v3301
      %v3353 = vunpack.c.l.s4 1934713408
      %v3354 = vunpack.c.0.s8 %v3353
      %v3355 = vlaneseq
      %v3356 = vshrl.u32 %v3355, 7
      %v3357 = vsub.s32 %v3354, %v3356
      %v3358 = vrot.slane %v3350, %v3357
      %v3360 = vunpack.c.l.s4 1934713408
      %v3361 = vunpack.c.0.s8 %v3360
      %v3362 = vlaneseq
      %v3363 = vshrl.u32 %v3362, 7
      %v3364 = vsub.s32 %v3361, %v3363
      %v3365 = vrot.slane %v3351, %v3364
      %v3366 = vcombine.low %v3310, %v3342
      %v3367 = vcombine.high %v3310, %v3342
      %v3368 = vcombine.low %v3317, %v3349
      %v3369 = vcombine.high %v3317, %v3349
      %v3370 = vcombine.low %v3326, %v3358
      %v3371 = vcombine.high %v3326, %v3358
      %v3372 = vcombine.low %v3333, %v3365
      %v3373 = vcombine.high %v3333, %v3365
      %v3374 = vcombine.low %v2223, %v2227
      %v3375 = vcombine.high %v2223, %v2227
      %v3377 = vunpack.c.l.s4 1983009808
      %v3378 = vunpack.c.0.s8 %v3377
      %v3379 = vlaneseq
      %v3380 = vshrl.u32 %v3379, 7
      %v3381 = vsub.s32 %v3378, %v3380
      %v3382 = vrot.slane %v3374, %v3381
      %v3384 = vunpack.c.l.s4 1983009808
      %v3385 = vunpack.c.0.s8 %v3384
      %v3386 = vlaneseq
      %v3387 = vshrl.u32 %v3386, 7
      %v3388 = vsub.s32 %v3385, %v3387
      %v3389 = vrot.slane %v3375, %v3388
      %v3390 = vcombine.low %v2225, %v2229
      %v3391 = vcombine.high %v2225, %v2229
      %v3393 = vunpack.c.l.s4 1983009808
      %v3394 = vunpack.c.0.s8 %v3393
      %v3395 = vlaneseq
      %v3396 = vshrl.u32 %v3395, 7
      %v3397 = vsub.s32 %v3394, %v3396
      %v3398 = vrot.slane %v3390, %v3397
      %v3400 = vunpack.c.l.s4 1983009808
      %v3401 = vunpack.c.0.s8 %v3400
      %v3402 = vlaneseq
      %v3403 = vshrl.u32 %v3402, 7
      %v3404 = vsub.s32 %v3401, %v3403
      %v3405 = vrot.slane %v3391, %v3404
      %v3406 = vcombine.low %v2231, %v2235
      %v3407 = vcombine.high %v2231, %v2235
      %v3409 = vunpack.c.l.s4 1983009808
      %v3410 = vunpack.c.0.s8 %v3409
      %v3411 = vlaneseq
      %v3412 = vshrl.u32 %v3411, 7
      %v3413 = vsub.s32 %v3410, %v3412
      %v3414 = vrot.slane %v3406, %v3413
      %v3416 = vunpack.c.l.s4 1983009808
      %v3417 = vunpack.c.0.s8 %v3416
      %v3418 = vlaneseq
      %v3419 = vshrl.u32 %v3418, 7
      %v3420 = vsub.s32 %v3417, %v3419
      %v3421 = vrot.slane %v3407, %v3420
      %v3422 = vcombine.low %v2233, %v2237
      %v3423 = vcombine.high %v2233, %v2237
      %v3425 = vunpack.c.l.s4 1983009808
      %v3426 = vunpack.c.0.s8 %v3425
      %v3427 = vlaneseq
      %v3428 = vshrl.u32 %v3427, 7
      %v3429 = vsub.s32 %v3426, %v3428
      %v3430 = vrot.slane %v3422, %v3429
      %v3432 = vunpack.c.l.s4 1983009808
      %v3433 = vunpack.c.0.s8 %v3432
      %v3434 = vlaneseq
      %v3435 = vshrl.u32 %v3434, 7
      %v3436 = vsub.s32 %v3433, %v3435
      %v3437 = vrot.slane %v3423, %v3436
      %v3438 = vcombine.low %v3382, %v3398
      %v3439 = vcombine.high %v3382, %v3398
      %v3441 = vunpack.c.l.s4 1934713408
      %v3442 = vunpack.c.0.s8 %v3441
      %v3443 = vlaneseq
      %v3444 = vshrl.u32 %v3443, 7
      %v3445 = vsub.s32 %v3442, %v3444
      %v3446 = vrot.slane %v3438, %v3445
      %v3448 = vunpack.c.l.s4 1934713408
      %v3449 = vunpack.c.0.s8 %v3448
      %v3450 = vlaneseq
      %v3451 = vshrl.u32 %v3450, 7
      %v3452 = vsub.s32 %v3449, %v3451
      %v3453 = vrot.slane %v3439, %v3452
      %v3454 = vcombine.low %v3389, %v3405
      %v3455 = vcombine.high %v3389, %v3405
      %v3457 = vunpack.c.l.s4 1934713408
      %v3458 = vunpack.c.0.s8 %v3457
      %v3459 = vlaneseq
      %v3460 = vshrl.u32 %v3459, 7
      %v3461 = vsub.s32 %v3458, %v3460
      %v3462 = vrot.slane %v3454, %v3461
      %v3464 = vunpack.c.l.s4 1934713408
      %v3465 = vunpack.c.0.s8 %v3464
      %v3466 = vlaneseq
      %v3467 = vshrl.u32 %v3466, 7
      %v3468 = vsub.s32 %v3465, %v3467
      %v3469 = vrot.slane %v3455, %v3468
      %v3470 = vcombine.low %v3414, %v3430
      %v3471 = vcombine.high %v3414, %v3430
      %v3473 = vunpack.c.l.s4 1934713408
      %v3474 = vunpack.c.0.s8 %v3473
      %v3475 = vlaneseq
      %v3476 = vshrl.u32 %v3475, 7
      %v3477 = vsub.s32 %v3474, %v3476
      %v3478 = vrot.slane %v3470, %v3477
      %v3480 = vunpack.c.l.s4 1934713408
      %v3481 = vunpack.c.0.s8 %v3480
      %v3482 = vlaneseq
      %v3483 = vshrl.u32 %v3482, 7
      %v3484 = vsub.s32 %v3481, %v3483
      %v3485 = vrot.slane %v3471, %v3484
      %v3486 = vcombine.low %v3421, %v3437
      %v3487 = vcombine.high %v3421, %v3437
      %v3489 = vunpack.c.l.s4 1934713408
      %v3490 = vunpack.c.0.s8 %v3489
      %v3491 = vlaneseq
      %v3492 = vshrl.u32 %v3491, 7
      %v3493 = vsub.s32 %v3490, %v3492
      %v3494 = vrot.slane %v3486, %v3493
      %v3496 = vunpack.c.l.s4 1934713408
      %v3497 = vunpack.c.0.s8 %v3496
      %v3498 = vlaneseq
      %v3499 = vshrl.u32 %v3498, 7
      %v3500 = vsub.s32 %v3497, %v3499
      %v3501 = vrot.slane %v3487, %v3500
      %v3502 = vcombine.low %v3446, %v3478
      %v3503 = vcombine.high %v3446, %v3478
      %v3504 = vcombine.low %v3453, %v3485
      %v3505 = vcombine.high %v3453, %v3485
      %v3506 = vcombine.low %v3462, %v3494
      %v3507 = vcombine.high %v3462, %v3494
      %v3508 = vcombine.low %v3469, %v3501
      %v3509 = vcombine.high %v3469, %v3501
      %v3510 = vcombine.low %v2239, %v2243
      %v3511 = vcombine.high %v2239, %v2243
      %v3513 = vunpack.c.l.s4 1983009808
      %v3514 = vunpack.c.0.s8 %v3513
      %v3515 = vlaneseq
      %v3516 = vshrl.u32 %v3515, 7
      %v3517 = vsub.s32 %v3514, %v3516
      %v3518 = vrot.slane %v3510, %v3517
      %v3520 = vunpack.c.l.s4 1983009808
      %v3521 = vunpack.c.0.s8 %v3520
      %v3522 = vlaneseq
      %v3523 = vshrl.u32 %v3522, 7
      %v3524 = vsub.s32 %v3521, %v3523
      %v3525 = vrot.slane %v3511, %v3524
      %v3526 = vcombine.low %v2241, %v2245
      %v3527 = vcombine.high %v2241, %v2245
      %v3529 = vunpack.c.l.s4 1983009808
      %v3530 = vunpack.c.0.s8 %v3529
      %v3531 = vlaneseq
      %v3532 = vshrl.u32 %v3531, 7
      %v3533 = vsub.s32 %v3530, %v3532
      %v3534 = vrot.slane %v3526, %v3533
      %v3536 = vunpack.c.l.s4 1983009808
      %v3537 = vunpack.c.0.s8 %v3536
      %v3538 = vlaneseq
      %v3539 = vshrl.u32 %v3538, 7
      %v3540 = vsub.s32 %v3537, %v3539
      %v3541 = vrot.slane %v3527, %v3540
      %v3542 = vcombine.low %v2247, %v2251
      %v3543 = vcombine.high %v2247, %v2251
      %v3545 = vunpack.c.l.s4 1983009808
      %v3546 = vunpack.c.0.s8 %v3545
      %v3547 = vlaneseq
      %v3548 = vshrl.u32 %v3547, 7
      %v3549 = vsub.s32 %v3546, %v3548
      %v3550 = vrot.slane %v3542, %v3549
      %v3552 = vunpack.c.l.s4 1983009808
      %v3553 = vunpack.c.0.s8 %v3552
      %v3554 = vlaneseq
      %v3555 = vshrl.u32 %v3554, 7
      %v3556 = vsub.s32 %v3553, %v3555
      %v3557 = vrot.slane %v3543, %v3556
      %v3558 = vcombine.low %v2249, %v2253
      %v3559 = vcombine.high %v2249, %v2253
      %v3561 = vunpack.c.l.s4 1983009808
      %v3562 = vunpack.c.0.s8 %v3561
      %v3563 = vlaneseq
      %v3564 = vshrl.u32 %v3563, 7
      %v3565 = vsub.s32 %v3562, %v3564
      %v3566 = vrot.slane %v3558, %v3565
      %v3568 = vunpack.c.l.s4 1983009808
      %v3569 = vunpack.c.0.s8 %v3568
      %v3570 = vlaneseq
      %v3571 = vshrl.u32 %v3570, 7
      %v3572 = vsub.s32 %v3569, %v3571
      %v3573 = vrot.slane %v3559, %v3572
      %v3574 = vcombine.low %v3518, %v3534
      %v3575 = vcombine.high %v3518, %v3534
      %v3577 = vunpack.c.l.s4 1934713408
      %v3578 = vunpack.c.0.s8 %v3577
      %v3579 = vlaneseq
      %v3580 = vshrl.u32 %v3579, 7
      %v3581 = vsub.s32 %v3578, %v3580
      %v3582 = vrot.slane %v3574, %v3581
      %v3584 = vunpack.c.l.s4 1934713408
      %v3585 = vunpack.c.0.s8 %v3584
      %v3586 = vlaneseq
      %v3587 = vshrl.u32 %v3586, 7
      %v3588 = vsub.s32 %v3585, %v3587
      %v3589 = vrot.slane %v3575, %v3588
      %v3590 = vcombine.low %v3525, %v3541
      %v3591 = vcombine.high %v3525, %v3541
      %v3593 = vunpack.c.l.s4 1934713408
      %v3594 = vunpack.c.0.s8 %v3593
      %v3595 = vlaneseq
      %v3596 = vshrl.u32 %v3595, 7
      %v3597 = vsub.s32 %v3594, %v3596
      %v3598 = vrot.slane %v3590, %v3597
      %v3600 = vunpack.c.l.s4 1934713408
      %v3601 = vunpack.c.0.s8 %v3600
      %v3602 = vlaneseq
      %v3603 = vshrl.u32 %v3602, 7
      %v3604 = vsub.s32 %v3601, %v3603
      %v3605 = vrot.slane %v3591, %v3604
      %v3606 = vcombine.low %v3550, %v3566
      %v3607 = vcombine.high %v3550, %v3566
      %v3609 = vunpack.c.l.s4 1934713408
      %v3610 = vunpack.c.0.s8 %v3609
      %v3611 = vlaneseq
      %v3612 = vshrl.u32 %v3611, 7
      %v3613 = vsub.s32 %v3610, %v3612
      %v3614 = vrot.slane %v3606, %v3613
      %v3616 = vunpack.c.l.s4 1934713408
      %v3617 = vunpack.c.0.s8 %v3616
      %v3618 = vlaneseq
      %v3619 = vshrl.u32 %v3618, 7
      %v3620 = vsub.s32 %v3617, %v3619
      %v3621 = vrot.slane %v3607, %v3620
      %v3622 = vcombine.low %v3557, %v3573
      %v3623 = vcombine.high %v3557, %v3573
      %v3625 = vunpack.c.l.s4 1934713408
      %v3626 = vunpack.c.0.s8 %v3625
      %v3627 = vlaneseq
      %v3628 = vshrl.u32 %v3627, 7
      %v3629 = vsub.s32 %v3626, %v3628
      %v3630 = vrot.slane %v3622, %v3629
      %v3632 = vunpack.c.l.s4 1934713408
      %v3633 = vunpack.c.0.s8 %v3632
      %v3634 = vlaneseq
      %v3635 = vshrl.u32 %v3634, 7
      %v3636 = vsub.s32 %v3633, %v3635
      %v3637 = vrot.slane %v3623, %v3636
      %v3638 = vcombine.low %v3582, %v3614
      %v3639 = vcombine.high %v3582, %v3614
      %v3640 = vcombine.low %v3589, %v3621
      %v3641 = vcombine.high %v3589, %v3621
      %v3642 = vcombine.low %v3598, %v3630
      %v3643 = vcombine.high %v3598, %v3630
      %v3644 = vcombine.low %v3605, %v3637
      %v3645 = vcombine.high %v3605, %v3637
      %v3646 = vcombine.low %v2255, %v2259
      %v3647 = vcombine.high %v2255, %v2259
      %v3649 = vunpack.c.l.s4 1983009808
      %v3650 = vunpack.c.0.s8 %v3649
      %v3651 = vlaneseq
      %v3652 = vshrl.u32 %v3651, 7
      %v3653 = vsub.s32 %v3650, %v3652
      %v3654 = vrot.slane %v3646, %v3653
      %v3656 = vunpack.c.l.s4 1983009808
      %v3657 = vunpack.c.0.s8 %v3656
      %v3658 = vlaneseq
      %v3659 = vshrl.u32 %v3658, 7
      %v3660 = vsub.s32 %v3657, %v3659
      %v3661 = vrot.slane %v3647, %v3660
      %v3662 = vcombine.low %v2257, %v2261
      %v3663 = vcombine.high %v2257, %v2261
      %v3665 = vunpack.c.l.s4 1983009808
      %v3666 = vunpack.c.0.s8 %v3665
      %v3667 = vlaneseq
      %v3668 = vshrl.u32 %v3667, 7
      %v3669 = vsub.s32 %v3666, %v3668
      %v3670 = vrot.slane %v3662, %v3669
      %v3672 = vunpack.c.l.s4 1983009808
      %v3673 = vunpack.c.0.s8 %v3672
      %v3674 = vlaneseq
      %v3675 = vshrl.u32 %v3674, 7
      %v3676 = vsub.s32 %v3673, %v3675
      %v3677 = vrot.slane %v3663, %v3676
      %v3678 = vcombine.low %v2263, %v2267
      %v3679 = vcombine.high %v2263, %v2267
      %v3681 = vunpack.c.l.s4 1983009808
      %v3682 = vunpack.c.0.s8 %v3681
      %v3683 = vlaneseq
      %v3684 = vshrl.u32 %v3683, 7
      %v3685 = vsub.s32 %v3682, %v3684
      %v3686 = vrot.slane %v3678, %v3685
      %v3688 = vunpack.c.l.s4 1983009808
      %v3689 = vunpack.c.0.s8 %v3688
      %v3690 = vlaneseq
      %v3691 = vshrl.u32 %v3690, 7
      %v3692 = vsub.s32 %v3689, %v3691
      %v3693 = vrot.slane %v3679, %v3692
      %v3694 = vcombine.low %v2265, %v2269
      %v3695 = vcombine.high %v2265, %v2269
      %v3697 = vunpack.c.l.s4 1983009808
      %v3698 = vunpack.c.0.s8 %v3697
      %v3699 = vlaneseq
      %v3700 = vshrl.u32 %v3699, 7
      %v3701 = vsub.s32 %v3698, %v3700
      %v3702 = vrot.slane %v3694, %v3701
      %v3704 = vunpack.c.l.s4 1983009808
      %v3705 = vunpack.c.0.s8 %v3704
      %v3706 = vlaneseq
      %v3707 = vshrl.u32 %v3706, 7
      %v3708 = vsub.s32 %v3705, %v3707
      %v3709 = vrot.slane %v3695, %v3708
      %v3710 = vcombine.low %v3654, %v3670
      %v3711 = vcombine.high %v3654, %v3670
      %v3713 = vunpack.c.l.s4 1934713408
      %v3714 = vunpack.c.0.s8 %v3713
      %v3715 = vlaneseq
      %v3716 = vshrl.u32 %v3715, 7
      %v3717 = vsub.s32 %v3714, %v3716
      %v3718 = vrot.slane %v3710, %v3717
      %v3720 = vunpack.c.l.s4 1934713408
      %v3721 = vunpack.c.0.s8 %v3720
      %v3722 = vlaneseq
      %v3723 = vshrl.u32 %v3722, 7
      %v3724 = vsub.s32 %v3721, %v3723
      %v3725 = vrot.slane %v3711, %v3724
      %v3726 = vcombine.low %v3661, %v3677
      %v3727 = vcombine.high %v3661, %v3677
      %v3729 = vunpack.c.l.s4 1934713408
      %v3730 = vunpack.c.0.s8 %v3729
      %v3731 = vlaneseq
      %v3732 = vshrl.u32 %v3731, 7
      %v3733 = vsub.s32 %v3730, %v3732
      %v3734 = vrot.slane %v3726, %v3733
      %v3736 = vunpack.c.l.s4 1934713408
      %v3737 = vunpack.c.0.s8 %v3736
      %v3738 = vlaneseq
      %v3739 = vshrl.u32 %v3738, 7
      %v3740 = vsub.s32 %v3737, %v3739
      %v3741 = vrot.slane %v3727, %v3740
      %v3742 = vcombine.low %v3686, %v3702
      %v3743 = vcombine.high %v3686, %v3702
      %v3745 = vunpack.c.l.s4 1934713408
      %v3746 = vunpack.c.0.s8 %v3745
      %v3747 = vlaneseq
      %v3748 = vshrl.u32 %v3747, 7
      %v3749 = vsub.s32 %v3746, %v3748
      %v3750 = vrot.slane %v3742, %v3749
      %v3752 = vunpack.c.l.s4 1934713408
      %v3753 = vunpack.c.0.s8 %v3752
      %v3754 = vlaneseq
      %v3755 = vshrl.u32 %v3754, 7
      %v3756 = vsub.s32 %v3753, %v3755
      %v3757 = vrot.slane %v3743, %v3756
      %v3758 = vcombine.low %v3693, %v3709
      %v3759 = vcombine.high %v3693, %v3709
      %v3761 = vunpack.c.l.s4 1934713408
      %v3762 = vunpack.c.0.s8 %v3761
      %v3763 = vlaneseq
      %v3764 = vshrl.u32 %v3763, 7
      %v3765 = vsub.s32 %v3762, %v3764
      %v3766 = vrot.slane %v3758, %v3765
      %v3768 = vunpack.c.l.s4 1934713408
      %v3769 = vunpack.c.0.s8 %v3768
      %v3770 = vlaneseq
      %v3771 = vshrl.u32 %v3770, 7
      %v3772 = vsub.s32 %v3769, %v3771
      %v3773 = vrot.slane %v3759, %v3772
      %v3774 = vcombine.low %v3718, %v3750
      %v3775 = vcombine.high %v3718, %v3750
      %v3776 = vcombine.low %v3725, %v3757
      %v3777 = vcombine.high %v3725, %v3757
      %v3778 = vcombine.low %v3734, %v3766
      %v3779 = vcombine.high %v3734, %v3766
      %v3780 = vcombine.low %v3741, %v3773
      %v3781 = vcombine.high %v3741, %v3773
      %v3782 = vcombine.low %v2271, %v2275
      %v3783 = vcombine.high %v2271, %v2275
      %v3785 = vunpack.c.l.s4 1983009808
      %v3786 = vunpack.c.0.s8 %v3785
      %v3787 = vlaneseq
      %v3788 = vshrl.u32 %v3787, 7
      %v3789 = vsub.s32 %v3786, %v3788
      %v3790 = vrot.slane %v3782, %v3789
      %v3792 = vunpack.c.l.s4 1983009808
      %v3793 = vunpack.c.0.s8 %v3792
      %v3794 = vlaneseq
      %v3795 = vshrl.u32 %v3794, 7
      %v3796 = vsub.s32 %v3793, %v3795
      %v3797 = vrot.slane %v3783, %v3796
      %v3798 = vcombine.low %v2273, %v2277
      %v3799 = vcombine.high %v2273, %v2277
      %v3801 = vunpack.c.l.s4 1983009808
      %v3802 = vunpack.c.0.s8 %v3801
      %v3803 = vlaneseq
      %v3804 = vshrl.u32 %v3803, 7
      %v3805 = vsub.s32 %v3802, %v3804
      %v3806 = vrot.slane %v3798, %v3805
      %v3808 = vunpack.c.l.s4 1983009808
      %v3809 = vunpack.c.0.s8 %v3808
      %v3810 = vlaneseq
      %v3811 = vshrl.u32 %v3810, 7
      %v3812 = vsub.s32 %v3809, %v3811
      %v3813 = vrot.slane %v3799, %v3812
      %v3814 = vcombine.low %v2279, %v2283
      %v3815 = vcombine.high %v2279, %v2283
      %v3817 = vunpack.c.l.s4 1983009808
      %v3818 = vunpack.c.0.s8 %v3817
      %v3819 = vlaneseq
      %v3820 = vshrl.u32 %v3819, 7
      %v3821 = vsub.s32 %v3818, %v3820
      %v3822 = vrot.slane %v3814, %v3821
      %v3824 = vunpack.c.l.s4 1983009808
      %v3825 = vunpack.c.0.s8 %v3824
      %v3826 = vlaneseq
      %v3827 = vshrl.u32 %v3826, 7
      %v3828 = vsub.s32 %v3825, %v3827
      %v3829 = vrot.slane %v3815, %v3828
      %v3830 = vcombine.low %v2281, %v2285
      %v3831 = vcombine.high %v2281, %v2285
      %v3833 = vunpack.c.l.s4 1983009808
      %v3834 = vunpack.c.0.s8 %v3833
      %v3835 = vlaneseq
      %v3836 = vshrl.u32 %v3835, 7
      %v3837 = vsub.s32 %v3834, %v3836
      %v3838 = vrot.slane %v3830, %v3837
      %v3840 = vunpack.c.l.s4 1983009808
      %v3841 = vunpack.c.0.s8 %v3840
      %v3842 = vlaneseq
      %v3843 = vshrl.u32 %v3842, 7
      %v3844 = vsub.s32 %v3841, %v3843
      %v3845 = vrot.slane %v3831, %v3844
      %v3846 = vcombine.low %v3790, %v3806
      %v3847 = vcombine.high %v3790, %v3806
      %v3849 = vunpack.c.l.s4 1934713408
      %v3850 = vunpack.c.0.s8 %v3849
      %v3851 = vlaneseq
      %v3852 = vshrl.u32 %v3851, 7
      %v3853 = vsub.s32 %v3850, %v3852
      %v3854 = vrot.slane %v3846, %v3853
      %v3856 = vunpack.c.l.s4 1934713408
      %v3857 = vunpack.c.0.s8 %v3856
      %v3858 = vlaneseq
      %v3859 = vshrl.u32 %v3858, 7
      %v3860 = vsub.s32 %v3857, %v3859
      %v3861 = vrot.slane %v3847, %v3860
      %v3862 = vcombine.low %v3797, %v3813
      %v3863 = vcombine.high %v3797, %v3813
      %v3865 = vunpack.c.l.s4 1934713408
      %v3866 = vunpack.c.0.s8 %v3865
      %v3867 = vlaneseq
      %v3868 = vshrl.u32 %v3867, 7
      %v3869 = vsub.s32 %v3866, %v3868
      %v3870 = vrot.slane %v3862, %v3869
      %v3872 = vunpack.c.l.s4 1934713408
      %v3873 = vunpack.c.0.s8 %v3872
      %v3874 = vlaneseq
      %v3875 = vshrl.u32 %v3874, 7
      %v3876 = vsub.s32 %v3873, %v3875
      %v3877 = vrot.slane %v3863, %v3876
      %v3878 = vcombine.low %v3822, %v3838
      %v3879 = vcombine.high %v3822, %v3838
      %v3881 = vunpack.c.l.s4 1934713408
      %v3882 = vunpack.c.0.s8 %v3881
      %v3883 = vlaneseq
      %v3884 = vshrl.u32 %v3883, 7
      %v3885 = vsub.s32 %v3882, %v3884
      %v3886 = vrot.slane %v3878, %v3885
      %v3888 = vunpack.c.l.s4 1934713408
      %v3889 = vunpack.c.0.s8 %v3888
      %v3890 = vlaneseq
      %v3891 = vshrl.u32 %v3890, 7
      %v3892 = vsub.s32 %v3889, %v3891
      %v3893 = vrot.slane %v3879, %v3892
      %v3894 = vcombine.low %v3829, %v3845
      %v3895 = vcombine.high %v3829, %v3845
      %v3897 = vunpack.c.l.s4 1934713408
      %v3898 = vunpack.c.0.s8 %v3897
      %v3899 = vlaneseq
      %v3900 = vshrl.u32 %v3899, 7
      %v3901 = vsub.s32 %v3898, %v3900
      %v3902 = vrot.slane %v3894, %v3901
      %v3904 = vunpack.c.l.s4 1934713408
      %v3905 = vunpack.c.0.s8 %v3904
      %v3906 = vlaneseq
      %v3907 = vshrl.u32 %v3906, 7
      %v3908 = vsub.s32 %v3905, %v3907
      %v3909 = vrot.slane %v3895, %v3908
      %v3910 = vcombine.low %v3854, %v3886
      %v3911 = vcombine.high %v3854, %v3886
      %v3912 = vcombine.low %v3861, %v3893
      %v3913 = vcombine.high %v3861, %v3893
      %v3914 = vcombine.low %v3870, %v3902
      %v3915 = vcombine.high %v3870, %v3902
      %v3916 = vcombine.low %v3877, %v3909
      %v3917 = vcombine.high %v3877, %v3909
      %3924 = vrot.lane.b32.xlu0 %v2415, 16
      %v3925 = vpop.permute.xlu0 %3924
      %3926 = vrot.lane.b32.xlu0 %v2551, 16
      %v3927 = vpop.permute.xlu0 %3926
      %3928 = vrot.lane.b32.xlu0 %v2687, 16
      %v3929 = vpop.permute.xlu0 %3928
      %3930 = vrot.lane.b32.xlu0 %v2823, 16
      %v3931 = vpop.permute.xlu0 %3930
      %3932 = vrot.lane.b32.xlu0 %v2959, 16
      %v3933 = vpop.permute.xlu0 %3932
      %3934 = vrot.lane.b32.xlu0 %v3095, 16
      %v3935 = vpop.permute.xlu0 %3934
      %3948 = vrot.lane.b32.xlu0 %v2416, 32
      %v3949 = vpop.permute.xlu0 %3948
      %3950 = vrot.lane.b32.xlu0 %v2552, 32
      %v3951 = vpop.permute.xlu0 %3950
      %3952 = vrot.lane.b32.xlu0 %v2688, 32
      %v3953 = vpop.permute.xlu0 %3952
      %3954 = vrot.lane.b32.xlu0 %v2824, 32
      %v3955 = vpop.permute.xlu0 %3954
      %3956 = vrot.lane.b32.xlu0 %v2960, 32
      %v3957 = vpop.permute.xlu0 %3956
      %3958 = vrot.lane.b32.xlu0 %v3096, 32
      %v3959 = vpop.permute.xlu0 %3958
      %3972 = vrot.lane.b32.xlu0 %v2417, 48
      %v3973 = vpop.permute.xlu0 %3972
      %3974 = vrot.lane.b32.xlu0 %v2553, 48
      %v3975 = vpop.permute.xlu0 %3974
      %3976 = vrot.lane.b32.xlu0 %v2689, 48
      %v3977 = vpop.permute.xlu0 %3976
      %3978 = vrot.lane.b32.xlu0 %v2825, 48
      %v3979 = vpop.permute.xlu0 %3978
      %3980 = vrot.lane.b32.xlu0 %v2961, 48
      %v3981 = vpop.permute.xlu0 %3980
      %3982 = vrot.lane.b32.xlu0 %v3097, 48
      %v3983 = vpop.permute.xlu0 %3982
      %3996 = vrot.lane.b32.xlu0 %v2418, 64
      %v3997 = vpop.permute.xlu0 %3996
      %3998 = vrot.lane.b32.xlu0 %v2554, 64
      %v3999 = vpop.permute.xlu0 %3998
      %4000 = vrot.lane.b32.xlu0 %v2690, 64
      %v4001 = vpop.permute.xlu0 %4000
      %4002 = vrot.lane.b32.xlu0 %v2826, 64
      %v4003 = vpop.permute.xlu0 %4002
      %4004 = vrot.lane.b32.xlu0 %v2962, 64
      %v4005 = vpop.permute.xlu0 %4004
      %4006 = vrot.lane.b32.xlu0 %v3098, 64
      %v4007 = vpop.permute.xlu0 %4006
      %4020 = vrot.lane.b32.xlu0 %v2419, 80
      %v4021 = vpop.permute.xlu0 %4020
      %4022 = vrot.lane.b32.xlu0 %v2555, 80
      %v4023 = vpop.permute.xlu0 %4022
      %4024 = vrot.lane.b32.xlu0 %v2691, 80
      %v4025 = vpop.permute.xlu0 %4024
      %4026 = vrot.lane.b32.xlu0 %v2827, 80
      %v4027 = vpop.permute.xlu0 %4026
      %4028 = vrot.lane.b32.xlu0 %v2963, 80
      %v4029 = vpop.permute.xlu0 %4028
      %4030 = vrot.lane.b32.xlu0 %v3099, 80
      %v4031 = vpop.permute.xlu0 %4030
      %4044 = vrot.lane.b32.xlu0 %v2420, 96
      %v4045 = vpop.permute.xlu0 %4044
      %4046 = vrot.lane.b32.xlu0 %v2556, 96
      %v4047 = vpop.permute.xlu0 %4046
      %4048 = vrot.lane.b32.xlu0 %v2692, 96
      %v4049 = vpop.permute.xlu0 %4048
      %4050 = vrot.lane.b32.xlu0 %v2828, 96
      %v4051 = vpop.permute.xlu0 %4050
      %4052 = vrot.lane.b32.xlu0 %v2964, 96
      %v4053 = vpop.permute.xlu0 %4052
      %4054 = vrot.lane.b32.xlu0 %v3100, 96
      %v4055 = vpop.permute.xlu0 %4054
      %4068 = vrot.lane.b32.xlu0 %v2421, 112
      %v4069 = vpop.permute.xlu0 %4068
      %4070 = vrot.lane.b32.xlu0 %v2557, 112
      %v4071 = vpop.permute.xlu0 %4070
      %4072 = vrot.lane.b32.xlu0 %v2693, 112
      %v4073 = vpop.permute.xlu0 %4072
      %4074 = vrot.lane.b32.xlu0 %v2829, 112
      %v4075 = vpop.permute.xlu0 %4074
      %4076 = vrot.lane.b32.xlu0 %v2965, 112
      %v4077 = vpop.permute.xlu0 %4076
      %4078 = vrot.lane.b32.xlu0 %v3101, 112
      %v4079 = vpop.permute.xlu0 %4078
      %4092 = vrot.lane.b32.xlu0 %v3231, 16
      %v4093 = vpop.permute.xlu0 %4092
      %4094 = vrot.lane.b32.xlu0 %v3367, 16
      %v4095 = vpop.permute.xlu0 %4094
      %4096 = vrot.lane.b32.xlu0 %v3503, 16
      %v4097 = vpop.permute.xlu0 %4096
      %4098 = vrot.lane.b32.xlu0 %v3639, 16
      %v4099 = vpop.permute.xlu0 %4098
      %4100 = vrot.lane.b32.xlu0 %v3775, 16
      %v4101 = vpop.permute.xlu0 %4100
      %4102 = vrot.lane.b32.xlu0 %v3911, 16
      %v4103 = vpop.permute.xlu0 %4102
      %4116 = vrot.lane.b32.xlu0 %v3232, 32
      %v4117 = vpop.permute.xlu0 %4116
      %4118 = vrot.lane.b32.xlu0 %v3368, 32
      %v4119 = vpop.permute.xlu0 %4118
      %4120 = vrot.lane.b32.xlu0 %v3504, 32
      %v4121 = vpop.permute.xlu0 %4120
      %4122 = vrot.lane.b32.xlu0 %v3640, 32
      %v4123 = vpop.permute.xlu0 %4122
      %4124 = vrot.lane.b32.xlu0 %v3776, 32
      %v4125 = vpop.permute.xlu0 %4124
      %4126 = vrot.lane.b32.xlu0 %v3912, 32
      %v4127 = vpop.permute.xlu0 %4126
      %4140 = vrot.lane.b32.xlu0 %v3233, 48
      %v4141 = vpop.permute.xlu0 %4140
      %4142 = vrot.lane.b32.xlu0 %v3369, 48
      %v4143 = vpop.permute.xlu0 %4142
      %4144 = vrot.lane.b32.xlu0 %v3505, 48
      %v4145 = vpop.permute.xlu0 %4144
      %4146 = vrot.lane.b32.xlu0 %v3641, 48
      %v4147 = vpop.permute.xlu0 %4146
      %4148 = vrot.lane.b32.xlu0 %v3777, 48
      %v4149 = vpop.permute.xlu0 %4148
      %4150 = vrot.lane.b32.xlu0 %v3913, 48
      %v4151 = vpop.permute.xlu0 %4150
      %4164 = vrot.lane.b32.xlu0 %v3234, 64
      %v4165 = vpop.permute.xlu0 %4164
      %4166 = vrot.lane.b32.xlu0 %v3370, 64
      %v4167 = vpop.permute.xlu0 %4166
      %4168 = vrot.lane.b32.xlu0 %v3506, 64
      %v4169 = vpop.permute.xlu0 %4168
      %4170 = vrot.lane.b32.xlu0 %v3642, 64
      %v4171 = vpop.permute.xlu0 %4170
      %4172 = vrot.lane.b32.xlu0 %v3778, 64
      %v4173 = vpop.permute.xlu0 %4172
      %4174 = vrot.lane.b32.xlu0 %v3914, 64
      %v4175 = vpop.permute.xlu0 %4174
      %4188 = vrot.lane.b32.xlu0 %v3235, 80
      %v4189 = vpop.permute.xlu0 %4188
      %4190 = vrot.lane.b32.xlu0 %v3371, 80
      %v4191 = vpop.permute.xlu0 %4190
      %4192 = vrot.lane.b32.xlu0 %v3507, 80
      %v4193 = vpop.permute.xlu0 %4192
      %4194 = vrot.lane.b32.xlu0 %v3643, 80
      %v4195 = vpop.permute.xlu0 %4194
      %4196 = vrot.lane.b32.xlu0 %v3779, 80
      %v4197 = vpop.permute.xlu0 %4196
      %4198 = vrot.lane.b32.xlu0 %v3915, 80
      %v4199 = vpop.permute.xlu0 %4198
      %4212 = vrot.lane.b32.xlu0 %v3236, 96
      %v4213 = vpop.permute.xlu0 %4212
      %4214 = vrot.lane.b32.xlu0 %v3372, 96
      %v4215 = vpop.permute.xlu0 %4214
      %4216 = vrot.lane.b32.xlu0 %v3508, 96
      %v4217 = vpop.permute.xlu0 %4216
      %4218 = vrot.lane.b32.xlu0 %v3644, 96
      %v4219 = vpop.permute.xlu0 %4218
      %4220 = vrot.lane.b32.xlu0 %v3780, 96
      %v4221 = vpop.permute.xlu0 %4220
      %4222 = vrot.lane.b32.xlu0 %v3916, 96
      %v4223 = vpop.permute.xlu0 %4222
      %4236 = vrot.lane.b32.xlu0 %v3237, 112
      %v4237 = vpop.permute.xlu0 %4236
      %4238 = vrot.lane.b32.xlu0 %v3373, 112
      %v4239 = vpop.permute.xlu0 %4238
      %4240 = vrot.lane.b32.xlu0 %v3509, 112
      %v4241 = vpop.permute.xlu0 %4240
      %4242 = vrot.lane.b32.xlu0 %v3645, 112
      %v4243 = vpop.permute.xlu0 %4242
      %4244 = vrot.lane.b32.xlu0 %v3781, 112
      %v4245 = vpop.permute.xlu0 %4244
      %4246 = vrot.lane.b32.xlu0 %v3917, 112
      %v4247 = vpop.permute.xlu0 %4246
      %vm4254 = vcmask 130048
      %v4255 = vsel %vm4254, %v2414, %v3925
      %v4256 = vsel %vm4254, %v2550, %v3927
      %v4257 = vsel %vm4254, %v2686, %v3929
      %v4258 = vsel %vm4254, %v2822, %v3931
      %v4259 = vsel %vm4254, %v2958, %v3933
      %v4260 = vsel %vm4254, %v3094, %v3935
      %vm4261 = vcmask 261120
      %v4262 = vsel %vm4261, %v4255, %v3949
      %v4263 = vsel %vm4261, %v4256, %v3951
      %v4264 = vsel %vm4261, %v4257, %v3953
      %v4265 = vsel %vm4261, %v4258, %v3955
      %v4266 = vsel %vm4261, %v4259, %v3957
      %v4267 = vsel %vm4261, %v4260, %v3959
      %vm4268 = vcmask 392192
      %v4269 = vsel %vm4268, %v4262, %v3973
      %v4270 = vsel %vm4268, %v4263, %v3975
      %v4271 = vsel %vm4268, %v4264, %v3977
      %v4272 = vsel %vm4268, %v4265, %v3979
      %v4273 = vsel %vm4268, %v4266, %v3981
      %v4274 = vsel %vm4268, %v4267, %v3983
      %vm4275 = vcmask 523264
      %v4276 = vsel %vm4275, %v4269, %v3997
      %v4277 = vsel %vm4275, %v4270, %v3999
      %v4278 = vsel %vm4275, %v4271, %v4001
      %v4279 = vsel %vm4275, %v4272, %v4003
      %v4280 = vsel %vm4275, %v4273, %v4005
      %v4281 = vsel %vm4275, %v4274, %v4007
      %vm4282 = vcmask 654336
      %v4283 = vsel %vm4282, %v4276, %v4021
      %v4284 = vsel %vm4282, %v4277, %v4023
      %v4285 = vsel %vm4282, %v4278, %v4025
      %v4286 = vsel %vm4282, %v4279, %v4027
      %v4287 = vsel %vm4282, %v4280, %v4029
      %v4288 = vsel %vm4282, %v4281, %v4031
      %vm4289 = vcmask 785408
      %v4290 = vsel %vm4289, %v4283, %v4045
      %v4291 = vsel %vm4289, %v4284, %v4047
      %v4292 = vsel %vm4289, %v4285, %v4049
      %v4293 = vsel %vm4289, %v4286, %v4051
      %v4294 = vsel %vm4289, %v4287, %v4053
      %v4295 = vsel %vm4289, %v4288, %v4055
      %vm4296 = vcmask 916480
      %v4297 = vsel %vm4296, %v4290, %v4069
      %v4298 = vsel %vm4296, %v4291, %v4071
      %v4299 = vsel %vm4296, %v4292, %v4073
      %v4300 = vsel %vm4296, %v4293, %v4075
      %v4301 = vsel %vm4296, %v4294, %v4077
      %v4302 = vsel %vm4296, %v4295, %v4079
      %v4303 = vsel %vm4254, %v3230, %v4093
      %v4304 = vsel %vm4254, %v3366, %v4095
      %v4305 = vsel %vm4254, %v3502, %v4097
      %v4306 = vsel %vm4254, %v3638, %v4099
      %v4307 = vsel %vm4254, %v3774, %v4101
      %v4308 = vsel %vm4254, %v3910, %v4103
      %v4309 = vsel %vm4261, %v4303, %v4117
      %v4310 = vsel %vm4261, %v4304, %v4119
      %v4311 = vsel %vm4261, %v4305, %v4121
      %v4312 = vsel %vm4261, %v4306, %v4123
      %v4313 = vsel %vm4261, %v4307, %v4125
      %v4314 = vsel %vm4261, %v4308, %v4127
      %v4315 = vsel %vm4268, %v4309, %v4141
      %v4316 = vsel %vm4268, %v4310, %v4143
      %v4317 = vsel %vm4268, %v4311, %v4145
      %v4318 = vsel %vm4268, %v4312, %v4147
      %v4319 = vsel %vm4268, %v4313, %v4149
      %v4320 = vsel %vm4268, %v4314, %v4151
      %v4321 = vsel %vm4275, %v4315, %v4165
      %v4322 = vsel %vm4275, %v4316, %v4167
      %v4323 = vsel %vm4275, %v4317, %v4169
      %v4324 = vsel %vm4275, %v4318, %v4171
      %v4325 = vsel %vm4275, %v4319, %v4173
      %v4326 = vsel %vm4275, %v4320, %v4175
      %v4327 = vsel %vm4282, %v4321, %v4189
      %v4328 = vsel %vm4282, %v4322, %v4191
      %v4329 = vsel %vm4282, %v4323, %v4193
      %v4330 = vsel %vm4282, %v4324, %v4195
      %v4331 = vsel %vm4282, %v4325, %v4197
      %v4332 = vsel %vm4282, %v4326, %v4199
      %v4333 = vsel %vm4289, %v4327, %v4213
      %v4334 = vsel %vm4289, %v4328, %v4215
      %v4335 = vsel %vm4289, %v4329, %v4217
      %v4336 = vsel %vm4289, %v4330, %v4219
      %v4337 = vsel %vm4289, %v4331, %v4221
      %v4338 = vsel %vm4289, %v4332, %v4223
      %v4339 = vsel %vm4296, %v4333, %v4237
      %v4340 = vsel %vm4296, %v4334, %v4239
      %v4341 = vsel %vm4296, %v4335, %v4241
      %v4342 = vsel %vm4296, %v4336, %v4243
      %v4343 = vsel %vm4296, %v4337, %v4245
      %v4344 = vsel %vm4296, %v4338, %v4247
      %v4345 = vld [vmem:[%s199] sm:$0xff]
      %v4346 = vld [vmem:[%s199 + $0x8] sm:$0xff]
      %v4347 = vld [vmem:[%s199 + $0x10] sm:$0xff]
      %v4348 = vld [vmem:[%s199 + $0x18] sm:$0xff]
      %v4349 = vld [vmem:[%s199 + $0x20] sm:$0xff]
      %v4350 = vld [vmem:[%s199 + $0x28] sm:$0xff]
      %v4351 = vld [vmem:[%s199 + $0x30] sm:$0xff]
      %v4352 = vld [vmem:[%s199 + $0x38] sm:$0xff]
      %v4353 = vld [vmem:[%s199 + $0x40] sm:$0xff]
      %v4354 = vld [vmem:[%s199 + $0x48] sm:$0xff]
      %v4355 = vld [vmem:[%s199 + $0x50] sm:$0xff]
      %v4356 = vld [vmem:[%s199 + $0x58] sm:$0xff]
      %v4357 = vld [vmem:[%s199 + $0x60] sm:$0xff]
      %v4358 = vld [vmem:[%s199 + $0x68] sm:$0xff]
      %v4359 = vld [vmem:[%s199 + $0x70] sm:$0xff]
      %v4360 = vld [vmem:[%s199 + $0x78] sm:$0xff]
      %v4361 = vld [vmem:[%s199 + $0x80] sm:$0xff]
      %v4362 = vld [vmem:[%s199 + $0x88] sm:$0xff]
      %v4363 = vld [vmem:[%s199 + $0x90] sm:$0xff]
      %v4364 = vld [vmem:[%s199 + $0x98] sm:$0xff]
      %v4365 = vld [vmem:[%s199 + $0xa0] sm:$0xff]
      %v4366 = vld [vmem:[%s199 + $0xa8] sm:$0xff]
      %v4367 = vld [vmem:[%s199 + $0xb0] sm:$0xff]
      %v4368 = vld [vmem:[%s199 + $0xb8] sm:$0xff]
      %v4369 = vld [vmem:[%s199 + $0xc0] sm:$0xff]
      %v4370 = vld [vmem:[%s199 + $0xc8] sm:$0xff]
      %v4371 = vld [vmem:[%s199 + $0xd0] sm:$0xff]
      %v4372 = vld [vmem:[%s199 + $0xd8] sm:$0xff]
      %v4373 = vld [vmem:[%s199 + $0xe0] sm:$0xff]
      %v4374 = vld [vmem:[%s199 + $0xe8] sm:$0xff]
      %v4375 = vld [vmem:[%s199 + $0xf0] sm:$0xff]
      %v4376 = vld [vmem:[%s199 + $0xf8] sm:$0xff]
      %4377 = vmatprep.subr.mxu0 0.0
      %4378 = vmatpush1.msra.mxu0 %v4345
      %4379 = vmatprep.subr.mxu0 0.0
      %4380 = vmatpush1.msra.mxu0 %v4346
      %4381 = vmatprep.subr.mxu0 0.0
      %4382 = vmatpush1.msra.mxu0 %v4347
      %4383 = vmatprep.subr.mxu0 0.0
      %4384 = vmatpush1.msra.mxu0 %v4348
      %4385 = vmatprep.subr.mxu0 0.0
      %4386 = vmatpush1.msra.mxu0 %v4349
      %4387 = vmatprep.subr.mxu0 0.0
      %4388 = vmatpush1.msra.mxu0 %v4350
      %4389 = vmatprep.subr.mxu0 0.0
      %4390 = vmatpush1.msra.mxu0 %v4351
      %4391 = vmatprep.subr.mxu0 0.0
      %4392 = vmatpush1.msra.mxu0 %v4352
      %4393 = vmatprep.subr.mxu0 0.0
      %4394 = vmatpush1.msra.mxu0 %v4353
      %4395 = vmatprep.subr.mxu0 0.0
      %4396 = vmatpush1.msra.mxu0 %v4354
      %4397 = vmatprep.subr.mxu0 0.0
      %4398 = vmatpush1.msra.mxu0 %v4355
      %4399 = vmatprep.subr.mxu0 0.0
      %4400 = vmatpush1.msra.mxu0 %v4356
      %4401 = vmatprep.subr.mxu0 0.0
      %4402 = vmatpush1.msra.mxu0 %v4357
      %4403 = vmatprep.subr.mxu0 0.0
      %4404 = vmatpush1.msra.mxu0 %v4358
      %4405 = vmatprep.subr.mxu0 0.0
      %4406 = vmatpush1.msra.mxu0 %v4359
      %4407 = vmatprep.subr.mxu0 0.0
      %4408 = vmatpush1.msra.mxu0 %v4360
      %4409 = vmatprep.subr.mxu0 0.0
      %4410 = vmatpush1.msra.mxu0 %v4361
      %4411 = vmatprep.subr.mxu0 0.0
      %4412 = vmatpush1.msra.mxu0 %v4362
      %4413 = vmatprep.subr.mxu0 0.0
      %4414 = vmatpush1.msra.mxu0 %v4363
      %4415 = vmatprep.subr.mxu0 0.0
      %4416 = vmatpush1.msra.mxu0 %v4364
      %4417 = vmatprep.subr.mxu0 0.0
      %4418 = vmatpush1.msra.mxu0 %v4365
      %4419 = vmatprep.subr.mxu0 0.0
      %4420 = vmatpush1.msra.mxu0 %v4366
      %4421 = vmatprep.subr.mxu0 0.0
      %4422 = vmatpush1.msra.mxu0 %v4367
      %4423 = vmatprep.subr.mxu0 0.0
      %4424 = vmatpush1.msra.mxu0 %v4368
      %4425 = vmatprep.subr.mxu0 0.0
      %4426 = vmatpush1.msra.mxu0 %v4369
      %4427 = vmatprep.subr.mxu0 0.0
      %4428 = vmatpush1.msra.mxu0 %v4370
      %4429 = vmatprep.subr.mxu0 0.0
      %4430 = vmatpush1.msra.mxu0 %v4371
      %4431 = vmatprep.subr.mxu0 0.0
      %4432 = vmatpush1.msra.mxu0 %v4372
      %4433 = vmatprep.subr.mxu0 0.0
      %4434 = vmatpush1.msra.mxu0 %v4373
      %4435 = vmatprep.subr.mxu0 0.0
      %4436 = vmatpush1.msra.mxu0 %v4374
      %4437 = vmatprep.subr.mxu0 0.0
      %4438 = vmatpush1.msra.mxu0 %v4375
      %4439 = vmatprep.subr.mxu0 0.0
      %4440 = vmatpush1.msra.mxu0 %v4376
      %4441 = vmatprep.mubr.f32.mxu0 %v4339
      %4442 = vmatmul.mubr.f32.gmra.mrb[0].mxu0 %v4297
      %v4443 = vpop.f32.mrb[0].mxu0
      %v4444 = vadd.f32 0.0, %v4443
      %v4445 = vpop.f32.mrb[0].mxu0
      %4446 = vmatprep.mubr.f32.mxu0 %v4340
      %4447 = vmatmul.mubr.f32.gmra.mrb[0].mxu0 %v4298
      %v4448 = vpop.f32.mrb[0].mxu0
      %v4449 = vadd.f32 0.0, %v4448
      %v4450 = vpop.f32.mrb[0].mxu0
      %4451 = vmatprep.mubr.f32.mxu0 %v4341
      %4452 = vmatmul.mubr.f32.gmra.mrb[0].mxu0 %v4299
      %v4453 = vpop.f32.mrb[0].mxu0
      %v4454 = vadd.f32 0.0, %v4453
      %v4455 = vpop.f32.mrb[0].mxu0
      %4456 = vmatprep.mubr.f32.mxu0 %v4342
      %4457 = vmatmul.mubr.f32.gmra.mrb[0].mxu0 %v4300
      %v4458 = vpop.f32.mrb[0].mxu0
      %v4459 = vadd.f32 0.0, %v4458
      %v4460 = vpop.f32.mrb[0].mxu0
      %4461 = vmatprep.mubr.f32.mxu0 %v4343
      %4462 = vmatmul.mubr.f32.gmra.mrb[0].mxu0 %v4301
      %v4463 = vpop.f32.mrb[0].mxu0
      %v4464 = vadd.f32 0.0, %v4463
      %v4465 = vpop.f32.mrb[0].mxu0
      %4466 = vmatprep.mubr.f32.mxu0 %v4344
      %4467 = vmatmul.mubr.f32.gmra.mrb[0].mxu0 %v4302
      %v4468 = vpop.f32.mrb[0].mxu0
      %v4469 = vadd.f32 0.0, %v4468
      %v4470 = vpop.f32.mrb[0].mxu0
      %4471 = vdwg.mxu0
      %vm4472 = vcmask 31744
      %4473 = vst.msk [vmem:[%s207] sm:$0xff] %vm4472, %v4444
      %4474 = vst.msk [vmem:[%s207 + $0x8] sm:$0xff] %vm4472, %v4449
      %4475 = vst.msk [vmem:[%s207 + $0x10] sm:$0xff] %vm4472, %v4454
      %4476 = vst.msk [vmem:[%s207 + $0x18] sm:$0xff] %vm4472, %v4459
      %4477 = vst.msk [vmem:[%s207 + $0x20] sm:$0xff] %vm4472, %v4464
      %4478 = vst.msk [vmem:[%s207 + $0x28] sm:$0xff] %vm4472, %v4469
      %s4479 = smul.u32 3, %s24
      %p4480 = scmp.lt.s32.totalorder %s4479, 8
      %s4481 = scalar_select %p4480, %s4479, 8
      %s4482 = smul.addr %s4481, 2
      %s4483 = smul.addr %s4482, 8
      %s4484 = scalar_lea.vmem %s3, %s4483
      // Predicated region
      $region29: #{tpu_custom_call.1} parent=27 // pred_check
        %p4485 = pneg %p106
      $region30: #{tpu_custom_call.1} parent=27 // pred_check_branch
        %4487 = sbr.rel (%p4485) target = $region32
      $region31: #{tpu_custom_call.1} parent=27 // pred_region
        %s4488 = smul.u32 3, %s24
      $region32: #{tpu_custom_call.1} parent=27 // pred_fallthru
        _
    $region28: #{tpu_custom_call.1} parent=5 // pred_fallthru
      _
    %p4489 = scmp.le.s32.totalorder 2, %s15
    // Predicated region
    $region33: #{tpu_custom_call.1} parent=5 // pred_check
      %p4490 = pneg %p4489
    $region34: #{tpu_custom_call.1} parent=5 // pred_check_branch
      %4492 = sbr.rel (%p4490) target = $region36
    $region35: #{tpu_custom_call.1} parent=5 // pred_region
      %s4493 = ssub.s32 %s15, 2
      // Predicated region
      $region37: #{tpu_custom_call.1} parent=35 // pred_check
        %p4494 = pneg %p112
      $region38: #{tpu_custom_call.1} parent=35 // pred_check_branch
        %4496 = sbr.rel (%p4494) target = $region40
      $region39: #{tpu_custom_call.1} parent=35 // pred_region
        %s4497 = smul.u32 3, %s26
        %p4498 = scmp.lt.s32.totalorder %s4497, 8
        %s4499 = scalar_select %p4498, %s4497, 8
        %s4500 = smul.addr %s4499, 2
        %s4501 = smul.addr %s4500, 8
        %s4502 = scalar_lea.vmem %s3, %s4501
      $region40: #{tpu_custom_call.1} parent=35 // pred_fallthru
        _
    $region36: #{tpu_custom_call.1} parent=5 // pred_fallthru
      _
  $region6: #{tpu_custom_call.1} parent=0 // loop_footer
    %s19 = sadd.s32 1, %s15
  $region7: #{tpu_custom_call.1} parent=0 // loop_footer_branch
    %14 = sbr.rel target = $region3
  $region8: #{tpu_custom_call.1} parent=0 // loop_exit
    _

</llo_original>
